<compile_context>
chip_gen: v5e
topology: v5e:2x2
jax: 0.10.0
libtpu: 0.0.40
codegen_flags: <defaults>
</compile_context>

<pallas_src>
import functools

import numpy as np
import jax
import jax.numpy as jnp
from jax.experimental import pallas as pl
from jax.experimental.pallas import tpu as pltpu


# Parity-blocked pooled-grid geometry for the conv1 output.  Conv2 only ever
# needs pooled-conv1 rows/cols 0..11, stored as spatial (2P+T, 2Q+U) with
# P in [0,6), Q in [0,8) (Q=6,7 are 8-alignment padding), T,U in {0,1}.
_P, _QPAD = 6, 8
_BLOCK = _P * _QPAD          # 48 rows per (T,U) parity block (multiple of 8/16)


def _conv1_patch_indices():
    """Static gather indices for the conv1 pooled-patch tensor.

    Result arrays have shape (4, 48, 36):
      [tu = T*2+U][P*8 + Q][(a*2+b)*9 + dh*3 + dw]
    and index the 28x28 image at pixel (2*(2P+T)+a+dh, 2*(2Q+U)+b+dw).
    """
    rows = np.zeros((4, _BLOCK, 36), np.int32)
    cols = np.zeros((4, _BLOCK, 36), np.int32)
    for T in range(2):
        for U in range(2):
            tu = T * 2 + U
            for P in range(_P):
                for Q in range(_QPAD):
                    rho = P * _QPAD + Q
                    i1 = 2 * P + T
                    j1 = 2 * min(Q, 5) + U      # clamp pad cols; never read
                    for a in range(2):
                        for b in range(2):
                            for dh in range(3):
                                for dw in range(3):
                                    j = (a * 2 + b) * 9 + dh * 3 + dw
                                    rows[tu, rho, j] = 2 * i1 + a + dh
                                    cols[tu, rho, j] = 2 * j1 + b + dw
    return rows, cols


_C1_ROWS, _C1_COLS = _conv1_patch_indices()


# ---------------------------------------------------------------------------
# pltpu.roll probe: use the XLU rotate if available, fall back to slice+concat
# ---------------------------------------------------------------------------
@functools.lru_cache(maxsize=None)
def _detect_shift_mode():
    """Returns 'roll_fwd' / 'roll_bwd' / 'concat' depending on pltpu.roll."""
    try:
        def probe(x_ref, o_ref):
            o_ref[...] = pltpu.roll(x_ref[...], 9, axis=0)

        x = np.arange(96 * 128, dtype=np.float32).reshape(96, 128)
        y = np.asarray(jax.block_until_ready(
            pl.pallas_call(
                probe,
                out_shape=jax.ShapeDtypeStruct((96, 128), jnp.float32),
            )(jnp.asarray(x))))
        if np.array_equal(y, np.roll(x, 9, axis=0)):
            return "roll_fwd"        # pltpu.roll(x, s) == np.roll(x, s)
        if np.array_equal(y, np.roll(x, -9, axis=0)):
            return "roll_bwd"        # pltpu.roll(x, s) == np.roll(x, -s)
    except Exception:
        pass
    return "concat"                  # known-good slice+concat fallback


def _shift_up(blk, shift, nrows, mode):
    """out[i, :] = blk[(i + shift) % nrows, :]  (static shift)."""
    if shift == 0:
        return blk
    if mode == "roll_fwd":
        return pltpu.roll(blk, nrows - shift, axis=0)
    if mode == "roll_bwd":
        return pltpu.roll(blk, shift, axis=0)
    return jnp.concatenate([blk[shift:], blk[:shift]], axis=0)


# ---------------------------------------------------------------------------
# One fused kernel: conv1+pool -> conv2+pool -> flatten -> fc1 -> fc2 -> lsm
# ---------------------------------------------------------------------------
def _mnist_kernel(p1_ref, w1_ref, b1_ref, w2_ref, b2_ref,
                  w3_ref, b3_ref, w4_ref, b4_ref, o_ref, *, shift_mode):
    tn48 = p1_ref.shape[1]          # TN * 48
    tn = tn48 // _BLOCK

    # ---- conv1 + ReLU + 2x2 maxpool (single bf16 matmul; pool folded into
    #      lanes via the block-diagonal weight; leading-dim collapse is free)
    lhs1 = p1_ref[...].reshape(4 * tn48, 36)                             # bf16
    c1 = jnp.dot(lhs1, w1_ref[...], preferred_element_type=jnp.float32)  # (4*TN*48, 128)
    m1 = jnp.maximum(jnp.maximum(c1[:, 0:32], c1[:, 32:64]),
                     jnp.maximum(c1[:, 64:96], c1[:, 96:128]))
    y1 = jnp.maximum(m1 + b1_ref[...], 0.0)                              # (4*TN*48, 32) f32

    # ---- conv2 + ReLU + 2x2 maxpool: in-kernel im2col via static row shifts
    # of the parity blocks (XLU roll or slice+concat).  Wrapped / cross-sample
    # rows only land at p>=5 or q>=5 which flatten never reads.
    shifted = {}
    for sr in range(4):
        for sc in range(4):
            tu = (sr % 2) * 2 + (sc % 2)
            shift = (sr // 2) * _QPAD + (sc // 2)                        # 0,1,8,9
            blk = y1[tu * tn48:(tu + 1) * tn48, :]                       # (TN*48, 32)
            shifted[(sr, sc)] = _shift_up(
                blk, shift, tn48, shift_mode).astype(jnp.bfloat16)
    pieces = [shifted[(a + dh, b + dw)]
              for a in range(2) for b in range(2)
              for dh in range(3) for dw in range(3)]
    lhs2 = jnp.concatenate(pieces, axis=-1)                              # (TN*48, 1152) bf16
    c2 = jnp.dot(lhs2, w2_ref[...], preferred_element_type=jnp.float32)  # (TN*48, 256)
    m2 = jnp.maximum(jnp.maximum(c2[:, 0:64], c2[:, 64:128]),
                     jnp.maximum(c2[:, 128:192], c2[:, 192:256]))
    y2 = jnp.maximum(m2 + b2_ref[...], 0.0)                              # (TN*48, 64) f32

    # ---- flatten (25 valid pooled positions -> lanes, known-good lowering)
    y2r = y2.reshape(tn, _BLOCK, 64)                                     # aligned split
    flat = jnp.concatenate(
        [y2r[:, p * _QPAD + q, :] for p in range(5) for q in range(5)],
        axis=-1).astype(jnp.bfloat16)                                    # (TN, 1600)

    # ---- fc1 + ReLU, fc2 (output padded to 128 lanes), log_softmax
    h = jnp.maximum(
        jnp.dot(flat, w3_ref[...], preferred_element_type=jnp.float32) + b3_ref[...],
        0.0)                                                             # (TN, 128) f32
    logits = jnp.dot(h.astype(jnp.bfloat16), w4_ref[...],
                     preferred_element_type=jnp.float32) + b4_ref[...]   # (TN, 128); pad lanes ~ -1e30
    m = jnp.max(logits, axis=-1, keepdims=True)
    lse = jnp.log(jnp.sum(jnp.exp(logits - m), axis=-1, keepdims=True)) + m
    o_ref[...] = (logits - lse).astype(o_ref.dtype)                      # full 128-lane store


def _fused_forward(p1, prep, n_pad, tile_n, shift_mode):
    tn48 = tile_n * _BLOCK
    kernel = functools.partial(_mnist_kernel, shift_mode=shift_mode)
    return pl.pallas_call(
        kernel,
        out_shape=jax.ShapeDtypeStruct((n_pad, 128), jnp.float32),
        grid_spec=pltpu.PrefetchScalarGridSpec(
            num_scalar_prefetch=0,
            grid=(n_pad // tile_n,),
            in_specs=[
                pl.BlockSpec((4, tn48, 36), lambda i: (0, i, 0)),        # conv1 patches (bf16)
                pl.BlockSpec((36, 128), lambda i: (0, 0)),               # w1 block-diag (bf16)
                pl.BlockSpec((1, 32), lambda i: (0, 0)),                 # b1
                pl.BlockSpec((1152, 256), lambda i: (0, 0)),             # w2 block-diag (bf16)
                pl.BlockSpec((1, 64), lambda i: (0, 0)),                 # b2
                pl.BlockSpec((1600, 128), lambda i: (0, 0)),             # fc1 w (bf16)
                pl.BlockSpec((1, 128), lambda i: (0, 0)),                # fc1 b
                pl.BlockSpec((128, 128), lambda i: (0, 0)),              # fc2 w padded (bf16)
                pl.BlockSpec((1, 128), lambda i: (0, 0)),                # fc2 b padded
            ],
            out_specs=pl.BlockSpec((tile_n, 128), lambda i: (i, 0)),
        ),
        compiler_params=pltpu.CompilerParams(
            dimension_semantics=("parallel",),                           # megacore on v7x
            vmem_limit_bytes=48 * 1024 * 1024),
    )(p1, prep["w1bd"], prep["b1"], prep["w2bd"], prep["b2"],
      prep["w3"], prep["b3"], prep["w4"], prep["b4"])


# ---------------------------------------------------------------------------
# One-time weight re-layout (done once, outside the per-call forward)
# ---------------------------------------------------------------------------
def _block_diag4(w):
    k, c = w.shape
    out = jnp.zeros((4 * k, 4 * c), jnp.float32)
    for i in range(4):
        out = out.at[i * k:(i + 1) * k, i * c:(i + 1) * c].set(w)
    return out


def prepare_params(params):
    # conv weights -> (tap, cin, cout) matmul form, replicated block-diagonally
    # so the 4 pool-window candidates share one matmul (pool folded into lanes).
    w1m = jnp.transpose(params["conv1_w"], (2, 3, 1, 0)).reshape(9, 32)
    w2m = jnp.transpose(params["conv2_w"], (2, 3, 1, 0)).reshape(288, 64)
    # fc1: fold torch.flatten's channel-major (c,p,q) order into the weight so
    # the kernel can consume the NHWC-ordered (p,q,c) activation directly.
    w3 = jnp.transpose(params["fc1_w"].reshape(128, 64, 5, 5),
                       (2, 3, 1, 0)).reshape(1600, 128)
    # fc2: pad to 128 output lanes (zero weights, -1e30 bias) so the in-kernel
    # log_softmax and the output store are full-lane; wrapper slices [:, :10].
    w4p = jnp.zeros((128, 128), jnp.float32).at[:, :10].set(params["fc2_w"].T)
    b4p = jnp.full((1, 128), -1e30, jnp.float32).at[0, :10].set(params["fc2_b"])
    return {
        "w1bd": _block_diag4(w1m).astype(jnp.bfloat16),
        "b1": params["conv1_b"].reshape(1, 32).astype(jnp.float32),
        "w2bd": _block_diag4(w2m).astype(jnp.bfloat16),
        "b2": params["conv2_b"].reshape(1, 64).astype(jnp.float32),
        "w3": w3.astype(jnp.bfloat16),
        "b3": params["fc1_b"].reshape(1, 128).astype(jnp.float32),
        "w4": w4p.astype(jnp.bfloat16),
        "b4": b4p,
    }


# ---------------------------------------------------------------------------
# Public forward: NCHW input -> log-probabilities
# ---------------------------------------------------------------------------
@functools.partial(jax.jit, static_argnames=("tile_n", "shift_mode"))
def _forward_jit(x_nchw, prep, *, tile_n, shift_mode):
    N = x_nchw.shape[0]
    x2d = x_nchw.reshape(N, 28, 28).astype(jnp.bfloat16)
    tn = N if N <= tile_n else max(8, (tile_n // 8) * 8)
    n_pad = pl.cdiv(N, tn) * tn
    if n_pad != N:
        x2d = jnp.concatenate(
            [x2d, jnp.zeros((n_pad - N, 28, 28), jnp.bfloat16)], axis=0)
    # conv1 im2col gathered directly in the kernel's layout (no transpose):
    #   p1[tu, n*48 + P*8 + Q, (a*2+b)*9 + dh*3 + dw]
    rows = jnp.asarray(_C1_ROWS)[:, None]                  # (4, 1, 48, 36)
    cols = jnp.asarray(_C1_COLS)[:, None]                  # (4, 1, 48, 36)
    samp = jnp.arange(n_pad)[None, :, None, None]          # (1, n_pad, 1, 1)
    p1 = x2d[samp, rows, cols].reshape(4, n_pad * _BLOCK, 36)   # bf16
    out = _fused_forward(p1, prep, n_pad, tn, shift_mode)
    return out[:N, :10]


def mnist_forward(x_nchw, prep, *, tile_n=32):
    """NCHW (N, 1, 28, 28) float input -> (N, 10) log-probabilities."""
    return _forward_jit(x_nchw, prep, tile_n=int(tile_n),
                        shift_mode=_detect_shift_mode())


# ---------------------------------------------------------------------------
# Deterministic parameter init (PyTorch parameter shapes)
# ---------------------------------------------------------------------------
def init_params(key):
    ks = jax.random.split(key, 8)

    def u(k, shape, fan_in):
        bound = 1.0 / (fan_in ** 0.5)
        return jax.random.uniform(k, shape, jnp.float32, -bound, bound)

    return {
        "conv1_w": u(ks[0], (32, 1, 3, 3), 1 * 9),
        "conv1_b": u(ks[1], (32,), 1 * 9),
        "conv2_w": u(ks[2], (64, 32, 3, 3), 32 * 9),
        "conv2_b": u(ks[3], (64,), 32 * 9),
        "fc1_w":   u(ks[4], (128, 1600), 1600),
        "fc1_b":   u(ks[5], (128,), 1600),
        "fc2_w":   u(ks[6], (10, 128), 128),
        "fc2_b":   u(ks[7], (10,), 128),
    }


# ---------------------------------------------------------------------------
# Pure-JAX reference (mirrors the PyTorch forward, eval mode, f32)
# ---------------------------------------------------------------------------
def reference_forward(x, params):
    dn = ("NCHW", "OIHW", "NCHW")
    y = jax.lax.conv_general_dilated(x, params["conv1_w"], (1, 1), "VALID",
                                     dimension_numbers=dn)
    y = jnp.maximum(y + params["conv1_b"][None, :, None, None], 0.0)
    y = jax.lax.reduce_window(y, -jnp.inf, jax.lax.max,
                              (1, 1, 2, 2), (1, 1, 2, 2), "VALID")
    y = jax.lax.conv_general_dilated(y, params["conv2_w"], (1, 1), "VALID",
                                     dimension_numbers=dn)
    y = jnp.maximum(y + params["conv2_b"][None, :, None, None], 0.0)
    y = jax.lax.reduce_window(y, -jnp.inf, jax.lax.max,
                              (1, 1, 2, 2), (1, 1, 2, 2), "VALID")
    y = y.reshape(y.shape[0], -1)
    y = jnp.maximum(y @ params["fc1_w"].T + params["fc1_b"], 0.0)
    y = y @ params["fc2_w"].T + params["fc2_b"]
    return jax.nn.log_softmax(y, axis=1)


if __name__ == "__main__":
    key = jax.random.PRNGKey(0)
    k_x, k_p = jax.random.split(key)
    x = jax.random.normal(k_x, (2, 1, 28, 28), dtype=jnp.float32)  # NCHW
    params = init_params(k_p)
    prep = prepare_params(params)          # one-time weight re-layout (bf16)

    out = jax.block_until_ready(mnist_forward(x, prep))
    ref = jax.block_until_ready(reference_forward(x, params))

    assert out.shape == (2, 10)
    max_err = float(jnp.max(jnp.abs(out - ref)))
    # bf16 MXU operands -> relaxed tolerance vs the f32 reference.
    assert bool(jnp.allclose(out, ref, atol=5e-2, rtol=5e-2)), (
        f"mismatch vs reference (max abs err {max_err:.3e})")
    print("KERNEL_OK")
</pallas_src>

<mosaic_0001>
module attributes {stable_mosaic.version = 11 : i64} {
  func.func @probe(%arg0: memref<96x128xf32, #tpu.memory_space<vmem>>, %arg1: memref<96x128xf32, #tpu.memory_space<vmem>>) attributes {dimension_semantics = [], scalar_prefetch = 0 : i64, scratch_operands = 0 : i64, tpu.core_type = #tpu.core_type<tc>} {
    %c0 = arith.constant 0 : index
    %c0_0 = arith.constant 0 : index
    %0 = vector.load %arg0[%c0, %c0_0] : memref<96x128xf32, #tpu.memory_space<vmem>>, vector<96x128xf32>
    %c9_i32 = arith.constant 9 : i32
    %1 = tpu.dynamic_rotate %0 by %c9_i32 dim 0 : vector<96x128xf32>, i32 -> vector<96x128xf32>
    %c0_1 = arith.constant 0 : index
    %c0_2 = arith.constant 0 : index
    %2 = vector.load %arg1[%c0_1, %c0_2] : memref<96x128xf32, #tpu.memory_space<vmem>>, vector<96x128xf32>
    tpu.vector_store %arg1[%c0_1, %c0_2], %1 {strides = array<i32>} : memref<96x128xf32, #tpu.memory_space<vmem>>, vector<96x128xf32>,
    return
  }
}

module attributes {stable_mosaic.version = 11 : i64} {
  func.func @_mnist_kernel(%arg0: i32, %arg1: memref<4x96x36xbf16, #tpu.memory_space<vmem>>, %arg2: memref<36x128xbf16, #tpu.memory_space<vmem>>, %arg3: memref<1x32xf32, #tpu.memory_space<vmem>>, %arg4: memref<1152x256xbf16, #tpu.memory_space<vmem>>, %arg5: memref<1x64xf32, #tpu.memory_space<vmem>>, %arg6: memref<1600x128xbf16, #tpu.memory_space<vmem>>, %arg7: memref<1x128xf32, #tpu.memory_space<vmem>>, %arg8: memref<128x128xbf16, #tpu.memory_space<vmem>>, %arg9: memref<1x128xf32, #tpu.memory_space<vmem>>, %arg10: memref<2x128xf32, #tpu.memory_space<vmem>>) attributes {dimension_semantics = [#tpu.dimension_semantics<parallel>], iteration_bounds = array<i64: 1>, scalar_prefetch = 0 : i64, scratch_operands = 0 : i64, tpu.core_type = #tpu.core_type<tc>, window_params = [{transform_indices = @transform_0, window_bounds = array<i64: 4, 96, 36>}, {pipeline_mode = #tpu.pipeline_mode<synchronous>, transform_indices = @transform_1, window_bounds = array<i64: 36, 128>}, {pipeline_mode = #tpu.pipeline_mode<synchronous>, transform_indices = @transform_2, window_bounds = array<i64: 1, 32>}, {pipeline_mode = #tpu.pipeline_mode<synchronous>, transform_indices = @transform_3, window_bounds = array<i64: 1152, 256>}, {pipeline_mode = #tpu.pipeline_mode<synchronous>, transform_indices = @transform_4, window_bounds = array<i64: 1, 64>}, {pipeline_mode = #tpu.pipeline_mode<synchronous>, transform_indices = @transform_5, window_bounds = array<i64: 1600, 128>}, {pipeline_mode = #tpu.pipeline_mode<synchronous>, transform_indices = @transform_6, window_bounds = array<i64: 1, 128>}, {pipeline_mode = #tpu.pipeline_mode<synchronous>, transform_indices = @transform_7, window_bounds = array<i64: 128, 128>}, {pipeline_mode = #tpu.pipeline_mode<synchronous>, transform_indices = @transform_8, window_bounds = array<i64: 1, 128>}, {transform_indices = @transform_9, window_bounds = array<i64: 2, 128>}]} {
    %c0 = arith.constant 0 : index
    %c0_0 = arith.constant 0 : index
    %c0_1 = arith.constant 0 : index
    %0 = vector.load %arg1[%c0, %c0_0, %c0_1] : memref<4x96x36xbf16, #tpu.memory_space<vmem>>, vector<4x96x36xbf16>
    %1 = vector.shape_cast %0 : vector<4x96x36xbf16> to vector<384x36xbf16>
    %c0_2 = arith.constant 0 : index
    %c0_3 = arith.constant 0 : index
    %2 = vector.load %arg2[%c0_2, %c0_3] : memref<36x128xbf16, #tpu.memory_space<vmem>>, vector<36x128xbf16>
    %cst = arith.constant dense<0.000000e+00> : vector<384x128xf32>
    %3 = tpu.matmul %1, %2, %cst {dimension_numbers = #tpu.dot_dimension_numbers<[1], [0], [0], [1], [0, 0, 1, 1], [], []>} : vector<384x36xbf16>, vector<36x128xbf16>, vector<384x128xf32> -> vector<384x128xf32>
    %4 = vector.extract_strided_slice %3 {offsets = [0, 0], sizes = [384, 32], strides = [1, 1]} : vector<384x128xf32> to vector<384x32xf32>
    %5 = vector.extract_strided_slice %3 {offsets = [0, 32], sizes = [384, 32], strides = [1, 1]} : vector<384x128xf32> to vector<384x32xf32>
    %6 = arith.maximumf %4, %5 : vector<384x32xf32>
    %7 = vector.extract_strided_slice %3 {offsets = [0, 64], sizes = [384, 32], strides = [1, 1]} : vector<384x128xf32> to vector<384x32xf32>
    %8 = vector.extract_strided_slice %3 {offsets = [0, 96], sizes = [384, 32], strides = [1, 1]} : vector<384x128xf32> to vector<384x32xf32>
    %9 = arith.maximumf %7, %8 : vector<384x32xf32>
    %10 = arith.maximumf %6, %9 : vector<384x32xf32>
    %c0_4 = arith.constant 0 : index
    %c0_5 = arith.constant 0 : index
    %11 = vector.load %arg3[%c0_4, %c0_5] : memref<1x32xf32, #tpu.memory_space<vmem>>, vector<1x32xf32>
    %12 = vector.broadcast %11 : vector<1x32xf32> to vector<384x32xf32>
    %13 = arith.addf %10, %12 : vector<384x32xf32>
    %cst_6 = arith.constant 0.000000e+00 : f32
    %14 = vector.broadcast %cst_6 : f32 to vector<384x32xf32>
    %15 = arith.maximumf %13, %14 : vector<384x32xf32>
    %16 = vector.extract_strided_slice %15 {offsets = [0, 0], sizes = [96, 32], strides = [1, 1]} : vector<384x32xf32> to vector<96x32xf32>
    %17 = arith.truncf %16 : vector<96x32xf32> to vector<96x32xbf16>
    %18 = vector.extract_strided_slice %15 {offsets = [96, 0], sizes = [96, 32], strides = [1, 1]} : vector<384x32xf32> to vector<96x32xf32>
    %19 = arith.truncf %18 : vector<96x32xf32> to vector<96x32xbf16>
    %20 = vector.extract_strided_slice %15 {offsets = [0, 0], sizes = [96, 32], strides = [1, 1]} : vector<384x32xf32> to vector<96x32xf32>
    %21 = vector.extract_strided_slice %20 {offsets = [1, 0], sizes = [95, 32], strides = [1, 1]} : vector<96x32xf32> to vector<95x32xf32>
    %22 = vector.extract_strided_slice %20 {offsets = [0, 0], sizes = [1, 32], strides = [1, 1]} : vector<96x32xf32> to vector<1x32xf32>
    %23 = tpu.concatenate %21, %22 in 0 : vector<95x32xf32>, vector<1x32xf32> -> vector<96x32xf32>
    %24 = arith.truncf %23 : vector<96x32xf32> to vector<96x32xbf16>
    %25 = vector.extract_strided_slice %15 {offsets = [96, 0], sizes = [96, 32], strides = [1, 1]} : vector<384x32xf32> to vector<96x32xf32>
    %26 = vector.extract_strided_slice %25 {offsets = [1, 0], sizes = [95, 32], strides = [1, 1]} : vector<96x32xf32> to vector<95x32xf32>
    %27 = vector.extract_strided_slice %25 {offsets = [0, 0], sizes = [1, 32], strides = [1, 1]} : vector<96x32xf32> to vector<1x32xf32>
    %28 = tpu.concatenate %26, %27 in 0 : vector<95x32xf32>, vector<1x32xf32> -> vector<96x32xf32>
    %29 = arith.truncf %28 : vector<96x32xf32> to vector<96x32xbf16>
    %30 = vector.extract_strided_slice %15 {offsets = [192, 0], sizes = [96, 32], strides = [1, 1]} : vector<384x32xf32> to vector<96x32xf32>
    %31 = arith.truncf %30 : vector<96x32xf32> to vector<96x32xbf16>
    %32 = vector.extract_strided_slice %15 {offsets = [288, 0], sizes = [96, 32], strides = [1, 1]} : vector<384x32xf32> to vector<96x32xf32>
    %33 = arith.truncf %32 : vector<96x32xf32> to vector<96x32xbf16>
    %34 = vector.extract_strided_slice %15 {offsets = [192, 0], sizes = [96, 32], strides = [1, 1]} : vector<384x32xf32> to vector<96x32xf32>
    %35 = vector.extract_strided_slice %34 {offsets = [1, 0], sizes = [95, 32], strides = [1, 1]} : vector<96x32xf32> to vector<95x32xf32>
    %36 = vector.extract_strided_slice %34 {offsets = [0, 0], sizes = [1, 32], strides = [1, 1]} : vector<96x32xf32> to vector<1x32xf32>
    %37 = tpu.concatenate %35, %36 in 0 : vector<95x32xf32>, vector<1x32xf32> -> vector<96x32xf32>
    %38 = arith.truncf %37 : vector<96x32xf32> to vector<96x32xbf16>
    %39 = vector.extract_strided_slice %15 {offsets = [288, 0], sizes = [96, 32], strides = [1, 1]} : vector<384x32xf32> to vector<96x32xf32>
    %40 = vector.extract_strided_slice %39 {offsets = [1, 0], sizes = [95, 32], strides = [1, 1]} : vector<96x32xf32> to vector<95x32xf32>
    %41 = vector.extract_strided_slice %39 {offsets = [0, 0], sizes = [1, 32], strides = [1, 1]} : vector<96x32xf32> to vector<1x32xf32>
    %42 = tpu.concatenate %40, %41 in 0 : vector<95x32xf32>, vector<1x32xf32> -> vector<96x32xf32>
    %43 = arith.truncf %42 : vector<96x32xf32> to vector<96x32xbf16>
    %44 = vector.extract_strided_slice %15 {offsets = [0, 0], sizes = [96, 32], strides = [1, 1]} : vector<384x32xf32> to vector<96x32xf32>
    %45 = vector.extract_strided_slice %44 {offsets = [8, 0], sizes = [88, 32], strides = [1, 1]} : vector<96x32xf32> to vector<88x32xf32>
    %46 = vector.extract_strided_slice %44 {offsets = [0, 0], sizes = [8, 32], strides = [1, 1]} : vector<96x32xf32> to vector<8x32xf32>
    %47 = tpu.concatenate %45, %46 in 0 : vector<88x32xf32>, vector<8x32xf32> -> vector<96x32xf32>
    %48 = arith.truncf %47 : vector<96x32xf32> to vector<96x32xbf16>
    %49 = vector.extract_strided_slice %15 {offsets = [96, 0], sizes = [96, 32], strides = [1, 1]} : vector<384x32xf32> to vector<96x32xf32>
    %50 = vector.extract_strided_slice %49 {offsets = [8, 0], sizes = [88, 32], strides = [1, 1]} : vector<96x32xf32> to vector<88x32xf32>
    %51 = vector.extract_strided_slice %49 {offsets = [0, 0], sizes = [8, 32], strides = [1, 1]} : vector<96x32xf32> to vector<8x32xf32>
    %52 = tpu.concatenate %50, %51 in 0 : vector<88x32xf32>, vector<8x32xf32> -> vector<96x32xf32>
    %53 = arith.truncf %52 : vector<96x32xf32> to vector<96x32xbf16>
    %54 = vector.extract_strided_slice %15 {offsets = [0, 0], sizes = [96, 32], strides = [1, 1]} : vector<384x32xf32> to vector<96x32xf32>
    %55 = vector.extract_strided_slice %54 {offsets = [9, 0], sizes = [87, 32], strides = [1, 1]} : vector<96x32xf32> to vector<87x32xf32>
    %56 = vector.extract_strided_slice %54 {offsets = [0, 0], sizes = [9, 32], strides = [1, 1]} : vector<96x32xf32> to vector<9x32xf32>
    %57 = tpu.concatenate %55, %56 in 0 : vector<87x32xf32>, vector<9x32xf32> -> vector<96x32xf32>
    %58 = arith.truncf %57 : vector<96x32xf32> to vector<96x32xbf16>
    %59 = vector.extract_strided_slice %15 {offsets = [96, 0], sizes = [96, 32], strides = [1, 1]} : vector<384x32xf32> to vector<96x32xf32>
    %60 = vector.extract_strided_slice %59 {offsets = [9, 0], sizes = [87, 32], strides = [1, 1]} : vector<96x32xf32> to vector<87x32xf32>
    %61 = vector.extract_strided_slice %59 {offsets = [0, 0], sizes = [9, 32], strides = [1, 1]} : vector<96x32xf32> to vector<9x32xf32>
    %62 = tpu.concatenate %60, %61 in 0 : vector<87x32xf32>, vector<9x32xf32> -> vector<96x32xf32>
    %63 = arith.truncf %62 : vector<96x32xf32> to vector<96x32xbf16>
    %64 = vector.extract_strided_slice %15 {offsets = [192, 0], sizes = [96, 32], strides = [1, 1]} : vector<384x32xf32> to vector<96x32xf32>
    %65 = vector.extract_strided_slice %64 {offsets = [8, 0], sizes = [88, 32], strides = [1, 1]} : vector<96x32xf32> to vector<88x32xf32>
    %66 = vector.extract_strided_slice %64 {offsets = [0, 0], sizes = [8, 32], strides = [1, 1]} : vector<96x32xf32> to vector<8x32xf32>
    %67 = tpu.concatenate %65, %66 in 0 : vector<88x32xf32>, vector<8x32xf32> -> vector<96x32xf32>
    %68 = arith.truncf %67 : vector<96x32xf32> to vector<96x32xbf16>
    %69 = vector.extract_strided_slice %15 {offsets = [288, 0], sizes = [96, 32], strides = [1, 1]} : vector<384x32xf32> to vector<96x32xf32>
    %70 = vector.extract_strided_slice %69 {offsets = [8, 0], sizes = [88, 32], strides = [1, 1]} : vector<96x32xf32> to vector<88x32xf32>
    %71 = vector.extract_strided_slice %69 {offsets = [0, 0], sizes = [8, 32], strides = [1, 1]} : vector<96x32xf32> to vector<8x32xf32>
    %72 = tpu.concatenate %70, %71 in 0 : vector<88x32xf32>, vector<8x32xf32> -> vector<96x32xf32>
    %73 = arith.truncf %72 : vector<96x32xf32> to vector<96x32xbf16>
    %74 = vector.extract_strided_slice %15 {offsets = [192, 0], sizes = [96, 32], strides = [1, 1]} : vector<384x32xf32> to vector<96x32xf32>
    %75 = vector.extract_strided_slice %74 {offsets = [9, 0], sizes = [87, 32], strides = [1, 1]} : vector<96x32xf32> to vector<87x32xf32>
    %76 = vector.extract_strided_slice %74 {offsets = [0, 0], sizes = [9, 32], strides = [1, 1]} : vector<96x32xf32> to vector<9x32xf32>
    %77 = tpu.concatenate %75, %76 in 0 : vector<87x32xf32>, vector<9x32xf32> -> vector<96x32xf32>
    %78 = arith.truncf %77 : vector<96x32xf32> to vector<96x32xbf16>
    %79 = vector.extract_strided_slice %15 {offsets = [288, 0], sizes = [96, 32], strides = [1, 1]} : vector<384x32xf32> to vector<96x32xf32>
    %80 = vector.extract_strided_slice %79 {offsets = [9, 0], sizes = [87, 32], strides = [1, 1]} : vector<96x32xf32> to vector<87x32xf32>
    %81 = vector.extract_strided_slice %79 {offsets = [0, 0], sizes = [9, 32], strides = [1, 1]} : vector<96x32xf32> to vector<9x32xf32>
    %82 = tpu.concatenate %80, %81 in 0 : vector<87x32xf32>, vector<9x32xf32> -> vector<96x32xf32>
    %83 = arith.truncf %82 : vector<96x32xf32> to vector<96x32xbf16>
    %84 = tpu.concatenate %17, %19, %24, %31, %33, %38, %48, %53, %58, %19, %24, %29, %33, %38, %43, %53 in 1 : vector<96x32xbf16>, vector<96x32xbf16>, vector<96x32xbf16>, vector<96x32xbf16>, vector<96x32xbf16>, vector<96x32xbf16>, vector<96x32xbf16>, vector<96x32xbf16>, vector<96x32xbf16>, vector<96x32xbf16>, vector<96x32xbf16>, vector<96x32xbf16>, vector<96x32xbf16>, vector<96x32xbf16>, vector<96x32xbf16>, vector<96x32xbf16> -> vector<96x512xbf16>
    %85 = tpu.concatenate %58, %63, %31, %33, %38, %48, %53, %58, %68, %73, %78, %33, %38, %43, %53, %58 in 1 : vector<96x32xbf16>, vector<96x32xbf16>, vector<96x32xbf16>, vector<96x32xbf16>, vector<96x32xbf16>, vector<96x32xbf16>, vector<96x32xbf16>, vector<96x32xbf16>, vector<96x32xbf16>, vector<96x32xbf16>, vector<96x32xbf16>, vector<96x32xbf16>, vector<96x32xbf16>, vector<96x32xbf16>, vector<96x32xbf16>, vector<96x32xbf16> -> vector<96x512xbf16>
    %86 = tpu.concatenate %63, %73, %78, %83 in 1 : vector<96x32xbf16>, vector<96x32xbf16>, vector<96x32xbf16>, vector<96x32xbf16> -> vector<96x128xbf16>
    %87 = tpu.concatenate %84, %85, %86 in 1 : vector<96x512xbf16>, vector<96x512xbf16>, vector<96x128xbf16> -> vector<96x1152xbf16>
    %c0_7 = arith.constant 0 : index
    %c0_8 = arith.constant 0 : index
    %88 = vector.load %arg4[%c0_7, %c0_8] : memref<1152x256xbf16, #tpu.memory_space<vmem>>, vector<1152x256xbf16>
    %cst_9 = arith.constant dense<0.000000e+00> : vector<96x256xf32>
    %89 = tpu.matmul %87, %88, %cst_9 {dimension_numbers = #tpu.dot_dimension_numbers<[1], [0], [0], [1], [0, 0, 1, 1], [], []>} : vector<96x1152xbf16>, vector<1152x256xbf16>, vector<96x256xf32> -> vector<96x256xf32>
    %90 = vector.extract_strided_slice %89 {offsets = [0, 0], sizes = [96, 64], strides = [1, 1]} : vector<96x256xf32> to vector<96x64xf32>
    %91 = vector.extract_strided_slice %89 {offsets = [0, 64], sizes = [96, 64], strides = [1, 1]} : vector<96x256xf32> to vector<96x64xf32>
    %92 = arith.maximumf %90, %91 : vector<96x64xf32>
    %93 = vector.extract_strided_slice %89 {offsets = [0, 128], sizes = [96, 64], strides = [1, 1]} : vector<96x256xf32> to vector<96x64xf32>
    %94 = vector.extract_strided_slice %89 {offsets = [0, 192], sizes = [96, 64], strides = [1, 1]} : vector<96x256xf32> to vector<96x64xf32>
    %95 = arith.maximumf %93, %94 : vector<96x64xf32>
    %96 = arith.maximumf %92, %95 : vector<96x64xf32>
    %c0_10 = arith.constant 0 : index
    %c0_11 = arith.constant 0 : index
    %97 = vector.load %arg5[%c0_10, %c0_11] : memref<1x64xf32, #tpu.memory_space<vmem>>, vector<1x64xf32>
    %98 = vector.broadcast %97 : vector<1x64xf32> to vector<96x64xf32>
    %99 = arith.addf %96, %98 : vector<96x64xf32>
    %cst_12 = arith.constant 0.000000e+00 : f32
    %100 = vector.broadcast %cst_12 : f32 to vector<96x64xf32>
    %101 = arith.maximumf %99, %100 : vector<96x64xf32>
    %102 = vector.shape_cast %101 : vector<96x64xf32> to vector<2x48x64xf32>
    %103 = vector.extract_strided_slice %102 {offsets = [0, 0, 0], sizes = [2, 1, 64], strides = [1, 1, 1]} : vector<2x48x64xf32> to vector<2x1x64xf32>
    %104 = vector.shape_cast %103 : vector<2x1x64xf32> to vector<2x64xf32>
    %105 = vector.extract_strided_slice %102 {offsets = [0, 1, 0], sizes = [2, 1, 64], strides = [1, 1, 1]} : vector<2x48x64xf32> to vector<2x1x64xf32>
    %106 = vector.shape_cast %105 : vector<2x1x64xf32> to vector<2x64xf32>
    %107 = vector.extract_strided_slice %102 {offsets = [0, 2, 0], sizes = [2, 1, 64], strides = [1, 1, 1]} : vector<2x48x64xf32> to vector<2x1x64xf32>
    %108 = vector.shape_cast %107 : vector<2x1x64xf32> to vector<2x64xf32>
    %109 = vector.extract_strided_slice %102 {offsets = [0, 3, 0], sizes = [2, 1, 64], strides = [1, 1, 1]} : vector<2x48x64xf32> to vector<2x1x64xf32>
    %110 = vector.shape_cast %109 : vector<2x1x64xf32> to vector<2x64xf32>
    %111 = vector.extract_strided_slice %102 {offsets = [0, 4, 0], sizes = [2, 1, 64], strides = [1, 1, 1]} : vector<2x48x64xf32> to vector<2x1x64xf32>
    %112 = vector.shape_cast %111 : vector<2x1x64xf32> to vector<2x64xf32>
    %113 = vector.extract_strided_slice %102 {offsets = [0, 8, 0], sizes = [2, 1, 64], strides = [1, 1, 1]} : vector<2x48x64xf32> to vector<2x1x64xf32>
    %114 = vector.shape_cast %113 : vector<2x1x64xf32> to vector<2x64xf32>
    %115 = vector.extract_strided_slice %102 {offsets = [0, 9, 0], sizes = [2, 1, 64], strides = [1, 1, 1]} : vector<2x48x64xf32> to vector<2x1x64xf32>
    %116 = vector.shape_cast %115 : vector<2x1x64xf32> to vector<2x64xf32>
    %117 = vector.extract_strided_slice %102 {offsets = [0, 10, 0], sizes = [2, 1, 64], strides = [1, 1, 1]} : vector<2x48x64xf32> to vector<2x1x64xf32>
    %118 = vector.shape_cast %117 : vector<2x1x64xf32> to vector<2x64xf32>
    %119 = vector.extract_strided_slice %102 {offsets = [0, 11, 0], sizes = [2, 1, 64], strides = [1, 1, 1]} : vector<2x48x64xf32> to vector<2x1x64xf32>
    %120 = vector.shape_cast %119 : vector<2x1x64xf32> to vector<2x64xf32>
    %121 = vector.extract_strided_slice %102 {offsets = [0, 12, 0], sizes = [2, 1, 64], strides = [1, 1, 1]} : vector<2x48x64xf32> to vector<2x1x64xf32>
    %122 = vector.shape_cast %121 : vector<2x1x64xf32> to vector<2x64xf32>
    %123 = vector.extract_strided_slice %102 {offsets = [0, 16, 0], sizes = [2, 1, 64], strides = [1, 1, 1]} : vector<2x48x64xf32> to vector<2x1x64xf32>
    %124 = vector.shape_cast %123 : vector<2x1x64xf32> to vector<2x64xf32>
    %125 = vector.extract_strided_slice %102 {offsets = [0, 17, 0], sizes = [2, 1, 64], strides = [1, 1, 1]} : vector<2x48x64xf32> to vector<2x1x64xf32>
    %126 = vector.shape_cast %125 : vector<2x1x64xf32> to vector<2x64xf32>
    %127 = vector.extract_strided_slice %102 {offsets = [0, 18, 0], sizes = [2, 1, 64], strides = [1, 1, 1]} : vector<2x48x64xf32> to vector<2x1x64xf32>
    %128 = vector.shape_cast %127 : vector<2x1x64xf32> to vector<2x64xf32>
    %129 = vector.extract_strided_slice %102 {offsets = [0, 19, 0], sizes = [2, 1, 64], strides = [1, 1, 1]} : vector<2x48x64xf32> to vector<2x1x64xf32>
    %130 = vector.shape_cast %129 : vector<2x1x64xf32> to vector<2x64xf32>
    %131 = vector.extract_strided_slice %102 {offsets = [0, 20, 0], sizes = [2, 1, 64], strides = [1, 1, 1]} : vector<2x48x64xf32> to vector<2x1x64xf32>
    %132 = vector.shape_cast %131 : vector<2x1x64xf32> to vector<2x64xf32>
    %133 = vector.extract_strided_slice %102 {offsets = [0, 24, 0], sizes = [2, 1, 64], strides = [1, 1, 1]} : vector<2x48x64xf32> to vector<2x1x64xf32>
    %134 = vector.shape_cast %133 : vector<2x1x64xf32> to vector<2x64xf32>
    %135 = vector.extract_strided_slice %102 {offsets = [0, 25, 0], sizes = [2, 1, 64], strides = [1, 1, 1]} : vector<2x48x64xf32> to vector<2x1x64xf32>
    %136 = vector.shape_cast %135 : vector<2x1x64xf32> to vector<2x64xf32>
    %137 = vector.extract_strided_slice %102 {offsets = [0, 26, 0], sizes = [2, 1, 64], strides = [1, 1, 1]} : vector<2x48x64xf32> to vector<2x1x64xf32>
    %138 = vector.shape_cast %137 : vector<2x1x64xf32> to vector<2x64xf32>
    %139 = vector.extract_strided_slice %102 {offsets = [0, 27, 0], sizes = [2, 1, 64], strides = [1, 1, 1]} : vector<2x48x64xf32> to vector<2x1x64xf32>
    %140 = vector.shape_cast %139 : vector<2x1x64xf32> to vector<2x64xf32>
    %141 = vector.extract_strided_slice %102 {offsets = [0, 28, 0], sizes = [2, 1, 64], strides = [1, 1, 1]} : vector<2x48x64xf32> to vector<2x1x64xf32>
    %142 = vector.shape_cast %141 : vector<2x1x64xf32> to vector<2x64xf32>
    %143 = vector.extract_strided_slice %102 {offsets = [0, 32, 0], sizes = [2, 1, 64], strides = [1, 1, 1]} : vector<2x48x64xf32> to vector<2x1x64xf32>
    %144 = vector.shape_cast %143 : vector<2x1x64xf32> to vector<2x64xf32>
    %145 = vector.extract_strided_slice %102 {offsets = [0, 33, 0], sizes = [2, 1, 64], strides = [1, 1, 1]} : vector<2x48x64xf32> to vector<2x1x64xf32>
    %146 = vector.shape_cast %145 : vector<2x1x64xf32> to vector<2x64xf32>
    %147 = vector.extract_strided_slice %102 {offsets = [0, 34, 0], sizes = [2, 1, 64], strides = [1, 1, 1]} : vector<2x48x64xf32> to vector<2x1x64xf32>
    %148 = vector.shape_cast %147 : vector<2x1x64xf32> to vector<2x64xf32>
    %149 = vector.extract_strided_slice %102 {offsets = [0, 35, 0], sizes = [2, 1, 64], strides = [1, 1, 1]} : vector<2x48x64xf32> to vector<2x1x64xf32>
    %150 = vector.shape_cast %149 : vector<2x1x64xf32> to vector<2x64xf32>
    %151 = vector.extract_strided_slice %102 {offsets = [0, 36, 0], sizes = [2, 1, 64], strides = [1, 1, 1]} : vector<2x48x64xf32> to vector<2x1x64xf32>
    %152 = vector.shape_cast %151 : vector<2x1x64xf32> to vector<2x64xf32>
    %153 = tpu.concatenate %104, %106, %108, %110, %112, %114, %116, %118, %120, %122, %124, %126, %128, %130, %132, %134 in 1 : vector<2x64xf32>, vector<2x64xf32>, vector<2x64xf32>, vector<2x64xf32>, vector<2x64xf32>, vector<2x64xf32>, vector<2x64xf32>, vector<2x64xf32>, vector<2x64xf32>, vector<2x64xf32>, vector<2x64xf32>, vector<2x64xf32>, vector<2x64xf32>, vector<2x64xf32>, vector<2x64xf32>, vector<2x64xf32> -> vector<2x1024xf32>
    %154 = tpu.concatenate %136, %138, %140, %142, %144, %146, %148, %150, %152 in 1 : vector<2x64xf32>, vector<2x64xf32>, vector<2x64xf32>, vector<2x64xf32>, vector<2x64xf32>, vector<2x64xf32>, vector<2x64xf32>, vector<2x64xf32>, vector<2x64xf32> -> vector<2x576xf32>
    %155 = tpu.concatenate %153, %154 in 1 : vector<2x1024xf32>, vector<2x576xf32> -> vector<2x1600xf32>
    %156 = arith.truncf %155 : vector<2x1600xf32> to vector<2x1600xbf16>
    %c0_13 = arith.constant 0 : index
    %c0_14 = arith.constant 0 : index
    %157 = vector.load %arg6[%c0_13, %c0_14] : memref<1600x128xbf16, #tpu.memory_space<vmem>>, vector<1600x128xbf16>
    %cst_15 = arith.constant dense<0.000000e+00> : vector<2x128xf32>
    %158 = tpu.matmul %156, %157, %cst_15 {dimension_numbers = #tpu.dot_dimension_numbers<[1], [0], [0], [1], [0, 0, 1, 1], [], []>} : vector<2x1600xbf16>, vector<1600x128xbf16>, vector<2x128xf32> -> vector<2x128xf32>
    %c0_16 = arith.constant 0 : index
    %c0_17 = arith.constant 0 : index
    %159 = vector.load %arg7[%c0_16, %c0_17] : memref<1x128xf32, #tpu.memory_space<vmem>>, vector<1x128xf32>
    %160 = vector.broadcast %159 : vector<1x128xf32> to vector<2x128xf32>
    %161 = arith.addf %158, %160 : vector<2x128xf32>
    %cst_18 = arith.constant 0.000000e+00 : f32
    %162 = vector.broadcast %cst_18 : f32 to vector<2x128xf32>
    %163 = arith.maximumf %161, %162 : vector<2x128xf32>
    %164 = arith.truncf %163 : vector<2x128xf32> to vector<2x128xbf16>
    %c0_19 = arith.constant 0 : index
    %c0_20 = arith.constant 0 : index
    %165 = vector.load %arg8[%c0_19, %c0_20] : memref<128x128xbf16, #tpu.memory_space<vmem>>, vector<128x128xbf16>
    %cst_21 = arith.constant dense<0.000000e+00> : vector<2x128xf32>
    %166 = tpu.matmul %164, %165, %cst_21 {dimension_numbers = #tpu.dot_dimension_numbers<[1], [0], [0], [1], [0, 0, 1, 1], [], []>} : vector<2x128xbf16>, vector<128x128xbf16>, vector<2x128xf32> -> vector<2x128xf32>
    %c0_22 = arith.constant 0 : index
    %c0_23 = arith.constant 0 : index
    %167 = vector.load %arg9[%c0_22, %c0_23] : memref<1x128xf32, #tpu.memory_space<vmem>>, vector<1x128xf32>
    %168 = vector.broadcast %167 : vector<1x128xf32> to vector<2x128xf32>
    %169 = arith.addf %166, %168 : vector<2x128xf32>
    %cst_24 = arith.constant dense<0xFF800000> : vector<2xf32>
    %170 = vector.multi_reduction <maximumf>, %169, %cst_24 [1] : vector<2x128xf32> to vector<2xf32>
    %171 = vector.shape_cast %170 : vector<2xf32> to vector<2x1xf32>
    %172 = vector.broadcast %171 : vector<2x1xf32> to vector<2x128xf32>
    %173 = arith.subf %169, %172 : vector<2x128xf32>
    %174 = math.exp %173 : vector<2x128xf32>
    %cst_25 = arith.constant dense<0.000000e+00> : vector<2xf32>
    %175 = vector.multi_reduction <add>, %174, %cst_25 [1] : vector<2x128xf32> to vector<2xf32>
    %176 = vector.shape_cast %175 : vector<2xf32> to vector<2x1xf32>
    %177 = math.log %176 : vector<2x1xf32>
    %178 = arith.addf %177, %171 : vector<2x1xf32>
    %179 = vector.broadcast %178 : vector<2x1xf32> to vector<2x128xf32>
    %180 = arith.subf %169, %179 : vector<2x128xf32>
    %c0_26 = arith.constant 0 : index
    %c0_27 = arith.constant 0 : index
    %181 = vector.load %arg10[%c0_26, %c0_27] : memref<2x128xf32, #tpu.memory_space<vmem>>, vector<2x128xf32>
    tpu.vector_store %arg10[%c0_26, %c0_27], %180 {strides = array<i32>} : memref<2x128xf32, #tpu.memory_space<vmem>>, vector<2x128xf32>,
    return
  }
  func.func @transform_0(%arg0: i32) -> (i32, i32, i32) {
    %c0_i32 = arith.constant 0 : i32
    %c0_i32_0 = arith.constant 0 : i32
    %c0_i32_1 = arith.constant 0 : i32
    return %c0_i32, %arg0, %c0_i32_0 : i32, i32, i32
  }
  func.func @transform_1(%arg0: i32) -> (i32, i32) {
    %c0_i32 = arith.constant 0 : i32
    %c0_i32_0 = arith.constant 0 : i32
    %c0_i32_1 = arith.constant 0 : i32
    return %c0_i32, %c0_i32_0 : i32, i32
  }
  func.func @transform_2(%arg0: i32) -> (i32, i32) {
    %c0_i32 = arith.constant 0 : i32
    %c0_i32_0 = arith.constant 0 : i32
    %c0_i32_1 = arith.constant 0 : i32
    return %c0_i32, %c0_i32_0 : i32, i32
  }
  func.func @transform_3(%arg0: i32) -> (i32, i32) {
    %c0_i32 = arith.constant 0 : i32
    %c0_i32_0 = arith.constant 0 : i32
    %c0_i32_1 = arith.constant 0 : i32
    return %c0_i32, %c0_i32_0 : i32, i32
  }
  func.func @transform_4(%arg0: i32) -> (i32, i32) {
    %c0_i32 = arith.constant 0 : i32
    %c0_i32_0 = arith.constant 0 : i32
    %c0_i32_1 = arith.constant 0 : i32
    return %c0_i32, %c0_i32_0 : i32, i32
  }
  func.func @transform_5(%arg0: i32) -> (i32, i32) {
    %c0_i32 = arith.constant 0 : i32
    %c0_i32_0 = arith.constant 0 : i32
    %c0_i32_1 = arith.constant 0 : i32
    return %c0_i32, %c0_i32_0 : i32, i32
  }
  func.func @transform_6(%arg0: i32) -> (i32, i32) {
    %c0_i32 = arith.constant 0 : i32
    %c0_i32_0 = arith.constant 0 : i32
    %c0_i32_1 = arith.constant 0 : i32
    return %c0_i32, %c0_i32_0 : i32, i32
  }
  func.func @transform_7(%arg0: i32) -> (i32, i32) {
    %c0_i32 = arith.constant 0 : i32
    %c0_i32_0 = arith.constant 0 : i32
    %c0_i32_1 = arith.constant 0 : i32
    return %c0_i32, %c0_i32_0 : i32, i32
  }
  func.func @transform_8(%arg0: i32) -> (i32, i32) {
    %c0_i32 = arith.constant 0 : i32
    %c0_i32_0 = arith.constant 0 : i32
    %c0_i32_1 = arith.constant 0 : i32
    return %c0_i32, %c0_i32_0 : i32, i32
  }
  func.func @transform_9(%arg0: i32) -> (i32, i32) {
    %c0_i32 = arith.constant 0 : i32
    %c0_i32_0 = arith.constant 0 : i32
    return %arg0, %c0_i32 : i32, i32
  }
}

</mosaic_0001>

<llo_original>
// kernel: tpu_custom_call.1
$region0: #{tpu_custom_call.1}
  #allocation0 [shape = 'u32[]', space=smem, size = 0x4, offset = 0x4, fixed_abs, tag = 'smem constant byte address 0x4 - core index']
  #allocation1 [shape = 'u32[72,128]{1,0:T(1,128)}', space=vmem, size = 0x9000, scoped, tag = 'internal scratch']
  %s0 = inlined_call_operand.hbm [shape: f32[96,128], index: 0, kind: input, shape index: {}]
  %s1 = inlined_call_operand.hbm [shape: f32[96,128], index: 1, kind: output, shape index: {}]
  %s2 = sld [smem:[#allocation0]]
  $region18: #{tpu_custom_call.1} parent=0
    _
  %s4 = ssub.s32 1, %s2
  %s5 = scalar_select 0, %s4, %s2
  $region1: #{tpu_custom_call.1} parent=0
    #allocation2 [shape = 'u8[49152]{0}', space=vmem, size = 0xc000, scoped, tag = 'input window, operand 0, single buffered']
    #allocation3 [shape = 's32[1]{0}', space=sflag, size = 0x4, scoped, tag = 'scoped memory for tpu_custom_call.1']
    #allocation4 [shape = 's32[1]{0}', space=sflag, size = 0x4, scoped, tag = 'scoped memory for tpu_custom_call.1']
    #allocation5 [shape = 'u8[49152]{0}', space=vmem, size = 0xc000, scoped, tag = 'output window, operand 0, single buffered']
    %6 = vsyncpa [#allocation3], 0
    %7 = vsyncpa [#allocation4], 0
    // Predicated region
    $region2: #{tpu_custom_call.1} parent=1 // pred_check
      _
    $region3: #{tpu_custom_call.1} parent=1 // pred_check_branch
      %9 = sbr.rel (0) target = $region5
    $region4: #{tpu_custom_call.1} parent=1 // pred_region
      %11 = vsyncadd [#allocation3], 0
      %s12 = sshll.u32 %s0, 4
      %s13 = int_to_ptr.hbm [resolvable:$true] %s12
      %s14 = sshll.u32 [#allocation2], 4
      %s15 = int_to_ptr.vmem [resolvable:$true] %s14
      %20 = dma.hbm_to_vmem [thread:$0]  %s13, 1536, %s15, [#allocation3], 128, 128, 8
    $region5: #{tpu_custom_call.1} parent=1 // pred_fallthru
      _
    // Predicated region
    $region6: #{tpu_custom_call.1} parent=1 // pred_check
      _
    $region7: #{tpu_custom_call.1} parent=1 // pred_check_branch
      %22 = sbr.rel (0) target = $region9
    $region8: #{tpu_custom_call.1} parent=1 // pred_region
      %24 = dma.done [#allocation3], 1536
    $region9: #{tpu_custom_call.1} parent=1 // pred_fallthru
      _
    %v25 = vld [vmem:[#allocation2] sm:$0xff]
    %v26 = vld [vmem:[#allocation2 + $0x8] sm:$0xff]
    %v27 = vld [vmem:[#allocation2 + $0x10] sm:$0xff]
    %v28 = vld [vmem:[#allocation2 + $0x18] sm:$0xff]
    %v29 = vld [vmem:[#allocation2 + $0x20] sm:$0xff]
    %v30 = vld [vmem:[#allocation2 + $0x28] sm:$0xff]
    %v31 = vld [vmem:[#allocation2 + $0x30] sm:$0xff]
    %v32 = vld [vmem:[#allocation2 + $0x38] sm:$0xff]
    %v33 = vld [vmem:[#allocation2 + $0x40] sm:$0xff]
    %v34 = vld [vmem:[#allocation2 + $0x48] sm:$0xff]
    %v35 = vld [vmem:[#allocation2 + $0x50] sm:$0xff]
    %v36 = vld [vmem:[#allocation2 + $0x58] sm:$0xff]
    %v37 = vrot.slane %v25, 7
    %v38 = vrot.slane %v26, 7
    %v39 = vrot.slane %v27, 7
    %v40 = vrot.slane %v28, 7
    %v41 = vrot.slane %v29, 7
    %v42 = vrot.slane %v30, 7
    %v43 = vrot.slane %v31, 7
    %v44 = vrot.slane %v32, 7
    %v45 = vrot.slane %v33, 7
    %v46 = vrot.slane %v34, 7
    %v47 = vrot.slane %v35, 7
    %v48 = vrot.slane %v36, 7
    %v49 = vlaneseq
    %v50 = vshrl.u32 %v49, 7
    %vm51 = vcmp.lt.s32.totalorder %v50, 1
    %v52 = vsel %vm51, %v47, %v48
    %v53 = vsel %vm51, %v46, %v47
    %v54 = vsel %vm51, %v45, %v46
    %v55 = vsel %vm51, %v44, %v45
    %v56 = vsel %vm51, %v43, %v44
    %v57 = vsel %vm51, %v42, %v43
    %v58 = vsel %vm51, %v41, %v42
    %v59 = vsel %vm51, %v40, %v41
    %v60 = vsel %vm51, %v39, %v40
    %v61 = vsel %vm51, %v38, %v39
    %v62 = vsel %vm51, %v37, %v38
    %v63 = vsel %vm51, %v48, %v37
    %64 = vst [vmem:[#allocation5] sm:$0xff] %v52
    %65 = vst [vmem:[#allocation5 + $0x8] sm:$0xff] %v63
    %66 = vst [vmem:[#allocation5 + $0x10] sm:$0xff] %v62
    %67 = vst [vmem:[#allocation5 + $0x18] sm:$0xff] %v61
    %68 = vst [vmem:[#allocation5 + $0x20] sm:$0xff] %v60
    %69 = vst [vmem:[#allocation5 + $0x28] sm:$0xff] %v59
    %70 = vst [vmem:[#allocation5 + $0x30] sm:$0xff] %v58
    %71 = vst [vmem:[#allocation5 + $0x38] sm:$0xff] %v57
    %72 = vst [vmem:[#allocation5 + $0x40] sm:$0xff] %v56
    %73 = vst [vmem:[#allocation5 + $0x48] sm:$0xff] %v55
    %74 = vst [vmem:[#allocation5 + $0x50] sm:$0xff] %v54
    %75 = vst [vmem:[#allocation5 + $0x58] sm:$0xff] %v53
    // Predicated region
    $region10: #{tpu_custom_call.1} parent=1 // pred_check
      _
    $region11: #{tpu_custom_call.1} parent=1 // pred_check_branch
      %77 = sbr.rel (0) target = $region13
    $region12: #{tpu_custom_call.1} parent=1 // pred_region
      %79 = vsyncadd [#allocation4], 0
      %s80 = sshll.u32 [#allocation5], 4
      %s81 = int_to_ptr.vmem [resolvable:$true] %s80
      %s82 = sshll.u32 %s1, 4
      %s83 = int_to_ptr.hbm [resolvable:$true] %s82
      %88 = dma.vmem_to_hbm [thread:$0]  %s81, 1536, %s83, [#allocation4], 128, 128, 8
    $region13: #{tpu_custom_call.1} parent=1 // pred_fallthru
      _
    // Predicated region
    $region14: #{tpu_custom_call.1} parent=1 // pred_check
      _
    $region15: #{tpu_custom_call.1} parent=1 // pred_check_branch
      %90 = sbr.rel (0) target = $region17
    $region16: #{tpu_custom_call.1} parent=1 // pred_region
      %92 = dma.done [#allocation4], 1536
    $region17: #{tpu_custom_call.1} parent=1 // pred_fallthru
      _
    %93 = vsyncpa [#allocation3], 1
    %94 = vsyncpa [#allocation4], 1

// kernel: _forward_jit.1
$region0: #{_forward_jit.1}
  #allocation0 [shape = 'u32[]', space=smem, size = 0x4, offset = 0x4, fixed_abs, tag = 'smem constant byte address 0x4 - core index']
  #allocation1 [shape = 'u32[72,128]{1,0:T(1,128)}', space=vmem, size = 0x9000, scoped, tag = 'internal scratch']
  %s0 = inlined_call_operand.vmem [shape: bf16[4,96,36], index: 0, kind: input, shape index: {}]
  %s1 = inlined_call_operand.vmem [shape: bf16[36,128], index: 1, kind: input, shape index: {}]
  %s2 = inlined_call_operand.vmem [shape: f32[1,32], index: 2, kind: input, shape index: {}]
  %s3 = inlined_call_operand.vmem [shape: bf16[1152,256], index: 3, kind: input, shape index: {}]
  %s4 = inlined_call_operand.vmem [shape: f32[1,64], index: 4, kind: input, shape index: {}]
  %s5 = inlined_call_operand.vmem [shape: bf16[1600,128], index: 5, kind: input, shape index: {}]
  %s6 = inlined_call_operand.vmem [shape: f32[1,128], index: 6, kind: input, shape index: {}]
  %s7 = inlined_call_operand.vmem [shape: bf16[128,128], index: 7, kind: input, shape index: {}]
  %s8 = inlined_call_operand.vmem [shape: f32[1,128], index: 8, kind: input, shape index: {}]
  %s9 = inlined_call_operand.hbm [shape: f32[2,128], index: 9, kind: output, shape index: {}]
  %s10 = sld [smem:[#allocation0]]
  $region46: #{_forward_jit.1} parent=0
    _
  %s12 = ssub.s32 1, %s10
  %s13 = scalar_select 0, %s12, %s10
  $region1: #{_forward_jit.1} parent=0
    #allocation2 [shape = 'u8[1024]{0}', space=vmem, size = 0x400, scoped, tag = 'output window, operand 0, single buffered']
    #allocation3 [shape = 's32[1]{0}', space=sflag, size = 0x4, scoped, tag = 'scoped memory for _forward_jit.1']
    %14 = vsyncpa [#allocation3], 0
    // Predicated region
    $region2: #{_forward_jit.1} parent=1 // pred_check
      _
    $region3: #{_forward_jit.1} parent=1 // pred_check_branch
      %16 = sbr.rel (0) target = $region5
    $region4: #{_forward_jit.1} parent=1 // pred_region
      _
    $region5: #{_forward_jit.1} parent=1 // pred_fallthru
      _
    // Predicated region
    $region6: #{_forward_jit.1} parent=1 // pred_check
      _
    $region7: #{_forward_jit.1} parent=1 // pred_check_branch
      %18 = sbr.rel (0) target = $region9
    $region8: #{_forward_jit.1} parent=1 // pred_region
      _
    $region9: #{_forward_jit.1} parent=1 // pred_fallthru
      _
    // Predicated region
    $region10: #{_forward_jit.1} parent=1 // pred_check
      _
    $region11: #{_forward_jit.1} parent=1 // pred_check_branch
      %20 = sbr.rel (0) target = $region13
    $region12: #{_forward_jit.1} parent=1 // pred_region
      _
    $region13: #{_forward_jit.1} parent=1 // pred_fallthru
      _
    // Predicated region
    $region14: #{_forward_jit.1} parent=1 // pred_check
      _
    $region15: #{_forward_jit.1} parent=1 // pred_check_branch
      %22 = sbr.rel (0) target = $region17
    $region16: #{_forward_jit.1} parent=1 // pred_region
      _
    $region17: #{_forward_jit.1} parent=1 // pred_fallthru
      _
    // Predicated region
    $region18: #{_forward_jit.1} parent=1 // pred_check
      _
    $region19: #{_forward_jit.1} parent=1 // pred_check_branch
      %24 = sbr.rel (0) target = $region21
    $region20: #{_forward_jit.1} parent=1 // pred_region
      _
    $region21: #{_forward_jit.1} parent=1 // pred_fallthru
      _
    // Predicated region
    $region22: #{_forward_jit.1} parent=1 // pred_check
      _
    $region23: #{_forward_jit.1} parent=1 // pred_check_branch
      %26 = sbr.rel (0) target = $region25
    $region24: #{_forward_jit.1} parent=1 // pred_region
      _
    $region25: #{_forward_jit.1} parent=1 // pred_fallthru
      _
    // Predicated region
    $region26: #{_forward_jit.1} parent=1 // pred_check
      _
    $region27: #{_forward_jit.1} parent=1 // pred_check_branch
      %28 = sbr.rel (0) target = $region29
    $region28: #{_forward_jit.1} parent=1 // pred_region
      _
    $region29: #{_forward_jit.1} parent=1 // pred_fallthru
      _
    // Predicated region
    $region30: #{_forward_jit.1} parent=1 // pred_check
      _
    $region31: #{_forward_jit.1} parent=1 // pred_check_branch
      %30 = sbr.rel (0) target = $region33
    $region32: #{_forward_jit.1} parent=1 // pred_region
      _
    $region33: #{_forward_jit.1} parent=1 // pred_fallthru
      _
    // Predicated region
    $region34: #{_forward_jit.1} parent=1 // pred_check
      _
    $region35: #{_forward_jit.1} parent=1 // pred_check_branch
      %32 = sbr.rel (0) target = $region37
    $region36: #{_forward_jit.1} parent=1 // pred_region
      _
    $region37: #{_forward_jit.1} parent=1 // pred_fallthru
      _
    %v34 = vld [vmem:[%s0] sm:$0xf]
    %v35 = vld [vmem:[%s0 + $0x4] sm:$0xf]
    %v36 = vld [vmem:[%s0 + $0x8] sm:$0xf]
    %v37 = vld [vmem:[%s0 + $0xc] sm:$0xf]
    %v38 = vld [vmem:[%s0 + $0x10] sm:$0xf]
    %v39 = vld [vmem:[%s0 + $0x14] sm:$0xf]
    %v40 = vld [vmem:[%s0 + $0x18] sm:$0xf]
    %v41 = vld [vmem:[%s0 + $0x1c] sm:$0xf]
    %v42 = vld [vmem:[%s0 + $0x20] sm:$0xf]
    %v43 = vld [vmem:[%s0 + $0x24] sm:$0xf]
    %v44 = vld [vmem:[%s0 + $0x28] sm:$0xf]
    %v45 = vld [vmem:[%s0 + $0x2c] sm:$0xf]
    %v46 = vld [vmem:[%s0 + $0x30] sm:$0xf]
    %v47 = vld [vmem:[%s0 + $0x34] sm:$0xf]
    %v48 = vld [vmem:[%s0 + $0x38] sm:$0xf]
    %v49 = vld [vmem:[%s0 + $0x3c] sm:$0xf]
    %v50 = vld [vmem:[%s0 + $0x40] sm:$0xf]
    %v51 = vld [vmem:[%s0 + $0x44] sm:$0xf]
    %v52 = vld [vmem:[%s0 + $0x48] sm:$0xf]
    %v53 = vld [vmem:[%s0 + $0x4c] sm:$0xf]
    %v54 = vld [vmem:[%s0 + $0x50] sm:$0xf]
    %v55 = vld [vmem:[%s0 + $0x54] sm:$0xf]
    %v56 = vld [vmem:[%s0 + $0x58] sm:$0xf]
    %v57 = vld [vmem:[%s0 + $0x5c] sm:$0xf]
    %v58 = vld [vmem:[%s0 + $0x60] sm:$0xf]
    %v59 = vld [vmem:[%s0 + $0x64] sm:$0xf]
    %v60 = vld [vmem:[%s0 + $0x68] sm:$0xf]
    %v61 = vld [vmem:[%s0 + $0x6c] sm:$0xf]
    %v62 = vld [vmem:[%s0 + $0x70] sm:$0xf]
    %v63 = vld [vmem:[%s0 + $0x74] sm:$0xf]
    %v64 = vld [vmem:[%s0 + $0x78] sm:$0xf]
    %v65 = vld [vmem:[%s0 + $0x7c] sm:$0xf]
    %v66 = vld [vmem:[%s0 + $0x80] sm:$0xf]
    %v67 = vld [vmem:[%s0 + $0x84] sm:$0xf]
    %v68 = vld [vmem:[%s0 + $0x88] sm:$0xf]
    %v69 = vld [vmem:[%s0 + $0x8c] sm:$0xf]
    %v70 = vld [vmem:[%s0 + $0x90] sm:$0xf]
    %v71 = vld [vmem:[%s0 + $0x94] sm:$0xf]
    %v72 = vld [vmem:[%s0 + $0x98] sm:$0xf]
    %v73 = vld [vmem:[%s0 + $0x9c] sm:$0xf]
    %v74 = vld [vmem:[%s0 + $0xa0] sm:$0xf]
    %v75 = vld [vmem:[%s0 + $0xa4] sm:$0xf]
    %v76 = vld [vmem:[%s0 + $0xa8] sm:$0xf]
    %v77 = vld [vmem:[%s0 + $0xac] sm:$0xf]
    %v78 = vld [vmem:[%s0 + $0xb0] sm:$0xf]
    %v79 = vld [vmem:[%s0 + $0xb4] sm:$0xf]
    %v80 = vld [vmem:[%s0 + $0xb8] sm:$0xf]
    %v81 = vld [vmem:[%s0 + $0xbc] sm:$0xf]
    %v82 = vld [vmem:[%s1] sm:$0xf]
    %v83 = vld [vmem:[%s1 + $0x4] sm:$0xf]
    %v84 = vld [vmem:[%s1 + $0x8] sm:$0xf]
    %v85 = vld [vmem:[%s1 + $0xc] sm:$0xf]
    %v86 = vld [vmem:[%s1 + $0x10] sm:$0x3]
    %v135 = vunpack.c.l.b16 %v34
    %v136 = vunpack.c.l.b16 %v35
    %v137 = vunpack.c.l.b16 %v36
    %v138 = vunpack.c.l.b16 %v37
    %v139 = vunpack.c.l.b16 %v38
    %v140 = vunpack.c.l.b16 %v39
    %v141 = vunpack.c.l.b16 %v40
    %v142 = vunpack.c.l.b16 %v41
    %v143 = vunpack.c.l.b16 %v42
    %v144 = vunpack.c.l.b16 %v43
    %v145 = vunpack.c.l.b16 %v44
    %v146 = vunpack.c.l.b16 %v45
    %v147 = vunpack.c.l.b16 %v46
    %v148 = vunpack.c.l.b16 %v47
    %v149 = vunpack.c.l.b16 %v48
    %v150 = vunpack.c.l.b16 %v49
    %v151 = vunpack.c.l.b16 %v50
    %v152 = vunpack.c.l.b16 %v51
    %v153 = vunpack.c.l.b16 %v52
    %v154 = vunpack.c.l.b16 %v53
    %v155 = vunpack.c.l.b16 %v54
    %v156 = vunpack.c.l.b16 %v55
    %v157 = vunpack.c.l.b16 %v56
    %v158 = vunpack.c.l.b16 %v57
    %v159 = vunpack.c.l.b16 %v58
    %v160 = vunpack.c.l.b16 %v59
    %v161 = vunpack.c.l.b16 %v60
    %v162 = vunpack.c.l.b16 %v61
    %v163 = vunpack.c.l.b16 %v62
    %v164 = vunpack.c.l.b16 %v63
    %v165 = vunpack.c.l.b16 %v64
    %v166 = vunpack.c.l.b16 %v65
    %v167 = vunpack.c.l.b16 %v66
    %v168 = vunpack.c.l.b16 %v67
    %v169 = vunpack.c.l.b16 %v68
    %v170 = vunpack.c.l.b16 %v69
    %v171 = vunpack.c.l.b16 %v70
    %v172 = vunpack.c.l.b16 %v71
    %v173 = vunpack.c.l.b16 %v72
    %v174 = vunpack.c.l.b16 %v73
    %v175 = vunpack.c.l.b16 %v74
    %v176 = vunpack.c.l.b16 %v75
    %v177 = vunpack.c.l.b16 %v76
    %v178 = vunpack.c.l.b16 %v77
    %v179 = vunpack.c.l.b16 %v78
    %v180 = vunpack.c.l.b16 %v79
    %v181 = vunpack.c.l.b16 %v80
    %v182 = vunpack.c.l.b16 %v81
    %v183 = vpack.c.b16 %v136, %v135
    %v184 = vpack.c.b16 %v138, %v137
    %v185 = vpack.c.b16 %v140, %v139
    %v186 = vpack.c.b16 %v142, %v141
    %v187 = vpack.c.b16 %v144, %v143
    %v188 = vpack.c.b16 %v146, %v145
    %v189 = vpack.c.b16 %v148, %v147
    %v190 = vpack.c.b16 %v150, %v149
    %v191 = vpack.c.b16 %v152, %v151
    %v192 = vpack.c.b16 %v154, %v153
    %v193 = vpack.c.b16 %v156, %v155
    %v194 = vpack.c.b16 %v158, %v157
    %v195 = vpack.c.b16 %v160, %v159
    %v196 = vpack.c.b16 %v162, %v161
    %v197 = vpack.c.b16 %v164, %v163
    %v198 = vpack.c.b16 %v166, %v165
    %v199 = vpack.c.b16 %v168, %v167
    %v200 = vpack.c.b16 %v170, %v169
    %v201 = vpack.c.b16 %v172, %v171
    %v202 = vpack.c.b16 %v174, %v173
    %v203 = vpack.c.b16 %v176, %v175
    %v204 = vpack.c.b16 %v178, %v177
    %v205 = vpack.c.b16 %v180, %v179
    %v206 = vpack.c.b16 %v182, %v181
    %v212 = vunpack.c.l.b16 %v82
    %v213 = vunpack.c.l.b16 %v83
    %v214 = vunpack.c.l.b16 %v84
    %v215 = vunpack.c.l.b16 %v85
    %v216 = vunpack.c.l.b16 %v86
    %v217 = vpack.c.b16 %v213, %v212
    %v218 = vpack.c.b16 %v215, %v214
    %v219 = vpack.c.b16 %v216, %v216
    %vm222 = vcmask 293888
    %v224 = vsel %vm222, %v183, 0
    %v227 = vsel %vm222, %v184, 0
    %v230 = vsel %vm222, %v185, 0
    %v233 = vsel %vm222, %v186, 0
    %v236 = vsel %vm222, %v187, 0
    %v239 = vsel %vm222, %v188, 0
    %v242 = vsel %vm222, %v189, 0
    %v245 = vsel %vm222, %v190, 0
    %v248 = vsel %vm222, %v191, 0
    %v251 = vsel %vm222, %v192, 0
    %v254 = vsel %vm222, %v193, 0
    %v257 = vsel %vm222, %v194, 0
    %v260 = vsel %vm222, %v195, 0
    %v263 = vsel %vm222, %v196, 0
    %v266 = vsel %vm222, %v197, 0
    %v269 = vsel %vm222, %v198, 0
    %v272 = vsel %vm222, %v199, 0
    %v275 = vsel %vm222, %v200, 0
    %v278 = vsel %vm222, %v201, 0
    %v281 = vsel %vm222, %v202, 0
    %v284 = vsel %vm222, %v203, 0
    %v287 = vsel %vm222, %v204, 0
    %v290 = vsel %vm222, %v205, 0
    %v293 = vsel %vm222, %v206, 0
    %vm295 = vcmask 1041408
    %v297 = vsel %vm295, %v219, 0
    %299 = vmatpush.bf16.msra.mxu0 0
    %300 = vmatpush.bf16.msra.mxu0 0
    %301 = vmatpush.bf16.msra.mxu0 0
    %302 = vmatpush.bf16.msra.mxu0 0
    %303 = vmatpush.bf16.msra.mxu0 0
    %304 = vmatpush.bf16.msra.mxu0 %v297
    %305 = vmatpush.bf16.msra.mxu0 %v218
    %306 = vmatpush.bf16.msra.mxu0 %v217
    %307 = vmatmul.bf16.gmra.mxu0 %v224
    %v308 = vpop.f32.mrf.mxu0
    %v309 = vadd.f32 0.0, %v308
    %v310 = vpop.f32.mrf.mxu0
    %v311 = vadd.f32 0.0, %v310
    %312 = vmatmul.bf16.gmra.mxu0 %v227
    %v313 = vpop.f32.mrf.mxu0
    %v314 = vadd.f32 0.0, %v313
    %v315 = vpop.f32.mrf.mxu0
    %v316 = vadd.f32 0.0, %v315
    %317 = vmatmul.bf16.gmra.mxu0 %v230
    %v318 = vpop.f32.mrf.mxu0
    %v319 = vadd.f32 0.0, %v318
    %v320 = vpop.f32.mrf.mxu0
    %v321 = vadd.f32 0.0, %v320
    %322 = vmatmul.bf16.gmra.mxu0 %v233
    %v323 = vpop.f32.mrf.mxu0
    %v324 = vadd.f32 0.0, %v323
    %v325 = vpop.f32.mrf.mxu0
    %v326 = vadd.f32 0.0, %v325
    %327 = vmatmul.bf16.gmra.mxu0 %v236
    %v328 = vpop.f32.mrf.mxu0
    %v329 = vadd.f32 0.0, %v328
    %v330 = vpop.f32.mrf.mxu0
    %v331 = vadd.f32 0.0, %v330
    %332 = vmatmul.bf16.gmra.mxu0 %v239
    %v333 = vpop.f32.mrf.mxu0
    %v334 = vadd.f32 0.0, %v333
    %v335 = vpop.f32.mrf.mxu0
    %v336 = vadd.f32 0.0, %v335
    %337 = vmatmul.bf16.gmra.mxu0 %v242
    %v338 = vpop.f32.mrf.mxu0
    %v339 = vadd.f32 0.0, %v338
    %v340 = vpop.f32.mrf.mxu0
    %v341 = vadd.f32 0.0, %v340
    %342 = vmatmul.bf16.gmra.mxu0 %v245
    %v343 = vpop.f32.mrf.mxu0
    %v344 = vadd.f32 0.0, %v343
    %v345 = vpop.f32.mrf.mxu0
    %v346 = vadd.f32 0.0, %v345
    %347 = vmatmul.bf16.gmra.mxu0 %v248
    %v348 = vpop.f32.mrf.mxu0
    %v349 = vadd.f32 0.0, %v348
    %v350 = vpop.f32.mrf.mxu0
    %v351 = vadd.f32 0.0, %v350
    %352 = vmatmul.bf16.gmra.mxu0 %v251
    %v353 = vpop.f32.mrf.mxu0
    %v354 = vadd.f32 0.0, %v353
    %v355 = vpop.f32.mrf.mxu0
    %v356 = vadd.f32 0.0, %v355
    %357 = vmatmul.bf16.gmra.mxu0 %v254
    %v358 = vpop.f32.mrf.mxu0
    %v359 = vadd.f32 0.0, %v358
    %v360 = vpop.f32.mrf.mxu0
    %v361 = vadd.f32 0.0, %v360
    %362 = vmatmul.bf16.gmra.mxu0 %v257
    %v363 = vpop.f32.mrf.mxu0
    %v364 = vadd.f32 0.0, %v363
    %v365 = vpop.f32.mrf.mxu0
    %v366 = vadd.f32 0.0, %v365
    %367 = vmatmul.bf16.gmra.mxu0 %v260
    %v368 = vpop.f32.mrf.mxu0
    %v369 = vadd.f32 0.0, %v368
    %v370 = vpop.f32.mrf.mxu0
    %v371 = vadd.f32 0.0, %v370
    %372 = vmatmul.bf16.gmra.mxu0 %v263
    %v373 = vpop.f32.mrf.mxu0
    %v374 = vadd.f32 0.0, %v373
    %v375 = vpop.f32.mrf.mxu0
    %v376 = vadd.f32 0.0, %v375
    %377 = vmatmul.bf16.gmra.mxu0 %v266
    %v378 = vpop.f32.mrf.mxu0
    %v379 = vadd.f32 0.0, %v378
    %v380 = vpop.f32.mrf.mxu0
    %v381 = vadd.f32 0.0, %v380
    %382 = vmatmul.bf16.gmra.mxu0 %v269
    %v383 = vpop.f32.mrf.mxu0
    %v384 = vadd.f32 0.0, %v383
    %v385 = vpop.f32.mrf.mxu0
    %v386 = vadd.f32 0.0, %v385
    %387 = vmatmul.bf16.gmra.mxu0 %v272
    %v388 = vpop.f32.mrf.mxu0
    %v389 = vadd.f32 0.0, %v388
    %v390 = vpop.f32.mrf.mxu0
    %v391 = vadd.f32 0.0, %v390
    %392 = vmatmul.bf16.gmra.mxu0 %v275
    %v393 = vpop.f32.mrf.mxu0
    %v394 = vadd.f32 0.0, %v393
    %v395 = vpop.f32.mrf.mxu0
    %v396 = vadd.f32 0.0, %v395
    %397 = vmatmul.bf16.gmra.mxu0 %v278
    %v398 = vpop.f32.mrf.mxu0
    %v399 = vadd.f32 0.0, %v398
    %v400 = vpop.f32.mrf.mxu0
    %v401 = vadd.f32 0.0, %v400
    %402 = vmatmul.bf16.gmra.mxu0 %v281
    %v403 = vpop.f32.mrf.mxu0
    %v404 = vadd.f32 0.0, %v403
    %v405 = vpop.f32.mrf.mxu0
    %v406 = vadd.f32 0.0, %v405
    %407 = vmatmul.bf16.gmra.mxu0 %v284
    %v408 = vpop.f32.mrf.mxu0
    %v409 = vadd.f32 0.0, %v408
    %v410 = vpop.f32.mrf.mxu0
    %v411 = vadd.f32 0.0, %v410
    %412 = vmatmul.bf16.gmra.mxu0 %v287
    %v413 = vpop.f32.mrf.mxu0
    %v414 = vadd.f32 0.0, %v413
    %v415 = vpop.f32.mrf.mxu0
    %v416 = vadd.f32 0.0, %v415
    %417 = vmatmul.bf16.gmra.mxu0 %v290
    %v418 = vpop.f32.mrf.mxu0
    %v419 = vadd.f32 0.0, %v418
    %v420 = vpop.f32.mrf.mxu0
    %v421 = vadd.f32 0.0, %v420
    %422 = vmatmul.bf16.gmra.mxu0 %v293
    %v423 = vpop.f32.mrf.mxu0
    %v424 = vadd.f32 0.0, %v423
    %v425 = vpop.f32.mrf.mxu0
    %v426 = vadd.f32 0.0, %v425
    %427 = vdwg.mxu0
    %476 = vrot.lane.b32.xlu0 %v309, 96
    %v477 = vpop.permute.xlu0 %476
    %478 = vrot.lane.b32.xlu0 %v311, 96
    %v479 = vpop.permute.xlu0 %478
    %480 = vrot.lane.b32.xlu0 %v314, 96
    %v481 = vpop.permute.xlu0 %480
    %482 = vrot.lane.b32.xlu0 %v316, 96
    %v483 = vpop.permute.xlu0 %482
    %484 = vrot.lane.b32.xlu0 %v319, 96
    %v485 = vpop.permute.xlu0 %484
    %486 = vrot.lane.b32.xlu0 %v321, 96
    %v487 = vpop.permute.xlu0 %486
    %488 = vrot.lane.b32.xlu0 %v324, 96
    %v489 = vpop.permute.xlu0 %488
    %490 = vrot.lane.b32.xlu0 %v326, 96
    %v491 = vpop.permute.xlu0 %490
    %492 = vrot.lane.b32.xlu0 %v329, 96
    %v493 = vpop.permute.xlu0 %492
    %494 = vrot.lane.b32.xlu0 %v331, 96
    %v495 = vpop.permute.xlu0 %494
    %496 = vrot.lane.b32.xlu0 %v334, 96
    %v497 = vpop.permute.xlu0 %496
    %498 = vrot.lane.b32.xlu0 %v336, 96
    %v499 = vpop.permute.xlu0 %498
    %500 = vrot.lane.b32.xlu0 %v339, 96
    %v501 = vpop.permute.xlu0 %500
    %502 = vrot.lane.b32.xlu0 %v341, 96
    %v503 = vpop.permute.xlu0 %502
    %504 = vrot.lane.b32.xlu0 %v344, 96
    %v505 = vpop.permute.xlu0 %504
    %506 = vrot.lane.b32.xlu0 %v346, 96
    %v507 = vpop.permute.xlu0 %506
    %508 = vrot.lane.b32.xlu0 %v349, 96
    %v509 = vpop.permute.xlu0 %508
    %510 = vrot.lane.b32.xlu0 %v351, 96
    %v511 = vpop.permute.xlu0 %510
    %512 = vrot.lane.b32.xlu0 %v354, 96
    %v513 = vpop.permute.xlu0 %512
    %514 = vrot.lane.b32.xlu0 %v356, 96
    %v515 = vpop.permute.xlu0 %514
    %516 = vrot.lane.b32.xlu0 %v359, 96
    %v517 = vpop.permute.xlu0 %516
    %518 = vrot.lane.b32.xlu0 %v361, 96
    %v519 = vpop.permute.xlu0 %518
    %520 = vrot.lane.b32.xlu0 %v364, 96
    %v521 = vpop.permute.xlu0 %520
    %522 = vrot.lane.b32.xlu0 %v366, 96
    %v523 = vpop.permute.xlu0 %522
    %524 = vrot.lane.b32.xlu0 %v369, 96
    %v525 = vpop.permute.xlu0 %524
    %526 = vrot.lane.b32.xlu0 %v371, 96
    %v527 = vpop.permute.xlu0 %526
    %528 = vrot.lane.b32.xlu0 %v374, 96
    %v529 = vpop.permute.xlu0 %528
    %530 = vrot.lane.b32.xlu0 %v376, 96
    %v531 = vpop.permute.xlu0 %530
    %532 = vrot.lane.b32.xlu0 %v379, 96
    %v533 = vpop.permute.xlu0 %532
    %534 = vrot.lane.b32.xlu0 %v381, 96
    %v535 = vpop.permute.xlu0 %534
    %536 = vrot.lane.b32.xlu0 %v384, 96
    %v537 = vpop.permute.xlu0 %536
    %538 = vrot.lane.b32.xlu0 %v386, 96
    %v539 = vpop.permute.xlu0 %538
    %540 = vrot.lane.b32.xlu0 %v389, 96
    %v541 = vpop.permute.xlu0 %540
    %542 = vrot.lane.b32.xlu0 %v391, 96
    %v543 = vpop.permute.xlu0 %542
    %544 = vrot.lane.b32.xlu0 %v394, 96
    %v545 = vpop.permute.xlu0 %544
    %546 = vrot.lane.b32.xlu0 %v396, 96
    %v547 = vpop.permute.xlu0 %546
    %548 = vrot.lane.b32.xlu0 %v399, 96
    %v549 = vpop.permute.xlu0 %548
    %550 = vrot.lane.b32.xlu0 %v401, 96
    %v551 = vpop.permute.xlu0 %550
    %552 = vrot.lane.b32.xlu0 %v404, 96
    %v553 = vpop.permute.xlu0 %552
    %554 = vrot.lane.b32.xlu0 %v406, 96
    %v555 = vpop.permute.xlu0 %554
    %556 = vrot.lane.b32.xlu0 %v409, 96
    %v557 = vpop.permute.xlu0 %556
    %558 = vrot.lane.b32.xlu0 %v411, 96
    %v559 = vpop.permute.xlu0 %558
    %560 = vrot.lane.b32.xlu0 %v414, 96
    %v561 = vpop.permute.xlu0 %560
    %562 = vrot.lane.b32.xlu0 %v416, 96
    %v563 = vpop.permute.xlu0 %562
    %564 = vrot.lane.b32.xlu0 %v419, 96
    %v565 = vpop.permute.xlu0 %564
    %566 = vrot.lane.b32.xlu0 %v421, 96
    %v567 = vpop.permute.xlu0 %566
    %568 = vrot.lane.b32.xlu0 %v424, 96
    %v569 = vpop.permute.xlu0 %568
    %570 = vrot.lane.b32.xlu0 %v426, 96
    %v571 = vpop.permute.xlu0 %570
    %v620 = vmax.f32 %v309, %v477
    %v621 = vmax.f32 %v311, %v479
    %v622 = vmax.f32 %v314, %v481
    %v623 = vmax.f32 %v316, %v483
    %v624 = vmax.f32 %v319, %v485
    %v625 = vmax.f32 %v321, %v487
    %v626 = vmax.f32 %v324, %v489
    %v627 = vmax.f32 %v326, %v491
    %v628 = vmax.f32 %v329, %v493
    %v629 = vmax.f32 %v331, %v495
    %v630 = vmax.f32 %v334, %v497
    %v631 = vmax.f32 %v336, %v499
    %v632 = vmax.f32 %v339, %v501
    %v633 = vmax.f32 %v341, %v503
    %v634 = vmax.f32 %v344, %v505
    %v635 = vmax.f32 %v346, %v507
    %v636 = vmax.f32 %v349, %v509
    %v637 = vmax.f32 %v351, %v511
    %v638 = vmax.f32 %v354, %v513
    %v639 = vmax.f32 %v356, %v515
    %v640 = vmax.f32 %v359, %v517
    %v641 = vmax.f32 %v361, %v519
    %v642 = vmax.f32 %v364, %v521
    %v643 = vmax.f32 %v366, %v523
    %v644 = vmax.f32 %v369, %v525
    %v645 = vmax.f32 %v371, %v527
    %v646 = vmax.f32 %v374, %v529
    %v647 = vmax.f32 %v376, %v531
    %v648 = vmax.f32 %v379, %v533
    %v649 = vmax.f32 %v381, %v535
    %v650 = vmax.f32 %v384, %v537
    %v651 = vmax.f32 %v386, %v539
    %v652 = vmax.f32 %v389, %v541
    %v653 = vmax.f32 %v391, %v543
    %v654 = vmax.f32 %v394, %v545
    %v655 = vmax.f32 %v396, %v547
    %v656 = vmax.f32 %v399, %v549
    %v657 = vmax.f32 %v401, %v551
    %v658 = vmax.f32 %v404, %v553
    %v659 = vmax.f32 %v406, %v555
    %v660 = vmax.f32 %v409, %v557
    %v661 = vmax.f32 %v411, %v559
    %v662 = vmax.f32 %v414, %v561
    %v663 = vmax.f32 %v416, %v563
    %v664 = vmax.f32 %v419, %v565
    %v665 = vmax.f32 %v421, %v567
    %v666 = vmax.f32 %v424, %v569
    %v667 = vmax.f32 %v426, %v571
    %716 = vrot.lane.b32.xlu0 %v620, 64
    %v717 = vpop.permute.xlu0 %716
    %718 = vrot.lane.b32.xlu0 %v621, 64
    %v719 = vpop.permute.xlu0 %718
    %720 = vrot.lane.b32.xlu0 %v622, 64
    %v721 = vpop.permute.xlu0 %720
    %722 = vrot.lane.b32.xlu0 %v623, 64
    %v723 = vpop.permute.xlu0 %722
    %724 = vrot.lane.b32.xlu0 %v624, 64
    %v725 = vpop.permute.xlu0 %724
    %726 = vrot.lane.b32.xlu0 %v625, 64
    %v727 = vpop.permute.xlu0 %726
    %728 = vrot.lane.b32.xlu0 %v626, 64
    %v729 = vpop.permute.xlu0 %728
    %730 = vrot.lane.b32.xlu0 %v627, 64
    %v731 = vpop.permute.xlu0 %730
    %732 = vrot.lane.b32.xlu0 %v628, 64
    %v733 = vpop.permute.xlu0 %732
    %734 = vrot.lane.b32.xlu0 %v629, 64
    %v735 = vpop.permute.xlu0 %734
    %736 = vrot.lane.b32.xlu0 %v630, 64
    %v737 = vpop.permute.xlu0 %736
    %738 = vrot.lane.b32.xlu0 %v631, 64
    %v739 = vpop.permute.xlu0 %738
    %740 = vrot.lane.b32.xlu0 %v632, 64
    %v741 = vpop.permute.xlu0 %740
    %742 = vrot.lane.b32.xlu0 %v633, 64
    %v743 = vpop.permute.xlu0 %742
    %744 = vrot.lane.b32.xlu0 %v634, 64
    %v745 = vpop.permute.xlu0 %744
    %746 = vrot.lane.b32.xlu0 %v635, 64
    %v747 = vpop.permute.xlu0 %746
    %748 = vrot.lane.b32.xlu0 %v636, 64
    %v749 = vpop.permute.xlu0 %748
    %750 = vrot.lane.b32.xlu0 %v637, 64
    %v751 = vpop.permute.xlu0 %750
    %752 = vrot.lane.b32.xlu0 %v638, 64
    %v753 = vpop.permute.xlu0 %752
    %754 = vrot.lane.b32.xlu0 %v639, 64
    %v755 = vpop.permute.xlu0 %754
    %756 = vrot.lane.b32.xlu0 %v640, 64
    %v757 = vpop.permute.xlu0 %756
    %758 = vrot.lane.b32.xlu0 %v641, 64
    %v759 = vpop.permute.xlu0 %758
    %760 = vrot.lane.b32.xlu0 %v642, 64
    %v761 = vpop.permute.xlu0 %760
    %762 = vrot.lane.b32.xlu0 %v643, 64
    %v763 = vpop.permute.xlu0 %762
    %764 = vrot.lane.b32.xlu0 %v644, 64
    %v765 = vpop.permute.xlu0 %764
    %766 = vrot.lane.b32.xlu0 %v645, 64
    %v767 = vpop.permute.xlu0 %766
    %768 = vrot.lane.b32.xlu0 %v646, 64
    %v769 = vpop.permute.xlu0 %768
    %770 = vrot.lane.b32.xlu0 %v647, 64
    %v771 = vpop.permute.xlu0 %770
    %772 = vrot.lane.b32.xlu0 %v648, 64
    %v773 = vpop.permute.xlu0 %772
    %774 = vrot.lane.b32.xlu0 %v649, 64
    %v775 = vpop.permute.xlu0 %774
    %776 = vrot.lane.b32.xlu0 %v650, 64
    %v777 = vpop.permute.xlu0 %776
    %778 = vrot.lane.b32.xlu0 %v651, 64
    %v779 = vpop.permute.xlu0 %778
    %780 = vrot.lane.b32.xlu0 %v652, 64
    %v781 = vpop.permute.xlu0 %780
    %782 = vrot.lane.b32.xlu0 %v653, 64
    %v783 = vpop.permute.xlu0 %782
    %784 = vrot.lane.b32.xlu0 %v654, 64
    %v785 = vpop.permute.xlu0 %784
    %786 = vrot.lane.b32.xlu0 %v655, 64
    %v787 = vpop.permute.xlu0 %786
    %788 = vrot.lane.b32.xlu0 %v656, 64
    %v789 = vpop.permute.xlu0 %788
    %790 = vrot.lane.b32.xlu0 %v657, 64
    %v791 = vpop.permute.xlu0 %790
    %792 = vrot.lane.b32.xlu0 %v658, 64
    %v793 = vpop.permute.xlu0 %792
    %794 = vrot.lane.b32.xlu0 %v659, 64
    %v795 = vpop.permute.xlu0 %794
    %796 = vrot.lane.b32.xlu0 %v660, 64
    %v797 = vpop.permute.xlu0 %796
    %798 = vrot.lane.b32.xlu0 %v661, 64
    %v799 = vpop.permute.xlu0 %798
    %800 = vrot.lane.b32.xlu0 %v662, 64
    %v801 = vpop.permute.xlu0 %800
    %802 = vrot.lane.b32.xlu0 %v663, 64
    %v803 = vpop.permute.xlu0 %802
    %804 = vrot.lane.b32.xlu0 %v664, 64
    %v805 = vpop.permute.xlu0 %804
    %806 = vrot.lane.b32.xlu0 %v665, 64
    %v807 = vpop.permute.xlu0 %806
    %808 = vrot.lane.b32.xlu0 %v666, 64
    %v809 = vpop.permute.xlu0 %808
    %810 = vrot.lane.b32.xlu0 %v667, 64
    %v811 = vpop.permute.xlu0 %810
    %v860 = vmax.f32 %v620, %v717
    %v861 = vmax.f32 %v621, %v719
    %v862 = vmax.f32 %v622, %v721
    %v863 = vmax.f32 %v623, %v723
    %v864 = vmax.f32 %v624, %v725
    %v865 = vmax.f32 %v625, %v727
    %v866 = vmax.f32 %v626, %v729
    %v867 = vmax.f32 %v627, %v731
    %v868 = vmax.f32 %v628, %v733
    %v869 = vmax.f32 %v629, %v735
    %v870 = vmax.f32 %v630, %v737
    %v871 = vmax.f32 %v631, %v739
    %v872 = vmax.f32 %v632, %v741
    %v873 = vmax.f32 %v633, %v743
    %v874 = vmax.f32 %v634, %v745
    %v875 = vmax.f32 %v635, %v747
    %v876 = vmax.f32 %v636, %v749
    %v877 = vmax.f32 %v637, %v751
    %v878 = vmax.f32 %v638, %v753
    %v879 = vmax.f32 %v639, %v755
    %v880 = vmax.f32 %v640, %v757
    %v881 = vmax.f32 %v641, %v759
    %v882 = vmax.f32 %v642, %v761
    %v883 = vmax.f32 %v643, %v763
    %v884 = vmax.f32 %v644, %v765
    %v885 = vmax.f32 %v645, %v767
    %v886 = vmax.f32 %v646, %v769
    %v887 = vmax.f32 %v647, %v771
    %v888 = vmax.f32 %v648, %v773
    %v889 = vmax.f32 %v649, %v775
    %v890 = vmax.f32 %v650, %v777
    %v891 = vmax.f32 %v651, %v779
    %v892 = vmax.f32 %v652, %v781
    %v893 = vmax.f32 %v653, %v783
    %v894 = vmax.f32 %v654, %v785
    %v895 = vmax.f32 %v655, %v787
    %v896 = vmax.f32 %v656, %v789
    %v897 = vmax.f32 %v657, %v791
    %v898 = vmax.f32 %v658, %v793
    %v899 = vmax.f32 %v659, %v795
    %v900 = vmax.f32 %v660, %v797
    %v901 = vmax.f32 %v661, %v799
    %v902 = vmax.f32 %v662, %v801
    %v903 = vmax.f32 %v663, %v803
    %v904 = vmax.f32 %v664, %v805
    %v905 = vmax.f32 %v665, %v807
    %v906 = vmax.f32 %v666, %v809
    %v907 = vmax.f32 %v667, %v811
    %v908 = vld [vmem:[%s2] sm:$0x1]
    %v910 = vperm.slane %v908, 0
    %v912 = vadd.f32 %v860, %v910
    %v913 = vadd.f32 %v861, %v910
    %v914 = vadd.f32 %v862, %v910
    %v915 = vadd.f32 %v863, %v910
    %v916 = vadd.f32 %v864, %v910
    %v917 = vadd.f32 %v865, %v910
    %v918 = vadd.f32 %v866, %v910
    %v919 = vadd.f32 %v867, %v910
    %v920 = vadd.f32 %v868, %v910
    %v921 = vadd.f32 %v869, %v910
    %v922 = vadd.f32 %v870, %v910
    %v923 = vadd.f32 %v871, %v910
    %v924 = vadd.f32 %v872, %v910
    %v925 = vadd.f32 %v873, %v910
    %v926 = vadd.f32 %v874, %v910
    %v927 = vadd.f32 %v875, %v910
    %v928 = vadd.f32 %v876, %v910
    %v929 = vadd.f32 %v877, %v910
    %v930 = vadd.f32 %v878, %v910
    %v931 = vadd.f32 %v879, %v910
    %v932 = vadd.f32 %v880, %v910
    %v933 = vadd.f32 %v881, %v910
    %v934 = vadd.f32 %v882, %v910
    %v935 = vadd.f32 %v883, %v910
    %v936 = vadd.f32 %v884, %v910
    %v937 = vadd.f32 %v885, %v910
    %v938 = vadd.f32 %v886, %v910
    %v939 = vadd.f32 %v887, %v910
    %v940 = vadd.f32 %v888, %v910
    %v941 = vadd.f32 %v889, %v910
    %v942 = vadd.f32 %v890, %v910
    %v943 = vadd.f32 %v891, %v910
    %v944 = vadd.f32 %v892, %v910
    %v945 = vadd.f32 %v893, %v910
    %v946 = vadd.f32 %v894, %v910
    %v947 = vadd.f32 %v895, %v910
    %v948 = vadd.f32 %v896, %v910
    %v949 = vadd.f32 %v897, %v910
    %v950 = vadd.f32 %v898, %v910
    %v951 = vadd.f32 %v899, %v910
    %v952 = vadd.f32 %v900, %v910
    %v953 = vadd.f32 %v901, %v910
    %v954 = vadd.f32 %v902, %v910
    %v955 = vadd.f32 %v903, %v910
    %v956 = vadd.f32 %v904, %v910
    %v957 = vadd.f32 %v905, %v910
    %v958 = vadd.f32 %v906, %v910
    %v959 = vadd.f32 %v907, %v910
    %v960 = vmax.f32 %v912, 0.0
    %v961 = vmax.f32 %v913, 0.0
    %v962 = vmax.f32 %v914, 0.0
    %v963 = vmax.f32 %v915, 0.0
    %v964 = vmax.f32 %v916, 0.0
    %v965 = vmax.f32 %v917, 0.0
    %v966 = vmax.f32 %v918, 0.0
    %v967 = vmax.f32 %v919, 0.0
    %v968 = vmax.f32 %v920, 0.0
    %v969 = vmax.f32 %v921, 0.0
    %v970 = vmax.f32 %v922, 0.0
    %v971 = vmax.f32 %v923, 0.0
    %v972 = vmax.f32 %v924, 0.0
    %v973 = vmax.f32 %v925, 0.0
    %v974 = vmax.f32 %v926, 0.0
    %v975 = vmax.f32 %v927, 0.0
    %v976 = vmax.f32 %v928, 0.0
    %v977 = vmax.f32 %v929, 0.0
    %v978 = vmax.f32 %v930, 0.0
    %v979 = vmax.f32 %v931, 0.0
    %v980 = vmax.f32 %v932, 0.0
    %v981 = vmax.f32 %v933, 0.0
    %v982 = vmax.f32 %v934, 0.0
    %v983 = vmax.f32 %v935, 0.0
    %v984 = vmax.f32 %v936, 0.0
    %v985 = vmax.f32 %v937, 0.0
    %v986 = vmax.f32 %v938, 0.0
    %v987 = vmax.f32 %v939, 0.0
    %v988 = vmax.f32 %v940, 0.0
    %v989 = vmax.f32 %v941, 0.0
    %v990 = vmax.f32 %v942, 0.0
    %v991 = vmax.f32 %v943, 0.0
    %v992 = vmax.f32 %v944, 0.0
    %v993 = vmax.f32 %v945, 0.0
    %v994 = vmax.f32 %v946, 0.0
    %v995 = vmax.f32 %v947, 0.0
    %v996 = vmax.f32 %v948, 0.0
    %v997 = vmax.f32 %v949, 0.0
    %v998 = vmax.f32 %v950, 0.0
    %v999 = vmax.f32 %v951, 0.0
    %v1000 = vmax.f32 %v952, 0.0
    %v1001 = vmax.f32 %v953, 0.0
    %v1002 = vmax.f32 %v954, 0.0
    %v1003 = vmax.f32 %v955, 0.0
    %v1004 = vmax.f32 %v956, 0.0
    %v1005 = vmax.f32 %v957, 0.0
    %v1006 = vmax.f32 %v958, 0.0
    %v1007 = vmax.f32 %v959, 0.0
    %v1008 = vpack.c.bf16 %v960, %v960
    %v1009 = vpack.c.bf16 %v961, %v961
    %v1010 = vpack.c.bf16 %v962, %v962
    %v1011 = vpack.c.bf16 %v963, %v963
    %v1012 = vpack.c.bf16 %v964, %v964
    %v1013 = vpack.c.bf16 %v965, %v965
    %v1014 = vpack.c.bf16 %v966, %v966
    %v1015 = vpack.c.bf16 %v967, %v967
    %v1016 = vpack.c.bf16 %v968, %v968
    %v1017 = vpack.c.bf16 %v969, %v969
    %v1018 = vpack.c.bf16 %v970, %v970
    %v1019 = vpack.c.bf16 %v971, %v971
    %v1020 = vpack.c.bf16 %v972, %v972
    %v1021 = vpack.c.bf16 %v973, %v973
    %v1022 = vpack.c.bf16 %v974, %v974
    %v1023 = vpack.c.bf16 %v975, %v975
    %v1024 = vpack.c.bf16 %v976, %v976
    %v1025 = vpack.c.bf16 %v977, %v977
    %v1026 = vpack.c.bf16 %v978, %v978
    %v1027 = vpack.c.bf16 %v979, %v979
    %v1028 = vpack.c.bf16 %v980, %v980
    %v1029 = vpack.c.bf16 %v981, %v981
    %v1030 = vpack.c.bf16 %v982, %v982
    %v1031 = vpack.c.bf16 %v983, %v983
    %vm1044 = vcmask 1046528
    %v1045 = vrot.slane %v960, 1
    %v1046 = vrot.slane %v961, 1
    %v1047 = vsel %vm1044, %v1045, %v1046
    %v1048 = vrot.slane %v962, 1
    %v1049 = vsel %vm1044, %v1046, %v1048
    %v1050 = vrot.slane %v963, 1
    %v1051 = vsel %vm1044, %v1048, %v1050
    %v1052 = vrot.slane %v964, 1
    %v1053 = vsel %vm1044, %v1050, %v1052
    %v1054 = vrot.slane %v965, 1
    %v1055 = vsel %vm1044, %v1052, %v1054
    %v1056 = vrot.slane %v966, 1
    %v1057 = vsel %vm1044, %v1054, %v1056
    %v1058 = vrot.slane %v967, 1
    %v1059 = vsel %vm1044, %v1056, %v1058
    %v1060 = vrot.slane %v968, 1
    %v1061 = vsel %vm1044, %v1058, %v1060
    %v1062 = vrot.slane %v969, 1
    %v1063 = vsel %vm1044, %v1060, %v1062
    %v1064 = vrot.slane %v970, 1
    %v1065 = vsel %vm1044, %v1062, %v1064
    %v1066 = vrot.slane %v971, 1
    %v1067 = vsel %vm1044, %v1064, %v1066
    %v1081 = vsel %vm1044, %v1066, %v1045
    %v1082 = vpack.c.bf16 %v1047, %v1047
    %v1083 = vpack.c.bf16 %v1049, %v1049
    %v1084 = vpack.c.bf16 %v1051, %v1051
    %v1085 = vpack.c.bf16 %v1053, %v1053
    %v1086 = vpack.c.bf16 %v1055, %v1055
    %v1087 = vpack.c.bf16 %v1057, %v1057
    %v1088 = vpack.c.bf16 %v1059, %v1059
    %v1089 = vpack.c.bf16 %v1061, %v1061
    %v1090 = vpack.c.bf16 %v1063, %v1063
    %v1091 = vpack.c.bf16 %v1065, %v1065
    %v1092 = vpack.c.bf16 %v1067, %v1067
    %v1093 = vpack.c.bf16 %v1081, %v1081
    %v1106 = vrot.slane %v972, 1
    %v1107 = vrot.slane %v973, 1
    %v1108 = vsel %vm1044, %v1106, %v1107
    %v1109 = vrot.slane %v974, 1
    %v1110 = vsel %vm1044, %v1107, %v1109
    %v1111 = vrot.slane %v975, 1
    %v1112 = vsel %vm1044, %v1109, %v1111
    %v1113 = vrot.slane %v976, 1
    %v1114 = vsel %vm1044, %v1111, %v1113
    %v1115 = vrot.slane %v977, 1
    %v1116 = vsel %vm1044, %v1113, %v1115
    %v1117 = vrot.slane %v978, 1
    %v1118 = vsel %vm1044, %v1115, %v1117
    %v1119 = vrot.slane %v979, 1
    %v1120 = vsel %vm1044, %v1117, %v1119
    %v1121 = vrot.slane %v980, 1
    %v1122 = vsel %vm1044, %v1119, %v1121
    %v1123 = vrot.slane %v981, 1
    %v1124 = vsel %vm1044, %v1121, %v1123
    %v1125 = vrot.slane %v982, 1
    %v1126 = vsel %vm1044, %v1123, %v1125
    %v1127 = vrot.slane %v983, 1
    %v1128 = vsel %vm1044, %v1125, %v1127
    %v1142 = vsel %vm1044, %v1127, %v1106
    %v1143 = vpack.c.bf16 %v1108, %v1108
    %v1144 = vpack.c.bf16 %v1110, %v1110
    %v1145 = vpack.c.bf16 %v1112, %v1112
    %v1146 = vpack.c.bf16 %v1114, %v1114
    %v1147 = vpack.c.bf16 %v1116, %v1116
    %v1148 = vpack.c.bf16 %v1118, %v1118
    %v1149 = vpack.c.bf16 %v1120, %v1120
    %v1150 = vpack.c.bf16 %v1122, %v1122
    %v1151 = vpack.c.bf16 %v1124, %v1124
    %v1152 = vpack.c.bf16 %v1126, %v1126
    %v1153 = vpack.c.bf16 %v1128, %v1128
    %v1154 = vpack.c.bf16 %v1142, %v1142
    %v1155 = vpack.c.bf16 %v984, %v984
    %v1156 = vpack.c.bf16 %v985, %v985
    %v1157 = vpack.c.bf16 %v986, %v986
    %v1158 = vpack.c.bf16 %v987, %v987
    %v1159 = vpack.c.bf16 %v988, %v988
    %v1160 = vpack.c.bf16 %v989, %v989
    %v1161 = vpack.c.bf16 %v990, %v990
    %v1162 = vpack.c.bf16 %v991, %v991
    %v1163 = vpack.c.bf16 %v992, %v992
    %v1164 = vpack.c.bf16 %v993, %v993
    %v1165 = vpack.c.bf16 %v994, %v994
    %v1166 = vpack.c.bf16 %v995, %v995
    %v1167 = vpack.c.bf16 %v996, %v996
    %v1168 = vpack.c.bf16 %v997, %v997
    %v1169 = vpack.c.bf16 %v998, %v998
    %v1170 = vpack.c.bf16 %v999, %v999
    %v1171 = vpack.c.bf16 %v1000, %v1000
    %v1172 = vpack.c.bf16 %v1001, %v1001
    %v1173 = vpack.c.bf16 %v1002, %v1002
    %v1174 = vpack.c.bf16 %v1003, %v1003
    %v1175 = vpack.c.bf16 %v1004, %v1004
    %v1176 = vpack.c.bf16 %v1005, %v1005
    %v1177 = vpack.c.bf16 %v1006, %v1006
    %v1178 = vpack.c.bf16 %v1007, %v1007
    %v1191 = vrot.slane %v984, 1
    %v1192 = vrot.slane %v985, 1
    %v1193 = vsel %vm1044, %v1191, %v1192
    %v1194 = vrot.slane %v986, 1
    %v1195 = vsel %vm1044, %v1192, %v1194
    %v1196 = vrot.slane %v987, 1
    %v1197 = vsel %vm1044, %v1194, %v1196
    %v1198 = vrot.slane %v988, 1
    %v1199 = vsel %vm1044, %v1196, %v1198
    %v1200 = vrot.slane %v989, 1
    %v1201 = vsel %vm1044, %v1198, %v1200
    %v1202 = vrot.slane %v990, 1
    %v1203 = vsel %vm1044, %v1200, %v1202
    %v1204 = vrot.slane %v991, 1
    %v1205 = vsel %vm1044, %v1202, %v1204
    %v1206 = vrot.slane %v992, 1
    %v1207 = vsel %vm1044, %v1204, %v1206
    %v1208 = vrot.slane %v993, 1
    %v1209 = vsel %vm1044, %v1206, %v1208
    %v1210 = vrot.slane %v994, 1
    %v1211 = vsel %vm1044, %v1208, %v1210
    %v1212 = vrot.slane %v995, 1
    %v1213 = vsel %vm1044, %v1210, %v1212
    %v1227 = vsel %vm1044, %v1212, %v1191
    %v1228 = vpack.c.bf16 %v1193, %v1193
    %v1229 = vpack.c.bf16 %v1195, %v1195
    %v1230 = vpack.c.bf16 %v1197, %v1197
    %v1231 = vpack.c.bf16 %v1199, %v1199
    %v1232 = vpack.c.bf16 %v1201, %v1201
    %v1233 = vpack.c.bf16 %v1203, %v1203
    %v1234 = vpack.c.bf16 %v1205, %v1205
    %v1235 = vpack.c.bf16 %v1207, %v1207
    %v1236 = vpack.c.bf16 %v1209, %v1209
    %v1237 = vpack.c.bf16 %v1211, %v1211
    %v1238 = vpack.c.bf16 %v1213, %v1213
    %v1239 = vpack.c.bf16 %v1227, %v1227
    %v1252 = vrot.slane %v996, 1
    %v1253 = vrot.slane %v997, 1
    %v1254 = vsel %vm1044, %v1252, %v1253
    %v1255 = vrot.slane %v998, 1
    %v1256 = vsel %vm1044, %v1253, %v1255
    %v1257 = vrot.slane %v999, 1
    %v1258 = vsel %vm1044, %v1255, %v1257
    %v1259 = vrot.slane %v1000, 1
    %v1260 = vsel %vm1044, %v1257, %v1259
    %v1261 = vrot.slane %v1001, 1
    %v1262 = vsel %vm1044, %v1259, %v1261
    %v1263 = vrot.slane %v1002, 1
    %v1264 = vsel %vm1044, %v1261, %v1263
    %v1265 = vrot.slane %v1003, 1
    %v1266 = vsel %vm1044, %v1263, %v1265
    %v1267 = vrot.slane %v1004, 1
    %v1268 = vsel %vm1044, %v1265, %v1267
    %v1269 = vrot.slane %v1005, 1
    %v1270 = vsel %vm1044, %v1267, %v1269
    %v1271 = vrot.slane %v1006, 1
    %v1272 = vsel %vm1044, %v1269, %v1271
    %v1273 = vrot.slane %v1007, 1
    %v1274 = vsel %vm1044, %v1271, %v1273
    %v1288 = vsel %vm1044, %v1273, %v1252
    %v1289 = vpack.c.bf16 %v1254, %v1254
    %v1290 = vpack.c.bf16 %v1256, %v1256
    %v1291 = vpack.c.bf16 %v1258, %v1258
    %v1292 = vpack.c.bf16 %v1260, %v1260
    %v1293 = vpack.c.bf16 %v1262, %v1262
    %v1294 = vpack.c.bf16 %v1264, %v1264
    %v1295 = vpack.c.bf16 %v1266, %v1266
    %v1296 = vpack.c.bf16 %v1268, %v1268
    %v1297 = vpack.c.bf16 %v1270, %v1270
    %v1298 = vpack.c.bf16 %v1272, %v1272
    %v1299 = vpack.c.bf16 %v1274, %v1274
    %v1300 = vpack.c.bf16 %v1288, %v1288
    %v1313 = vunpack.c.l.b16 %v1008
    %v1314 = vunpack.c.l.b16 %v1009
    %v1315 = vunpack.c.l.b16 %v1010
    %v1316 = vunpack.c.l.b16 %v1011
    %v1317 = vunpack.c.l.b16 %v1012
    %v1318 = vunpack.c.l.b16 %v1013
    %v1319 = vunpack.c.l.b16 %v1014
    %v1320 = vunpack.c.l.b16 %v1015
    %v1321 = vunpack.c.l.b16 %v1016
    %v1322 = vunpack.c.l.b16 %v1017
    %v1323 = vunpack.c.l.b16 %v1018
    %v1324 = vunpack.c.l.b16 %v1019
    %v1325 = vpack.c.b16 %v1314, %v1313
    %v1326 = vpack.c.b16 %v1316, %v1315
    %v1327 = vpack.c.b16 %v1318, %v1317
    %v1328 = vpack.c.b16 %v1320, %v1319
    %v1329 = vpack.c.b16 %v1322, %v1321
    %v1330 = vpack.c.b16 %v1324, %v1323
    %v1343 = vunpack.c.l.b16 %v1020
    %v1344 = vunpack.c.l.b16 %v1021
    %v1345 = vunpack.c.l.b16 %v1022
    %v1346 = vunpack.c.l.b16 %v1023
    %v1347 = vunpack.c.l.b16 %v1024
    %v1348 = vunpack.c.l.b16 %v1025
    %v1349 = vunpack.c.l.b16 %v1026
    %v1350 = vunpack.c.l.b16 %v1027
    %v1351 = vunpack.c.l.b16 %v1028
    %v1352 = vunpack.c.l.b16 %v1029
    %v1353 = vunpack.c.l.b16 %v1030
    %v1354 = vunpack.c.l.b16 %v1031
    %v1355 = vpack.c.b16 %v1344, %v1343
    %v1356 = vpack.c.b16 %v1346, %v1345
    %v1357 = vpack.c.b16 %v1348, %v1347
    %v1358 = vpack.c.b16 %v1350, %v1349
    %v1359 = vpack.c.b16 %v1352, %v1351
    %v1360 = vpack.c.b16 %v1354, %v1353
    %1361 = vrot.lane.b32.xlu0 %v1355, 32
    %v1362 = vpop.permute.xlu0 %1361
    %1363 = vrot.lane.b32.xlu0 %v1356, 32
    %v1364 = vpop.permute.xlu0 %1363
    %1365 = vrot.lane.b32.xlu0 %v1357, 32
    %v1366 = vpop.permute.xlu0 %1365
    %1367 = vrot.lane.b32.xlu0 %v1358, 32
    %v1368 = vpop.permute.xlu0 %1367
    %1369 = vrot.lane.b32.xlu0 %v1359, 32
    %v1370 = vpop.permute.xlu0 %1369
    %1371 = vrot.lane.b32.xlu0 %v1360, 32
    %v1372 = vpop.permute.xlu0 %1371
    %v1385 = vunpack.c.l.b16 %v1082
    %v1386 = vunpack.c.l.b16 %v1083
    %v1387 = vunpack.c.l.b16 %v1084
    %v1388 = vunpack.c.l.b16 %v1085
    %v1389 = vunpack.c.l.b16 %v1086
    %v1390 = vunpack.c.l.b16 %v1087
    %v1391 = vunpack.c.l.b16 %v1088
    %v1392 = vunpack.c.l.b16 %v1089
    %v1393 = vunpack.c.l.b16 %v1090
    %v1394 = vunpack.c.l.b16 %v1091
    %v1395 = vunpack.c.l.b16 %v1092
    %v1396 = vunpack.c.l.b16 %v1093
    %v1397 = vpack.c.b16 %v1386, %v1385
    %v1398 = vpack.c.b16 %v1388, %v1387
    %v1399 = vpack.c.b16 %v1390, %v1389
    %v1400 = vpack.c.b16 %v1392, %v1391
    %v1401 = vpack.c.b16 %v1394, %v1393
    %v1402 = vpack.c.b16 %v1396, %v1395
    %1403 = vrot.lane.b32.xlu0 %v1397, 64
    %v1404 = vpop.permute.xlu0 %1403
    %1405 = vrot.lane.b32.xlu0 %v1398, 64
    %v1406 = vpop.permute.xlu0 %1405
    %1407 = vrot.lane.b32.xlu0 %v1399, 64
    %v1408 = vpop.permute.xlu0 %1407
    %1409 = vrot.lane.b32.xlu0 %v1400, 64
    %v1410 = vpop.permute.xlu0 %1409
    %1411 = vrot.lane.b32.xlu0 %v1401, 64
    %v1412 = vpop.permute.xlu0 %1411
    %1413 = vrot.lane.b32.xlu0 %v1402, 64
    %v1414 = vpop.permute.xlu0 %1413
    %v1427 = vunpack.c.l.b16 %v1155
    %v1428 = vunpack.c.l.b16 %v1156
    %v1429 = vunpack.c.l.b16 %v1157
    %v1430 = vunpack.c.l.b16 %v1158
    %v1431 = vunpack.c.l.b16 %v1159
    %v1432 = vunpack.c.l.b16 %v1160
    %v1433 = vunpack.c.l.b16 %v1161
    %v1434 = vunpack.c.l.b16 %v1162
    %v1435 = vunpack.c.l.b16 %v1163
    %v1436 = vunpack.c.l.b16 %v1164
    %v1437 = vunpack.c.l.b16 %v1165
    %v1438 = vunpack.c.l.b16 %v1166
    %v1439 = vpack.c.b16 %v1428, %v1427
    %v1440 = vpack.c.b16 %v1430, %v1429
    %v1441 = vpack.c.b16 %v1432, %v1431
    %v1442 = vpack.c.b16 %v1434, %v1433
    %v1443 = vpack.c.b16 %v1436, %v1435
    %v1444 = vpack.c.b16 %v1438, %v1437
    %1445 = vrot.lane.b32.xlu0 %v1439, 96
    %v1446 = vpop.permute.xlu0 %1445
    %1447 = vrot.lane.b32.xlu0 %v1440, 96
    %v1448 = vpop.permute.xlu0 %1447
    %1449 = vrot.lane.b32.xlu0 %v1441, 96
    %v1450 = vpop.permute.xlu0 %1449
    %1451 = vrot.lane.b32.xlu0 %v1442, 96
    %v1452 = vpop.permute.xlu0 %1451
    %1453 = vrot.lane.b32.xlu0 %v1443, 96
    %v1454 = vpop.permute.xlu0 %1453
    %1455 = vrot.lane.b32.xlu0 %v1444, 96
    %v1456 = vpop.permute.xlu0 %1455
    %v1469 = vunpack.c.l.b16 %v1167
    %v1470 = vunpack.c.l.b16 %v1168
    %v1471 = vunpack.c.l.b16 %v1169
    %v1472 = vunpack.c.l.b16 %v1170
    %v1473 = vunpack.c.l.b16 %v1171
    %v1474 = vunpack.c.l.b16 %v1172
    %v1475 = vunpack.c.l.b16 %v1173
    %v1476 = vunpack.c.l.b16 %v1174
    %v1477 = vunpack.c.l.b16 %v1175
    %v1478 = vunpack.c.l.b16 %v1176
    %v1479 = vunpack.c.l.b16 %v1177
    %v1480 = vunpack.c.l.b16 %v1178
    %v1481 = vpack.c.b16 %v1470, %v1469
    %v1482 = vpack.c.b16 %v1472, %v1471
    %v1483 = vpack.c.b16 %v1474, %v1473
    %v1484 = vpack.c.b16 %v1476, %v1475
    %v1485 = vpack.c.b16 %v1478, %v1477
    %v1486 = vpack.c.b16 %v1480, %v1479
    %v1499 = vunpack.c.l.b16 %v1228
    %v1500 = vunpack.c.l.b16 %v1229
    %v1501 = vunpack.c.l.b16 %v1230
    %v1502 = vunpack.c.l.b16 %v1231
    %v1503 = vunpack.c.l.b16 %v1232
    %v1504 = vunpack.c.l.b16 %v1233
    %v1505 = vunpack.c.l.b16 %v1234
    %v1506 = vunpack.c.l.b16 %v1235
    %v1507 = vunpack.c.l.b16 %v1236
    %v1508 = vunpack.c.l.b16 %v1237
    %v1509 = vunpack.c.l.b16 %v1238
    %v1510 = vunpack.c.l.b16 %v1239
    %v1511 = vpack.c.b16 %v1500, %v1499
    %v1512 = vpack.c.b16 %v1502, %v1501
    %v1513 = vpack.c.b16 %v1504, %v1503
    %v1514 = vpack.c.b16 %v1506, %v1505
    %v1515 = vpack.c.b16 %v1508, %v1507
    %v1516 = vpack.c.b16 %v1510, %v1509
    %1517 = vrot.lane.b32.xlu0 %v1511, 32
    %v1518 = vpop.permute.xlu0 %1517
    %1519 = vrot.lane.b32.xlu0 %v1512, 32
    %v1520 = vpop.permute.xlu0 %1519
    %1521 = vrot.lane.b32.xlu0 %v1513, 32
    %v1522 = vpop.permute.xlu0 %1521
    %1523 = vrot.lane.b32.xlu0 %v1514, 32
    %v1524 = vpop.permute.xlu0 %1523
    %1525 = vrot.lane.b32.xlu0 %v1515, 32
    %v1526 = vpop.permute.xlu0 %1525
    %1527 = vrot.lane.b32.xlu0 %v1516, 32
    %v1528 = vpop.permute.xlu0 %1527
    %v1529 = vpack.c.b16 %v1315, %v1314
    %v1530 = vpack.c.b16 %v1317, %v1316
    %v1531 = vpack.c.b16 %v1319, %v1318
    %v1532 = vpack.c.b16 %v1321, %v1320
    %v1533 = vpack.c.b16 %v1323, %v1322
    %v1534 = vpack.c.b16 %v1313, %v1324
    %1535 = vrot.lane.b32.xlu0 %v1529, 64
    %v1536 = vpop.permute.xlu0 %1535
    %1537 = vrot.lane.b32.xlu0 %v1530, 64
    %v1538 = vpop.permute.xlu0 %1537
    %1539 = vrot.lane.b32.xlu0 %v1531, 64
    %v1540 = vpop.permute.xlu0 %1539
    %1541 = vrot.lane.b32.xlu0 %v1532, 64
    %v1542 = vpop.permute.xlu0 %1541
    %1543 = vrot.lane.b32.xlu0 %v1533, 64
    %v1544 = vpop.permute.xlu0 %1543
    %1545 = vrot.lane.b32.xlu0 %v1534, 64
    %v1546 = vpop.permute.xlu0 %1545
    %v1547 = vpack.c.b16 %v1345, %v1344
    %v1548 = vpack.c.b16 %v1347, %v1346
    %v1549 = vpack.c.b16 %v1349, %v1348
    %v1550 = vpack.c.b16 %v1351, %v1350
    %v1551 = vpack.c.b16 %v1353, %v1352
    %v1552 = vpack.c.b16 %v1343, %v1354
    %1553 = vrot.lane.b32.xlu0 %v1547, 96
    %v1554 = vpop.permute.xlu0 %1553
    %1555 = vrot.lane.b32.xlu0 %v1548, 96
    %v1556 = vpop.permute.xlu0 %1555
    %1557 = vrot.lane.b32.xlu0 %v1549, 96
    %v1558 = vpop.permute.xlu0 %1557
    %1559 = vrot.lane.b32.xlu0 %v1550, 96
    %v1560 = vpop.permute.xlu0 %1559
    %1561 = vrot.lane.b32.xlu0 %v1551, 96
    %v1562 = vpop.permute.xlu0 %1561
    %1563 = vrot.lane.b32.xlu0 %v1552, 96
    %v1564 = vpop.permute.xlu0 %1563
    %v1565 = vpack.c.b16 %v1387, %v1386
    %v1566 = vpack.c.b16 %v1389, %v1388
    %v1567 = vpack.c.b16 %v1391, %v1390
    %v1568 = vpack.c.b16 %v1393, %v1392
    %v1569 = vpack.c.b16 %v1395, %v1394
    %v1570 = vpack.c.b16 %v1385, %v1396
    %v1583 = vunpack.c.l.b16 %v1143
    %v1584 = vunpack.c.l.b16 %v1144
    %v1585 = vunpack.c.l.b16 %v1145
    %v1586 = vunpack.c.l.b16 %v1146
    %v1587 = vunpack.c.l.b16 %v1147
    %v1588 = vunpack.c.l.b16 %v1148
    %v1589 = vunpack.c.l.b16 %v1149
    %v1590 = vunpack.c.l.b16 %v1150
    %v1591 = vunpack.c.l.b16 %v1151
    %v1592 = vunpack.c.l.b16 %v1152
    %v1593 = vunpack.c.l.b16 %v1153
    %v1594 = vunpack.c.l.b16 %v1154
    %v1595 = vpack.c.b16 %v1584, %v1583
    %v1596 = vpack.c.b16 %v1586, %v1585
    %v1597 = vpack.c.b16 %v1588, %v1587
    %v1598 = vpack.c.b16 %v1590, %v1589
    %v1599 = vpack.c.b16 %v1592, %v1591
    %v1600 = vpack.c.b16 %v1594, %v1593
    %1601 = vrot.lane.b32.xlu0 %v1595, 96
    %v1602 = vpop.permute.xlu0 %1601
    %1603 = vrot.lane.b32.xlu0 %v1596, 96
    %v1604 = vpop.permute.xlu0 %1603
    %1605 = vrot.lane.b32.xlu0 %v1597, 96
    %v1606 = vpop.permute.xlu0 %1605
    %1607 = vrot.lane.b32.xlu0 %v1598, 96
    %v1608 = vpop.permute.xlu0 %1607
    %1609 = vrot.lane.b32.xlu0 %v1599, 96
    %v1610 = vpop.permute.xlu0 %1609
    %1611 = vrot.lane.b32.xlu0 %v1600, 96
    %v1612 = vpop.permute.xlu0 %1611
    %v1625 = vunpack.c.l.b16 %v1289
    %v1626 = vunpack.c.l.b16 %v1290
    %v1627 = vunpack.c.l.b16 %v1291
    %v1628 = vunpack.c.l.b16 %v1292
    %v1629 = vunpack.c.l.b16 %v1293
    %v1630 = vunpack.c.l.b16 %v1294
    %v1631 = vunpack.c.l.b16 %v1295
    %v1632 = vunpack.c.l.b16 %v1296
    %v1633 = vunpack.c.l.b16 %v1297
    %v1634 = vunpack.c.l.b16 %v1298
    %v1635 = vunpack.c.l.b16 %v1299
    %v1636 = vunpack.c.l.b16 %v1300
    %v1637 = vpack.c.b16 %v1626, %v1625
    %v1638 = vpack.c.b16 %v1628, %v1627
    %v1639 = vpack.c.b16 %v1630, %v1629
    %v1640 = vpack.c.b16 %v1632, %v1631
    %v1641 = vpack.c.b16 %v1634, %v1633
    %v1642 = vpack.c.b16 %v1636, %v1635
    %1643 = vrot.lane.b32.xlu0 %v1637, 64
    %v1644 = vpop.permute.xlu0 %1643
    %1645 = vrot.lane.b32.xlu0 %v1638, 64
    %v1646 = vpop.permute.xlu0 %1645
    %1647 = vrot.lane.b32.xlu0 %v1639, 64
    %v1648 = vpop.permute.xlu0 %1647
    %1649 = vrot.lane.b32.xlu0 %v1640, 64
    %v1650 = vpop.permute.xlu0 %1649
    %1651 = vrot.lane.b32.xlu0 %v1641, 64
    %v1652 = vpop.permute.xlu0 %1651
    %1653 = vrot.lane.b32.xlu0 %v1642, 64
    %v1654 = vpop.permute.xlu0 %1653
    %vm1655 = vcmask 261120
    %v1658 = vsel %vm1655, %v1325, %v1362
    %v1661 = vsel %vm1655, %v1326, %v1364
    %v1664 = vsel %vm1655, %v1327, %v1366
    %v1667 = vsel %vm1655, %v1328, %v1368
    %v1670 = vsel %vm1655, %v1329, %v1370
    %v1673 = vsel %vm1655, %v1330, %v1372
    %vm1674 = vcmask 523264
    %v1676 = vsel %vm1674, %v1658, %v1404
    %v1678 = vsel %vm1674, %v1661, %v1406
    %v1680 = vsel %vm1674, %v1664, %v1408
    %v1682 = vsel %vm1674, %v1667, %v1410
    %v1684 = vsel %vm1674, %v1670, %v1412
    %v1686 = vsel %vm1674, %v1673, %v1414
    %vm1687 = vcmask 785408
    %v1689 = vsel %vm1687, %v1676, %v1446
    %v1692 = vsel %vm1687, %v1678, %v1448
    %v1695 = vsel %vm1687, %v1680, %v1450
    %v1698 = vsel %vm1687, %v1682, %v1452
    %v1701 = vsel %vm1687, %v1684, %v1454
    %v1704 = vsel %vm1687, %v1686, %v1456
    %v1708 = vsel %vm1655, %v1481, %v1518
    %v1711 = vsel %vm1655, %v1482, %v1520
    %v1714 = vsel %vm1655, %v1483, %v1522
    %v1717 = vsel %vm1655, %v1484, %v1524
    %v1720 = vsel %vm1655, %v1485, %v1526
    %v1723 = vsel %vm1655, %v1486, %v1528
    %v1725 = vsel %vm1674, %v1708, %v1536
    %v1727 = vsel %vm1674, %v1711, %v1538
    %v1729 = vsel %vm1674, %v1714, %v1540
    %v1731 = vsel %vm1674, %v1717, %v1542
    %v1733 = vsel %vm1674, %v1720, %v1544
    %v1735 = vsel %vm1674, %v1723, %v1546
    %v1737 = vsel %vm1687, %v1725, %v1554
    %v1740 = vsel %vm1687, %v1727, %v1556
    %v1743 = vsel %vm1687, %v1729, %v1558
    %v1746 = vsel %vm1687, %v1731, %v1560
    %v1749 = vsel %vm1687, %v1733, %v1562
    %v1752 = vsel %vm1687, %v1735, %v1564
    %v1755 = vsel %vm1655, %v1565, %v1362
    %v1757 = vsel %vm1655, %v1566, %v1364
    %v1759 = vsel %vm1655, %v1567, %v1366
    %v1761 = vsel %vm1655, %v1568, %v1368
    %v1763 = vsel %vm1655, %v1569, %v1370
    %v1765 = vsel %vm1655, %v1570, %v1372
    %v1766 = vsel %vm1674, %v1755, %v1404
    %v1767 = vsel %vm1674, %v1757, %v1406
    %v1768 = vsel %vm1674, %v1759, %v1408
    %v1769 = vsel %vm1674, %v1761, %v1410
    %v1770 = vsel %vm1674, %v1763, %v1412
    %v1771 = vsel %vm1674, %v1765, %v1414
    %v1773 = vsel %vm1687, %v1766, %v1602
    %v1776 = vsel %vm1687, %v1767, %v1604
    %v1779 = vsel %vm1687, %v1768, %v1606
    %v1782 = vsel %vm1687, %v1769, %v1608
    %v1785 = vsel %vm1687, %v1770, %v1610
    %v1788 = vsel %vm1687, %v1771, %v1612
    %v1791 = vsel %vm1674, %v1708, %v1644
    %v1793 = vsel %vm1674, %v1711, %v1646
    %v1795 = vsel %vm1674, %v1714, %v1648
    %v1797 = vsel %vm1674, %v1717, %v1650
    %v1799 = vsel %vm1674, %v1720, %v1652
    %v1801 = vsel %vm1674, %v1723, %v1654
    %v1802 = vsel %vm1687, %v1791, %v1554
    %v1804 = vsel %vm1687, %v1793, %v1556
    %v1806 = vsel %vm1687, %v1795, %v1558
    %v1808 = vsel %vm1687, %v1797, %v1560
    %v1810 = vsel %vm1687, %v1799, %v1562
    %v1812 = vsel %vm1687, %v1801, %v1564
    %v1814 = vpack.c.b16 %v1585, %v1584
    %v1815 = vpack.c.b16 %v1587, %v1586
    %v1816 = vpack.c.b16 %v1589, %v1588
    %v1817 = vpack.c.b16 %v1591, %v1590
    %v1818 = vpack.c.b16 %v1593, %v1592
    %v1819 = vpack.c.b16 %v1583, %v1594
    %1820 = vrot.lane.b32.xlu0 %v1814, 32
    %v1821 = vpop.permute.xlu0 %1820
    %1822 = vrot.lane.b32.xlu0 %v1815, 32
    %v1823 = vpop.permute.xlu0 %1822
    %1824 = vrot.lane.b32.xlu0 %v1816, 32
    %v1825 = vpop.permute.xlu0 %1824
    %1826 = vrot.lane.b32.xlu0 %v1817, 32
    %v1827 = vpop.permute.xlu0 %1826
    %1828 = vrot.lane.b32.xlu0 %v1818, 32
    %v1829 = vpop.permute.xlu0 %1828
    %1830 = vrot.lane.b32.xlu0 %v1819, 32
    %v1831 = vpop.permute.xlu0 %1830
    %1832 = vrot.lane.b32.xlu0 %v1439, 64
    %v1833 = vpop.permute.xlu0 %1832
    %1834 = vrot.lane.b32.xlu0 %v1440, 64
    %v1835 = vpop.permute.xlu0 %1834
    %1836 = vrot.lane.b32.xlu0 %v1441, 64
    %v1837 = vpop.permute.xlu0 %1836
    %1838 = vrot.lane.b32.xlu0 %v1442, 64
    %v1839 = vpop.permute.xlu0 %1838
    %1840 = vrot.lane.b32.xlu0 %v1443, 64
    %v1841 = vpop.permute.xlu0 %1840
    %1842 = vrot.lane.b32.xlu0 %v1444, 64
    %v1843 = vpop.permute.xlu0 %1842
    %1844 = vrot.lane.b32.xlu0 %v1481, 96
    %v1845 = vpop.permute.xlu0 %1844
    %1846 = vrot.lane.b32.xlu0 %v1482, 96
    %v1847 = vpop.permute.xlu0 %1846
    %1848 = vrot.lane.b32.xlu0 %v1483, 96
    %v1849 = vpop.permute.xlu0 %1848
    %1850 = vrot.lane.b32.xlu0 %v1484, 96
    %v1851 = vpop.permute.xlu0 %1850
    %1852 = vrot.lane.b32.xlu0 %v1485, 96
    %v1853 = vpop.permute.xlu0 %1852
    %1854 = vrot.lane.b32.xlu0 %v1486, 96
    %v1855 = vpop.permute.xlu0 %1854
    %1856 = vrot.lane.b32.xlu0 %v1529, 32
    %v1857 = vpop.permute.xlu0 %1856
    %1858 = vrot.lane.b32.xlu0 %v1530, 32
    %v1859 = vpop.permute.xlu0 %1858
    %1860 = vrot.lane.b32.xlu0 %v1531, 32
    %v1861 = vpop.permute.xlu0 %1860
    %1862 = vrot.lane.b32.xlu0 %v1532, 32
    %v1863 = vpop.permute.xlu0 %1862
    %1864 = vrot.lane.b32.xlu0 %v1533, 32
    %v1865 = vpop.permute.xlu0 %1864
    %1866 = vrot.lane.b32.xlu0 %v1534, 32
    %v1867 = vpop.permute.xlu0 %1866
    %1868 = vrot.lane.b32.xlu0 %v1547, 64
    %v1869 = vpop.permute.xlu0 %1868
    %1870 = vrot.lane.b32.xlu0 %v1548, 64
    %v1871 = vpop.permute.xlu0 %1870
    %1872 = vrot.lane.b32.xlu0 %v1549, 64
    %v1873 = vpop.permute.xlu0 %1872
    %1874 = vrot.lane.b32.xlu0 %v1550, 64
    %v1875 = vpop.permute.xlu0 %1874
    %1876 = vrot.lane.b32.xlu0 %v1551, 64
    %v1877 = vpop.permute.xlu0 %1876
    %1878 = vrot.lane.b32.xlu0 %v1552, 64
    %v1879 = vpop.permute.xlu0 %1878
    %1880 = vrot.lane.b32.xlu0 %v1565, 96
    %v1881 = vpop.permute.xlu0 %1880
    %1882 = vrot.lane.b32.xlu0 %v1566, 96
    %v1883 = vpop.permute.xlu0 %1882
    %1884 = vrot.lane.b32.xlu0 %v1567, 96
    %v1885 = vpop.permute.xlu0 %1884
    %1886 = vrot.lane.b32.xlu0 %v1568, 96
    %v1887 = vpop.permute.xlu0 %1886
    %1888 = vrot.lane.b32.xlu0 %v1569, 96
    %v1889 = vpop.permute.xlu0 %1888
    %1890 = vrot.lane.b32.xlu0 %v1570, 96
    %v1891 = vpop.permute.xlu0 %1890
    %v1892 = vpack.c.b16 %v1429, %v1428
    %v1893 = vpack.c.b16 %v1431, %v1430
    %v1894 = vpack.c.b16 %v1433, %v1432
    %v1895 = vpack.c.b16 %v1435, %v1434
    %v1896 = vpack.c.b16 %v1437, %v1436
    %v1897 = vpack.c.b16 %v1427, %v1438
    %v1898 = vpack.c.b16 %v1471, %v1470
    %v1899 = vpack.c.b16 %v1473, %v1472
    %v1900 = vpack.c.b16 %v1475, %v1474
    %v1901 = vpack.c.b16 %v1477, %v1476
    %v1902 = vpack.c.b16 %v1479, %v1478
    %v1903 = vpack.c.b16 %v1469, %v1480
    %1904 = vrot.lane.b32.xlu0 %v1898, 32
    %v1905 = vpop.permute.xlu0 %1904
    %1906 = vrot.lane.b32.xlu0 %v1899, 32
    %v1907 = vpop.permute.xlu0 %1906
    %1908 = vrot.lane.b32.xlu0 %v1900, 32
    %v1909 = vpop.permute.xlu0 %1908
    %1910 = vrot.lane.b32.xlu0 %v1901, 32
    %v1911 = vpop.permute.xlu0 %1910
    %1912 = vrot.lane.b32.xlu0 %v1902, 32
    %v1913 = vpop.permute.xlu0 %1912
    %1914 = vrot.lane.b32.xlu0 %v1903, 32
    %v1915 = vpop.permute.xlu0 %1914
    %v1916 = vpack.c.b16 %v1501, %v1500
    %v1917 = vpack.c.b16 %v1503, %v1502
    %v1918 = vpack.c.b16 %v1505, %v1504
    %v1919 = vpack.c.b16 %v1507, %v1506
    %v1920 = vpack.c.b16 %v1509, %v1508
    %v1921 = vpack.c.b16 %v1499, %v1510
    %1922 = vrot.lane.b32.xlu0 %v1916, 64
    %v1923 = vpop.permute.xlu0 %1922
    %1924 = vrot.lane.b32.xlu0 %v1917, 64
    %v1925 = vpop.permute.xlu0 %1924
    %1926 = vrot.lane.b32.xlu0 %v1918, 64
    %v1927 = vpop.permute.xlu0 %1926
    %1928 = vrot.lane.b32.xlu0 %v1919, 64
    %v1929 = vpop.permute.xlu0 %1928
    %1930 = vrot.lane.b32.xlu0 %v1920, 64
    %v1931 = vpop.permute.xlu0 %1930
    %1932 = vrot.lane.b32.xlu0 %v1921, 64
    %v1933 = vpop.permute.xlu0 %1932
    %1934 = vrot.lane.b32.xlu0 %v1637, 32
    %v1935 = vpop.permute.xlu0 %1934
    %1936 = vrot.lane.b32.xlu0 %v1638, 32
    %v1937 = vpop.permute.xlu0 %1936
    %1938 = vrot.lane.b32.xlu0 %v1639, 32
    %v1939 = vpop.permute.xlu0 %1938
    %1940 = vrot.lane.b32.xlu0 %v1640, 32
    %v1941 = vpop.permute.xlu0 %1940
    %1942 = vrot.lane.b32.xlu0 %v1641, 32
    %v1943 = vpop.permute.xlu0 %1942
    %1944 = vrot.lane.b32.xlu0 %v1642, 32
    %v1945 = vpop.permute.xlu0 %1944
    %v1947 = vsel %vm1655, %v1565, %v1821
    %v1949 = vsel %vm1655, %v1566, %v1823
    %v1951 = vsel %vm1655, %v1567, %v1825
    %v1953 = vsel %vm1655, %v1568, %v1827
    %v1955 = vsel %vm1655, %v1569, %v1829
    %v1957 = vsel %vm1655, %v1570, %v1831
    %v1959 = vsel %vm1674, %v1947, %v1833
    %v1961 = vsel %vm1674, %v1949, %v1835
    %v1963 = vsel %vm1674, %v1951, %v1837
    %v1965 = vsel %vm1674, %v1953, %v1839
    %v1967 = vsel %vm1674, %v1955, %v1841
    %v1969 = vsel %vm1674, %v1957, %v1843
    %v1971 = vsel %vm1687, %v1959, %v1845
    %v1974 = vsel %vm1687, %v1961, %v1847
    %v1977 = vsel %vm1687, %v1963, %v1849
    %v1980 = vsel %vm1687, %v1965, %v1851
    %v1983 = vsel %vm1687, %v1967, %v1853
    %v1986 = vsel %vm1687, %v1969, %v1855
    %v1990 = vsel %vm1655, %v1511, %v1857
    %v1993 = vsel %vm1655, %v1512, %v1859
    %v1996 = vsel %vm1655, %v1513, %v1861
    %v1999 = vsel %vm1655, %v1514, %v1863
    %v2002 = vsel %vm1655, %v1515, %v1865
    %v2005 = vsel %vm1655, %v1516, %v1867
    %v2007 = vsel %vm1674, %v1990, %v1869
    %v2009 = vsel %vm1674, %v1993, %v1871
    %v2011 = vsel %vm1674, %v1996, %v1873
    %v2013 = vsel %vm1674, %v1999, %v1875
    %v2015 = vsel %vm1674, %v2002, %v1877
    %v2017 = vsel %vm1674, %v2005, %v1879
    %v2019 = vsel %vm1687, %v2007, %v1881
    %v2022 = vsel %vm1687, %v2009, %v1883
    %v2025 = vsel %vm1687, %v2011, %v1885
    %v2028 = vsel %vm1687, %v2013, %v1887
    %v2031 = vsel %vm1687, %v2015, %v1889
    %v2034 = vsel %vm1687, %v2017, %v1891
    %v2038 = vsel %vm1655, %v1892, %v1905
    %v2041 = vsel %vm1655, %v1893, %v1907
    %v2044 = vsel %vm1655, %v1894, %v1909
    %v2047 = vsel %vm1655, %v1895, %v1911
    %v2050 = vsel %vm1655, %v1896, %v1913
    %v2053 = vsel %vm1655, %v1897, %v1915
    %v2055 = vsel %vm1674, %v2038, %v1923
    %v2057 = vsel %vm1674, %v2041, %v1925
    %v2059 = vsel %vm1674, %v2044, %v1927
    %v2061 = vsel %vm1674, %v2047, %v1929
    %v2063 = vsel %vm1674, %v2050, %v1931
    %v2065 = vsel %vm1674, %v2053, %v1933
    %v2066 = vsel %vm1687, %v2055, %v1845
    %v2068 = vsel %vm1687, %v2057, %v1847
    %v2070 = vsel %vm1687, %v2059, %v1849
    %v2072 = vsel %vm1687, %v2061, %v1851
    %v2074 = vsel %vm1687, %v2063, %v1853
    %v2076 = vsel %vm1687, %v2065, %v1855
    %v2079 = vsel %vm1655, %v1511, %v1935
    %v2081 = vsel %vm1655, %v1512, %v1937
    %v2083 = vsel %vm1655, %v1513, %v1939
    %v2085 = vsel %vm1655, %v1514, %v1941
    %v2087 = vsel %vm1655, %v1515, %v1943
    %v2089 = vsel %vm1655, %v1516, %v1945
    %v2090 = vsel %vm1674, %v2079, %v1869
    %v2091 = vsel %vm1674, %v2081, %v1871
    %v2092 = vsel %vm1674, %v2083, %v1873
    %v2093 = vsel %vm1674, %v2085, %v1875
    %v2094 = vsel %vm1674, %v2087, %v1877
    %v2095 = vsel %vm1674, %v2089, %v1879
    %v2096 = vsel %vm1687, %v2090, %v1881
    %v2098 = vsel %vm1687, %v2091, %v1883
    %v2100 = vsel %vm1687, %v2092, %v1885
    %v2102 = vsel %vm1687, %v2093, %v1887
    %v2104 = vsel %vm1687, %v2094, %v1889
    %v2106 = vsel %vm1687, %v2095, %v1891
    %v2108 = vpack.c.b16 %v1627, %v1626
    %v2109 = vpack.c.b16 %v1629, %v1628
    %v2110 = vpack.c.b16 %v1631, %v1630
    %v2111 = vpack.c.b16 %v1633, %v1632
    %v2112 = vpack.c.b16 %v1635, %v1634
    %v2113 = vpack.c.b16 %v1625, %v1636
    %2114 = vrot.lane.b32.xlu0 %v2108, 96
    %v2115 = vpop.permute.xlu0 %2114
    %2116 = vrot.lane.b32.xlu0 %v2109, 96
    %v2117 = vpop.permute.xlu0 %2116
    %2118 = vrot.lane.b32.xlu0 %v2110, 96
    %v2119 = vpop.permute.xlu0 %2118
    %2120 = vrot.lane.b32.xlu0 %v2111, 96
    %v2121 = vpop.permute.xlu0 %2120
    %2122 = vrot.lane.b32.xlu0 %v2112, 96
    %v2123 = vpop.permute.xlu0 %2122
    %2124 = vrot.lane.b32.xlu0 %v2113, 96
    %v2125 = vpop.permute.xlu0 %2124
    %v2127 = vsel %vm1655, %v1814, %v1905
    %v2129 = vsel %vm1655, %v1815, %v1907
    %v2131 = vsel %vm1655, %v1816, %v1909
    %v2133 = vsel %vm1655, %v1817, %v1911
    %v2135 = vsel %vm1655, %v1818, %v1913
    %v2137 = vsel %vm1655, %v1819, %v1915
    %v2138 = vsel %vm1674, %v2127, %v1923
    %v2139 = vsel %vm1674, %v2129, %v1925
    %v2140 = vsel %vm1674, %v2131, %v1927
    %v2141 = vsel %vm1674, %v2133, %v1929
    %v2142 = vsel %vm1674, %v2135, %v1931
    %v2143 = vsel %vm1674, %v2137, %v1933
    %v2145 = vsel %vm1687, %v2138, %v2115
    %v2148 = vsel %vm1687, %v2139, %v2117
    %v2151 = vsel %vm1687, %v2140, %v2119
    %v2154 = vsel %vm1687, %v2141, %v2121
    %v2157 = vsel %vm1687, %v2142, %v2123
    %v2160 = vsel %vm1687, %v2143, %v2125
    %v2162 = vld [vmem:[%s3] sm:$0xff]
    %v2163 = vld [vmem:[%s3 + $0x8] sm:$0xff]
    %v2164 = vld [vmem:[%s3 + $0x10] sm:$0xff]
    %v2165 = vld [vmem:[%s3 + $0x18] sm:$0xff]
    %v2166 = vld [vmem:[%s3 + $0x20] sm:$0xff]
    %v2167 = vld [vmem:[%s3 + $0x28] sm:$0xff]
    %v2168 = vld [vmem:[%s3 + $0x30] sm:$0xff]
    %v2169 = vld [vmem:[%s3 + $0x38] sm:$0xff]
    %v2170 = vld [vmem:[%s3 + $0x40] sm:$0xff]
    %v2171 = vld [vmem:[%s3 + $0x48] sm:$0xff]
    %v2172 = vld [vmem:[%s3 + $0x50] sm:$0xff]
    %v2173 = vld [vmem:[%s3 + $0x58] sm:$0xff]
    %v2174 = vld [vmem:[%s3 + $0x60] sm:$0xff]
    %v2175 = vld [vmem:[%s3 + $0x68] sm:$0xff]
    %v2176 = vld [vmem:[%s3 + $0x70] sm:$0xff]
    %v2177 = vld [vmem:[%s3 + $0x78] sm:$0xff]
    %v2178 = vld [vmem:[%s3 + $0x80] sm:$0xff]
    %v2179 = vld [vmem:[%s3 + $0x88] sm:$0xff]
    %v2180 = vld [vmem:[%s3 + $0x90] sm:$0xff]
    %v2181 = vld [vmem:[%s3 + $0x98] sm:$0xff]
    %v2182 = vld [vmem:[%s3 + $0xa0] sm:$0xff]
    %v2183 = vld [vmem:[%s3 + $0xa8] sm:$0xff]
    %v2184 = vld [vmem:[%s3 + $0xb0] sm:$0xff]
    %v2185 = vld [vmem:[%s3 + $0xb8] sm:$0xff]
    %v2186 = vld [vmem:[%s3 + $0xc0] sm:$0xff]
    %v2187 = vld [vmem:[%s3 + $0xc8] sm:$0xff]
    %v2188 = vld [vmem:[%s3 + $0xd0] sm:$0xff]
    %v2189 = vld [vmem:[%s3 + $0xd8] sm:$0xff]
    %v2190 = vld [vmem:[%s3 + $0xe0] sm:$0xff]
    %v2191 = vld [vmem:[%s3 + $0xe8] sm:$0xff]
    %v2192 = vld [vmem:[%s3 + $0xf0] sm:$0xff]
    %v2193 = vld [vmem:[%s3 + $0xf8] sm:$0xff]
    %v2194 = vld [vmem:[%s3 + $0x100] sm:$0xff]
    %v2195 = vld [vmem:[%s3 + $0x108] sm:$0xff]
    %v2196 = vld [vmem:[%s3 + $0x110] sm:$0xff]
    %v2197 = vld [vmem:[%s3 + $0x118] sm:$0xff]
    %v2198 = vld [vmem:[%s3 + $0x120] sm:$0xff]
    %v2199 = vld [vmem:[%s3 + $0x128] sm:$0xff]
    %v2200 = vld [vmem:[%s3 + $0x130] sm:$0xff]
    %v2201 = vld [vmem:[%s3 + $0x138] sm:$0xff]
    %v2202 = vld [vmem:[%s3 + $0x140] sm:$0xff]
    %v2203 = vld [vmem:[%s3 + $0x148] sm:$0xff]
    %v2204 = vld [vmem:[%s3 + $0x150] sm:$0xff]
    %v2205 = vld [vmem:[%s3 + $0x158] sm:$0xff]
    %v2206 = vld [vmem:[%s3 + $0x160] sm:$0xff]
    %v2207 = vld [vmem:[%s3 + $0x168] sm:$0xff]
    %v2208 = vld [vmem:[%s3 + $0x170] sm:$0xff]
    %v2209 = vld [vmem:[%s3 + $0x178] sm:$0xff]
    %v2210 = vld [vmem:[%s3 + $0x180] sm:$0xff]
    %v2211 = vld [vmem:[%s3 + $0x188] sm:$0xff]
    %v2212 = vld [vmem:[%s3 + $0x190] sm:$0xff]
    %v2213 = vld [vmem:[%s3 + $0x198] sm:$0xff]
    %v2214 = vld [vmem:[%s3 + $0x1a0] sm:$0xff]
    %v2215 = vld [vmem:[%s3 + $0x1a8] sm:$0xff]
    %v2216 = vld [vmem:[%s3 + $0x1b0] sm:$0xff]
    %v2217 = vld [vmem:[%s3 + $0x1b8] sm:$0xff]
    %v2218 = vld [vmem:[%s3 + $0x1c0] sm:$0xff]
    %v2219 = vld [vmem:[%s3 + $0x1c8] sm:$0xff]
    %v2220 = vld [vmem:[%s3 + $0x1d0] sm:$0xff]
    %v2221 = vld [vmem:[%s3 + $0x1d8] sm:$0xff]
    %v2222 = vld [vmem:[%s3 + $0x1e0] sm:$0xff]
    %v2223 = vld [vmem:[%s3 + $0x1e8] sm:$0xff]
    %v2224 = vld [vmem:[%s3 + $0x1f0] sm:$0xff]
    %v2225 = vld [vmem:[%s3 + $0x1f8] sm:$0xff]
    %v2226 = vld [vmem:[%s3 + $0x200] sm:$0xff]
    %v2227 = vld [vmem:[%s3 + $0x208] sm:$0xff]
    %v2228 = vld [vmem:[%s3 + $0x210] sm:$0xff]
    %v2229 = vld [vmem:[%s3 + $0x218] sm:$0xff]
    %v2230 = vld [vmem:[%s3 + $0x220] sm:$0xff]
    %v2231 = vld [vmem:[%s3 + $0x228] sm:$0xff]
    %v2232 = vld [vmem:[%s3 + $0x230] sm:$0xff]
    %v2233 = vld [vmem:[%s3 + $0x238] sm:$0xff]
    %v2234 = vld [vmem:[%s3 + $0x240] sm:$0xff]
    %v2235 = vld [vmem:[%s3 + $0x248] sm:$0xff]
    %v2236 = vld [vmem:[%s3 + $0x250] sm:$0xff]
    %v2237 = vld [vmem:[%s3 + $0x258] sm:$0xff]
    %v2238 = vld [vmem:[%s3 + $0x260] sm:$0xff]
    %v2239 = vld [vmem:[%s3 + $0x268] sm:$0xff]
    %v2240 = vld [vmem:[%s3 + $0x270] sm:$0xff]
    %v2241 = vld [vmem:[%s3 + $0x278] sm:$0xff]
    %v2242 = vld [vmem:[%s3 + $0x280] sm:$0xff]
    %v2243 = vld [vmem:[%s3 + $0x288] sm:$0xff]
    %v2244 = vld [vmem:[%s3 + $0x290] sm:$0xff]
    %v2245 = vld [vmem:[%s3 + $0x298] sm:$0xff]
    %v2246 = vld [vmem:[%s3 + $0x2a0] sm:$0xff]
    %v2247 = vld [vmem:[%s3 + $0x2a8] sm:$0xff]
    %v2248 = vld [vmem:[%s3 + $0x2b0] sm:$0xff]
    %v2249 = vld [vmem:[%s3 + $0x2b8] sm:$0xff]
    %v2250 = vld [vmem:[%s3 + $0x2c0] sm:$0xff]
    %v2251 = vld [vmem:[%s3 + $0x2c8] sm:$0xff]
    %v2252 = vld [vmem:[%s3 + $0x2d0] sm:$0xff]
    %v2253 = vld [vmem:[%s3 + $0x2d8] sm:$0xff]
    %v2254 = vld [vmem:[%s3 + $0x2e0] sm:$0xff]
    %v2255 = vld [vmem:[%s3 + $0x2e8] sm:$0xff]
    %v2256 = vld [vmem:[%s3 + $0x2f0] sm:$0xff]
    %v2257 = vld [vmem:[%s3 + $0x2f8] sm:$0xff]
    %v2258 = vld [vmem:[%s3 + $0x300] sm:$0xff]
    %v2259 = vld [vmem:[%s3 + $0x308] sm:$0xff]
    %v2260 = vld [vmem:[%s3 + $0x310] sm:$0xff]
    %v2261 = vld [vmem:[%s3 + $0x318] sm:$0xff]
    %v2262 = vld [vmem:[%s3 + $0x320] sm:$0xff]
    %v2263 = vld [vmem:[%s3 + $0x328] sm:$0xff]
    %v2264 = vld [vmem:[%s3 + $0x330] sm:$0xff]
    %v2265 = vld [vmem:[%s3 + $0x338] sm:$0xff]
    %v2266 = vld [vmem:[%s3 + $0x340] sm:$0xff]
    %v2267 = vld [vmem:[%s3 + $0x348] sm:$0xff]
    %v2268 = vld [vmem:[%s3 + $0x350] sm:$0xff]
    %v2269 = vld [vmem:[%s3 + $0x358] sm:$0xff]
    %v2270 = vld [vmem:[%s3 + $0x360] sm:$0xff]
    %v2271 = vld [vmem:[%s3 + $0x368] sm:$0xff]
    %v2272 = vld [vmem:[%s3 + $0x370] sm:$0xff]
    %v2273 = vld [vmem:[%s3 + $0x378] sm:$0xff]
    %v2274 = vld [vmem:[%s3 + $0x380] sm:$0xff]
    %v2275 = vld [vmem:[%s3 + $0x388] sm:$0xff]
    %v2276 = vld [vmem:[%s3 + $0x390] sm:$0xff]
    %v2277 = vld [vmem:[%s3 + $0x398] sm:$0xff]
    %v2278 = vld [vmem:[%s3 + $0x3a0] sm:$0xff]
    %v2279 = vld [vmem:[%s3 + $0x3a8] sm:$0xff]
    %v2280 = vld [vmem:[%s3 + $0x3b0] sm:$0xff]
    %v2281 = vld [vmem:[%s3 + $0x3b8] sm:$0xff]
    %v2282 = vld [vmem:[%s3 + $0x3c0] sm:$0xff]
    %v2283 = vld [vmem:[%s3 + $0x3c8] sm:$0xff]
    %v2284 = vld [vmem:[%s3 + $0x3d0] sm:$0xff]
    %v2285 = vld [vmem:[%s3 + $0x3d8] sm:$0xff]
    %v2286 = vld [vmem:[%s3 + $0x3e0] sm:$0xff]
    %v2287 = vld [vmem:[%s3 + $0x3e8] sm:$0xff]
    %v2288 = vld [vmem:[%s3 + $0x3f0] sm:$0xff]
    %v2289 = vld [vmem:[%s3 + $0x3f8] sm:$0xff]
    %v2290 = vld [vmem:[%s3 + $0x400] sm:$0xff]
    %v2291 = vld [vmem:[%s3 + $0x408] sm:$0xff]
    %v2292 = vld [vmem:[%s3 + $0x410] sm:$0xff]
    %v2293 = vld [vmem:[%s3 + $0x418] sm:$0xff]
    %v2294 = vld [vmem:[%s3 + $0x420] sm:$0xff]
    %v2295 = vld [vmem:[%s3 + $0x428] sm:$0xff]
    %v2296 = vld [vmem:[%s3 + $0x430] sm:$0xff]
    %v2297 = vld [vmem:[%s3 + $0x438] sm:$0xff]
    %v2298 = vld [vmem:[%s3 + $0x440] sm:$0xff]
    %v2299 = vld [vmem:[%s3 + $0x448] sm:$0xff]
    %v2300 = vld [vmem:[%s3 + $0x450] sm:$0xff]
    %v2301 = vld [vmem:[%s3 + $0x458] sm:$0xff]
    %v2302 = vld [vmem:[%s3 + $0x460] sm:$0xff]
    %v2303 = vld [vmem:[%s3 + $0x468] sm:$0xff]
    %v2304 = vld [vmem:[%s3 + $0x470] sm:$0xff]
    %v2305 = vld [vmem:[%s3 + $0x478] sm:$0xff]
    %v2450 = vunpack.c.l.b16 %v2162
    %v2451 = vunpack.c.h.b16 %v2162
    %v2452 = vunpack.c.l.b16 %v2163
    %v2453 = vunpack.c.h.b16 %v2163
    %v2454 = vunpack.c.l.b16 %v2164
    %v2455 = vunpack.c.h.b16 %v2164
    %v2456 = vunpack.c.l.b16 %v2165
    %v2457 = vunpack.c.h.b16 %v2165
    %v2458 = vunpack.c.l.b16 %v2166
    %v2459 = vunpack.c.h.b16 %v2166
    %v2460 = vunpack.c.l.b16 %v2167
    %v2461 = vunpack.c.h.b16 %v2167
    %v2462 = vunpack.c.l.b16 %v2168
    %v2463 = vunpack.c.h.b16 %v2168
    %v2464 = vunpack.c.l.b16 %v2169
    %v2465 = vunpack.c.h.b16 %v2169
    %v2466 = vunpack.c.l.b16 %v2170
    %v2467 = vunpack.c.h.b16 %v2170
    %v2468 = vunpack.c.l.b16 %v2171
    %v2469 = vunpack.c.h.b16 %v2171
    %v2470 = vunpack.c.l.b16 %v2172
    %v2471 = vunpack.c.h.b16 %v2172
    %v2472 = vunpack.c.l.b16 %v2173
    %v2473 = vunpack.c.h.b16 %v2173
    %v2474 = vunpack.c.l.b16 %v2174
    %v2475 = vunpack.c.h.b16 %v2174
    %v2476 = vunpack.c.l.b16 %v2175
    %v2477 = vunpack.c.h.b16 %v2175
    %v2478 = vunpack.c.l.b16 %v2176
    %v2479 = vunpack.c.h.b16 %v2176
    %v2480 = vunpack.c.l.b16 %v2177
    %v2481 = vunpack.c.h.b16 %v2177
    %v2482 = vunpack.c.l.b16 %v2178
    %v2483 = vunpack.c.h.b16 %v2178
    %v2484 = vunpack.c.l.b16 %v2179
    %v2485 = vunpack.c.h.b16 %v2179
    %v2486 = vunpack.c.l.b16 %v2180
    %v2487 = vunpack.c.h.b16 %v2180
    %v2488 = vunpack.c.l.b16 %v2181
    %v2489 = vunpack.c.h.b16 %v2181
    %v2490 = vunpack.c.l.b16 %v2182
    %v2491 = vunpack.c.h.b16 %v2182
    %v2492 = vunpack.c.l.b16 %v2183
    %v2493 = vunpack.c.h.b16 %v2183
    %v2494 = vunpack.c.l.b16 %v2184
    %v2495 = vunpack.c.h.b16 %v2184
    %v2496 = vunpack.c.l.b16 %v2185
    %v2497 = vunpack.c.h.b16 %v2185
    %v2498 = vunpack.c.l.b16 %v2186
    %v2499 = vunpack.c.h.b16 %v2186
    %v2500 = vunpack.c.l.b16 %v2187
    %v2501 = vunpack.c.h.b16 %v2187
    %v2502 = vunpack.c.l.b16 %v2188
    %v2503 = vunpack.c.h.b16 %v2188
    %v2504 = vunpack.c.l.b16 %v2189
    %v2505 = vunpack.c.h.b16 %v2189
    %v2506 = vunpack.c.l.b16 %v2190
    %v2507 = vunpack.c.h.b16 %v2190
    %v2508 = vunpack.c.l.b16 %v2191
    %v2509 = vunpack.c.h.b16 %v2191
    %v2510 = vunpack.c.l.b16 %v2192
    %v2511 = vunpack.c.h.b16 %v2192
    %v2512 = vunpack.c.l.b16 %v2193
    %v2513 = vunpack.c.h.b16 %v2193
    %v2514 = vunpack.c.l.b16 %v2194
    %v2515 = vunpack.c.h.b16 %v2194
    %v2516 = vunpack.c.l.b16 %v2195
    %v2517 = vunpack.c.h.b16 %v2195
    %v2518 = vunpack.c.l.b16 %v2196
    %v2519 = vunpack.c.h.b16 %v2196
    %v2520 = vunpack.c.l.b16 %v2197
    %v2521 = vunpack.c.h.b16 %v2197
    %v2522 = vunpack.c.l.b16 %v2198
    %v2523 = vunpack.c.h.b16 %v2198
    %v2524 = vunpack.c.l.b16 %v2199
    %v2525 = vunpack.c.h.b16 %v2199
    %v2526 = vunpack.c.l.b16 %v2200
    %v2527 = vunpack.c.h.b16 %v2200
    %v2528 = vunpack.c.l.b16 %v2201
    %v2529 = vunpack.c.h.b16 %v2201
    %v2530 = vunpack.c.l.b16 %v2202
    %v2531 = vunpack.c.h.b16 %v2202
    %v2532 = vunpack.c.l.b16 %v2203
    %v2533 = vunpack.c.h.b16 %v2203
    %v2534 = vunpack.c.l.b16 %v2204
    %v2535 = vunpack.c.h.b16 %v2204
    %v2536 = vunpack.c.l.b16 %v2205
    %v2537 = vunpack.c.h.b16 %v2205
    %v2538 = vunpack.c.l.b16 %v2206
    %v2539 = vunpack.c.h.b16 %v2206
    %v2540 = vunpack.c.l.b16 %v2207
    %v2541 = vunpack.c.h.b16 %v2207
    %v2542 = vunpack.c.l.b16 %v2208
    %v2543 = vunpack.c.h.b16 %v2208
    %v2544 = vunpack.c.l.b16 %v2209
    %v2545 = vunpack.c.h.b16 %v2209
    %v2546 = vunpack.c.l.b16 %v2210
    %v2547 = vunpack.c.h.b16 %v2210
    %v2548 = vunpack.c.l.b16 %v2211
    %v2549 = vunpack.c.h.b16 %v2211
    %v2550 = vunpack.c.l.b16 %v2212
    %v2551 = vunpack.c.h.b16 %v2212
    %v2552 = vunpack.c.l.b16 %v2213
    %v2553 = vunpack.c.h.b16 %v2213
    %v2554 = vunpack.c.l.b16 %v2214
    %v2555 = vunpack.c.h.b16 %v2214
    %v2556 = vunpack.c.l.b16 %v2215
    %v2557 = vunpack.c.h.b16 %v2215
    %v2558 = vunpack.c.l.b16 %v2216
    %v2559 = vunpack.c.h.b16 %v2216
    %v2560 = vunpack.c.l.b16 %v2217
    %v2561 = vunpack.c.h.b16 %v2217
    %v2562 = vunpack.c.l.b16 %v2218
    %v2563 = vunpack.c.h.b16 %v2218
    %v2564 = vunpack.c.l.b16 %v2219
    %v2565 = vunpack.c.h.b16 %v2219
    %v2566 = vunpack.c.l.b16 %v2220
    %v2567 = vunpack.c.h.b16 %v2220
    %v2568 = vunpack.c.l.b16 %v2221
    %v2569 = vunpack.c.h.b16 %v2221
    %v2570 = vunpack.c.l.b16 %v2222
    %v2571 = vunpack.c.h.b16 %v2222
    %v2572 = vunpack.c.l.b16 %v2223
    %v2573 = vunpack.c.h.b16 %v2223
    %v2574 = vunpack.c.l.b16 %v2224
    %v2575 = vunpack.c.h.b16 %v2224
    %v2576 = vunpack.c.l.b16 %v2225
    %v2577 = vunpack.c.h.b16 %v2225
    %v2578 = vunpack.c.l.b16 %v2226
    %v2579 = vunpack.c.h.b16 %v2226
    %v2580 = vunpack.c.l.b16 %v2227
    %v2581 = vunpack.c.h.b16 %v2227
    %v2582 = vunpack.c.l.b16 %v2228
    %v2583 = vunpack.c.h.b16 %v2228
    %v2584 = vunpack.c.l.b16 %v2229
    %v2585 = vunpack.c.h.b16 %v2229
    %v2586 = vunpack.c.l.b16 %v2230
    %v2587 = vunpack.c.h.b16 %v2230
    %v2588 = vunpack.c.l.b16 %v2231
    %v2589 = vunpack.c.h.b16 %v2231
    %v2590 = vunpack.c.l.b16 %v2232
    %v2591 = vunpack.c.h.b16 %v2232
    %v2592 = vunpack.c.l.b16 %v2233
    %v2593 = vunpack.c.h.b16 %v2233
    %v2594 = vunpack.c.l.b16 %v2234
    %v2595 = vunpack.c.h.b16 %v2234
    %v2596 = vunpack.c.l.b16 %v2235
    %v2597 = vunpack.c.h.b16 %v2235
    %v2598 = vunpack.c.l.b16 %v2236
    %v2599 = vunpack.c.h.b16 %v2236
    %v2600 = vunpack.c.l.b16 %v2237
    %v2601 = vunpack.c.h.b16 %v2237
    %v2602 = vunpack.c.l.b16 %v2238
    %v2603 = vunpack.c.h.b16 %v2238
    %v2604 = vunpack.c.l.b16 %v2239
    %v2605 = vunpack.c.h.b16 %v2239
    %v2606 = vunpack.c.l.b16 %v2240
    %v2607 = vunpack.c.h.b16 %v2240
    %v2608 = vunpack.c.l.b16 %v2241
    %v2609 = vunpack.c.h.b16 %v2241
    %v2610 = vunpack.c.l.b16 %v2242
    %v2611 = vunpack.c.h.b16 %v2242
    %v2612 = vunpack.c.l.b16 %v2243
    %v2613 = vunpack.c.h.b16 %v2243
    %v2614 = vunpack.c.l.b16 %v2244
    %v2615 = vunpack.c.h.b16 %v2244
    %v2616 = vunpack.c.l.b16 %v2245
    %v2617 = vunpack.c.h.b16 %v2245
    %v2618 = vunpack.c.l.b16 %v2246
    %v2619 = vunpack.c.h.b16 %v2246
    %v2620 = vunpack.c.l.b16 %v2247
    %v2621 = vunpack.c.h.b16 %v2247
    %v2622 = vunpack.c.l.b16 %v2248
    %v2623 = vunpack.c.h.b16 %v2248
    %v2624 = vunpack.c.l.b16 %v2249
    %v2625 = vunpack.c.h.b16 %v2249
    %v2626 = vunpack.c.l.b16 %v2250
    %v2627 = vunpack.c.h.b16 %v2250
    %v2628 = vunpack.c.l.b16 %v2251
    %v2629 = vunpack.c.h.b16 %v2251
    %v2630 = vunpack.c.l.b16 %v2252
    %v2631 = vunpack.c.h.b16 %v2252
    %v2632 = vunpack.c.l.b16 %v2253
    %v2633 = vunpack.c.h.b16 %v2253
    %v2634 = vunpack.c.l.b16 %v2254
    %v2635 = vunpack.c.h.b16 %v2254
    %v2636 = vunpack.c.l.b16 %v2255
    %v2637 = vunpack.c.h.b16 %v2255
    %v2638 = vunpack.c.l.b16 %v2256
    %v2639 = vunpack.c.h.b16 %v2256
    %v2640 = vunpack.c.l.b16 %v2257
    %v2641 = vunpack.c.h.b16 %v2257
    %v2642 = vunpack.c.l.b16 %v2258
    %v2643 = vunpack.c.h.b16 %v2258
    %v2644 = vunpack.c.l.b16 %v2259
    %v2645 = vunpack.c.h.b16 %v2259
    %v2646 = vunpack.c.l.b16 %v2260
    %v2647 = vunpack.c.h.b16 %v2260
    %v2648 = vunpack.c.l.b16 %v2261
    %v2649 = vunpack.c.h.b16 %v2261
    %v2650 = vunpack.c.l.b16 %v2262
    %v2651 = vunpack.c.h.b16 %v2262
    %v2652 = vunpack.c.l.b16 %v2263
    %v2653 = vunpack.c.h.b16 %v2263
    %v2654 = vunpack.c.l.b16 %v2264
    %v2655 = vunpack.c.h.b16 %v2264
    %v2656 = vunpack.c.l.b16 %v2265
    %v2657 = vunpack.c.h.b16 %v2265
    %v2658 = vunpack.c.l.b16 %v2266
    %v2659 = vunpack.c.h.b16 %v2266
    %v2660 = vunpack.c.l.b16 %v2267
    %v2661 = vunpack.c.h.b16 %v2267
    %v2662 = vunpack.c.l.b16 %v2268
    %v2663 = vunpack.c.h.b16 %v2268
    %v2664 = vunpack.c.l.b16 %v2269
    %v2665 = vunpack.c.h.b16 %v2269
    %v2666 = vunpack.c.l.b16 %v2270
    %v2667 = vunpack.c.h.b16 %v2270
    %v2668 = vunpack.c.l.b16 %v2271
    %v2669 = vunpack.c.h.b16 %v2271
    %v2670 = vunpack.c.l.b16 %v2272
    %v2671 = vunpack.c.h.b16 %v2272
    %v2672 = vunpack.c.l.b16 %v2273
    %v2673 = vunpack.c.h.b16 %v2273
    %v2674 = vunpack.c.l.b16 %v2274
    %v2675 = vunpack.c.h.b16 %v2274
    %v2676 = vunpack.c.l.b16 %v2275
    %v2677 = vunpack.c.h.b16 %v2275
    %v2678 = vunpack.c.l.b16 %v2276
    %v2679 = vunpack.c.h.b16 %v2276
    %v2680 = vunpack.c.l.b16 %v2277
    %v2681 = vunpack.c.h.b16 %v2277
    %v2682 = vunpack.c.l.b16 %v2278
    %v2683 = vunpack.c.h.b16 %v2278
    %v2684 = vunpack.c.l.b16 %v2279
    %v2685 = vunpack.c.h.b16 %v2279
    %v2686 = vunpack.c.l.b16 %v2280
    %v2687 = vunpack.c.h.b16 %v2280
    %v2688 = vunpack.c.l.b16 %v2281
    %v2689 = vunpack.c.h.b16 %v2281
    %v2690 = vunpack.c.l.b16 %v2282
    %v2691 = vunpack.c.h.b16 %v2282
    %v2692 = vunpack.c.l.b16 %v2283
    %v2693 = vunpack.c.h.b16 %v2283
    %v2694 = vunpack.c.l.b16 %v2284
    %v2695 = vunpack.c.h.b16 %v2284
    %v2696 = vunpack.c.l.b16 %v2285
    %v2697 = vunpack.c.h.b16 %v2285
    %v2698 = vunpack.c.l.b16 %v2286
    %v2699 = vunpack.c.h.b16 %v2286
    %v2700 = vunpack.c.l.b16 %v2287
    %v2701 = vunpack.c.h.b16 %v2287
    %v2702 = vunpack.c.l.b16 %v2288
    %v2703 = vunpack.c.h.b16 %v2288
    %v2704 = vunpack.c.l.b16 %v2289
    %v2705 = vunpack.c.h.b16 %v2289
    %v2706 = vunpack.c.l.b16 %v2290
    %v2707 = vunpack.c.h.b16 %v2290
    %v2708 = vunpack.c.l.b16 %v2291
    %v2709 = vunpack.c.h.b16 %v2291
    %v2710 = vunpack.c.l.b16 %v2292
    %v2711 = vunpack.c.h.b16 %v2292
    %v2712 = vunpack.c.l.b16 %v2293
    %v2713 = vunpack.c.h.b16 %v2293
    %v2714 = vunpack.c.l.b16 %v2294
    %v2715 = vunpack.c.h.b16 %v2294
    %v2716 = vunpack.c.l.b16 %v2295
    %v2717 = vunpack.c.h.b16 %v2295
    %v2718 = vunpack.c.l.b16 %v2296
    %v2719 = vunpack.c.h.b16 %v2296
    %v2720 = vunpack.c.l.b16 %v2297
    %v2721 = vunpack.c.h.b16 %v2297
    %v2722 = vunpack.c.l.b16 %v2298
    %v2723 = vunpack.c.h.b16 %v2298
    %v2724 = vunpack.c.l.b16 %v2299
    %v2725 = vunpack.c.h.b16 %v2299
    %v2726 = vunpack.c.l.b16 %v2300
    %v2727 = vunpack.c.h.b16 %v2300
    %v2728 = vunpack.c.l.b16 %v2301
    %v2729 = vunpack.c.h.b16 %v2301
    %v2730 = vunpack.c.l.b16 %v2302
    %v2731 = vunpack.c.h.b16 %v2302
    %v2732 = vunpack.c.l.b16 %v2303
    %v2733 = vunpack.c.h.b16 %v2303
    %v2734 = vunpack.c.l.b16 %v2304
    %v2735 = vunpack.c.h.b16 %v2304
    %v2736 = vunpack.c.l.b16 %v2305
    %v2737 = vunpack.c.h.b16 %v2305
    %v2738 = vpack.c.b16 %v2452, %v2450
    %v2739 = vpack.c.b16 %v2453, %v2451
    %v2740 = vpack.c.b16 %v2456, %v2454
    %v2741 = vpack.c.b16 %v2457, %v2455
    %v2742 = vpack.c.b16 %v2460, %v2458
    %v2743 = vpack.c.b16 %v2461, %v2459
    %v2744 = vpack.c.b16 %v2464, %v2462
    %v2745 = vpack.c.b16 %v2465, %v2463
    %v2746 = vpack.c.b16 %v2468, %v2466
    %v2747 = vpack.c.b16 %v2469, %v2467
    %v2748 = vpack.c.b16 %v2472, %v2470
    %v2749 = vpack.c.b16 %v2473, %v2471
    %v2750 = vpack.c.b16 %v2476, %v2474
    %v2751 = vpack.c.b16 %v2477, %v2475
    %v2752 = vpack.c.b16 %v2480, %v2478
    %v2753 = vpack.c.b16 %v2481, %v2479
    %v2754 = vpack.c.b16 %v2484, %v2482
    %v2755 = vpack.c.b16 %v2485, %v2483
    %v2756 = vpack.c.b16 %v2488, %v2486
    %v2757 = vpack.c.b16 %v2489, %v2487
    %v2758 = vpack.c.b16 %v2492, %v2490
    %v2759 = vpack.c.b16 %v2493, %v2491
    %v2760 = vpack.c.b16 %v2496, %v2494
    %v2761 = vpack.c.b16 %v2497, %v2495
    %v2762 = vpack.c.b16 %v2500, %v2498
    %v2763 = vpack.c.b16 %v2501, %v2499
    %v2764 = vpack.c.b16 %v2504, %v2502
    %v2765 = vpack.c.b16 %v2505, %v2503
    %v2766 = vpack.c.b16 %v2508, %v2506
    %v2767 = vpack.c.b16 %v2509, %v2507
    %v2768 = vpack.c.b16 %v2512, %v2510
    %v2769 = vpack.c.b16 %v2513, %v2511
    %v2770 = vpack.c.b16 %v2516, %v2514
    %v2771 = vpack.c.b16 %v2517, %v2515
    %v2772 = vpack.c.b16 %v2520, %v2518
    %v2773 = vpack.c.b16 %v2521, %v2519
    %v2774 = vpack.c.b16 %v2524, %v2522
    %v2775 = vpack.c.b16 %v2525, %v2523
    %v2776 = vpack.c.b16 %v2528, %v2526
    %v2777 = vpack.c.b16 %v2529, %v2527
    %v2778 = vpack.c.b16 %v2532, %v2530
    %v2779 = vpack.c.b16 %v2533, %v2531
    %v2780 = vpack.c.b16 %v2536, %v2534
    %v2781 = vpack.c.b16 %v2537, %v2535
    %v2782 = vpack.c.b16 %v2540, %v2538
    %v2783 = vpack.c.b16 %v2541, %v2539
    %v2784 = vpack.c.b16 %v2544, %v2542
    %v2785 = vpack.c.b16 %v2545, %v2543
    %v2786 = vpack.c.b16 %v2548, %v2546
    %v2787 = vpack.c.b16 %v2549, %v2547
    %v2788 = vpack.c.b16 %v2552, %v2550
    %v2789 = vpack.c.b16 %v2553, %v2551
    %v2790 = vpack.c.b16 %v2556, %v2554
    %v2791 = vpack.c.b16 %v2557, %v2555
    %v2792 = vpack.c.b16 %v2560, %v2558
    %v2793 = vpack.c.b16 %v2561, %v2559
    %v2794 = vpack.c.b16 %v2564, %v2562
    %v2795 = vpack.c.b16 %v2565, %v2563
    %v2796 = vpack.c.b16 %v2568, %v2566
    %v2797 = vpack.c.b16 %v2569, %v2567
    %v2798 = vpack.c.b16 %v2572, %v2570
    %v2799 = vpack.c.b16 %v2573, %v2571
    %v2800 = vpack.c.b16 %v2576, %v2574
    %v2801 = vpack.c.b16 %v2577, %v2575
    %v2802 = vpack.c.b16 %v2580, %v2578
    %v2803 = vpack.c.b16 %v2581, %v2579
    %v2804 = vpack.c.b16 %v2584, %v2582
    %v2805 = vpack.c.b16 %v2585, %v2583
    %v2806 = vpack.c.b16 %v2588, %v2586
    %v2807 = vpack.c.b16 %v2589, %v2587
    %v2808 = vpack.c.b16 %v2592, %v2590
    %v2809 = vpack.c.b16 %v2593, %v2591
    %v2810 = vpack.c.b16 %v2596, %v2594
    %v2811 = vpack.c.b16 %v2597, %v2595
    %v2812 = vpack.c.b16 %v2600, %v2598
    %v2813 = vpack.c.b16 %v2601, %v2599
    %v2814 = vpack.c.b16 %v2604, %v2602
    %v2815 = vpack.c.b16 %v2605, %v2603
    %v2816 = vpack.c.b16 %v2608, %v2606
    %v2817 = vpack.c.b16 %v2609, %v2607
    %v2818 = vpack.c.b16 %v2612, %v2610
    %v2819 = vpack.c.b16 %v2613, %v2611
    %v2820 = vpack.c.b16 %v2616, %v2614
    %v2821 = vpack.c.b16 %v2617, %v2615
    %v2822 = vpack.c.b16 %v2620, %v2618
    %v2823 = vpack.c.b16 %v2621, %v2619
    %v2824 = vpack.c.b16 %v2624, %v2622
    %v2825 = vpack.c.b16 %v2625, %v2623
    %v2826 = vpack.c.b16 %v2628, %v2626
    %v2827 = vpack.c.b16 %v2629, %v2627
    %v2828 = vpack.c.b16 %v2632, %v2630
    %v2829 = vpack.c.b16 %v2633, %v2631
    %v2830 = vpack.c.b16 %v2636, %v2634
    %v2831 = vpack.c.b16 %v2637, %v2635
    %v2832 = vpack.c.b16 %v2640, %v2638
    %v2833 = vpack.c.b16 %v2641, %v2639
    %v2834 = vpack.c.b16 %v2644, %v2642
    %v2835 = vpack.c.b16 %v2645, %v2643
    %v2836 = vpack.c.b16 %v2648, %v2646
    %v2837 = vpack.c.b16 %v2649, %v2647
    %v2838 = vpack.c.b16 %v2652, %v2650
    %v2839 = vpack.c.b16 %v2653, %v2651
    %v2840 = vpack.c.b16 %v2656, %v2654
    %v2841 = vpack.c.b16 %v2657, %v2655
    %v2842 = vpack.c.b16 %v2660, %v2658
    %v2843 = vpack.c.b16 %v2661, %v2659
    %v2844 = vpack.c.b16 %v2664, %v2662
    %v2845 = vpack.c.b16 %v2665, %v2663
    %v2846 = vpack.c.b16 %v2668, %v2666
    %v2847 = vpack.c.b16 %v2669, %v2667
    %v2848 = vpack.c.b16 %v2672, %v2670
    %v2849 = vpack.c.b16 %v2673, %v2671
    %v2850 = vpack.c.b16 %v2676, %v2674
    %v2851 = vpack.c.b16 %v2677, %v2675
    %v2852 = vpack.c.b16 %v2680, %v2678
    %v2853 = vpack.c.b16 %v2681, %v2679
    %v2854 = vpack.c.b16 %v2684, %v2682
    %v2855 = vpack.c.b16 %v2685, %v2683
    %v2856 = vpack.c.b16 %v2688, %v2686
    %v2857 = vpack.c.b16 %v2689, %v2687
    %v2858 = vpack.c.b16 %v2692, %v2690
    %v2859 = vpack.c.b16 %v2693, %v2691
    %v2860 = vpack.c.b16 %v2696, %v2694
    %v2861 = vpack.c.b16 %v2697, %v2695
    %v2862 = vpack.c.b16 %v2700, %v2698
    %v2863 = vpack.c.b16 %v2701, %v2699
    %v2864 = vpack.c.b16 %v2704, %v2702
    %v2865 = vpack.c.b16 %v2705, %v2703
    %v2866 = vpack.c.b16 %v2708, %v2706
    %v2867 = vpack.c.b16 %v2709, %v2707
    %v2868 = vpack.c.b16 %v2712, %v2710
    %v2869 = vpack.c.b16 %v2713, %v2711
    %v2870 = vpack.c.b16 %v2716, %v2714
    %v2871 = vpack.c.b16 %v2717, %v2715
    %v2872 = vpack.c.b16 %v2720, %v2718
    %v2873 = vpack.c.b16 %v2721, %v2719
    %v2874 = vpack.c.b16 %v2724, %v2722
    %v2875 = vpack.c.b16 %v2725, %v2723
    %v2876 = vpack.c.b16 %v2728, %v2726
    %v2877 = vpack.c.b16 %v2729, %v2727
    %v2878 = vpack.c.b16 %v2732, %v2730
    %v2879 = vpack.c.b16 %v2733, %v2731
    %v2880 = vpack.c.b16 %v2736, %v2734
    %v2881 = vpack.c.b16 %v2737, %v2735
    %3026 = vmatpush.bf16.msra.mxu0 %v2752
    %3027 = vmatpush.bf16.msra.mxu0 %v2750
    %3028 = vmatpush.bf16.msra.mxu0 %v2748
    %3029 = vmatpush.bf16.msra.mxu0 %v2746
    %3030 = vmatpush.bf16.msra.mxu0 %v2744
    %3031 = vmatpush.bf16.msra.mxu0 %v2742
    %3032 = vmatpush.bf16.msra.mxu0 %v2740
    %3033 = vmatpush.bf16.msra.mxu0 %v2738
    %3034 = vmatmul.bf16.gmra.mxu0 %v1689
    %v3035 = vpop.f32.mrf.mxu0
    %v3036 = vadd.f32 0.0, %v3035
    %v3037 = vpop.f32.mrf.mxu0
    %v3038 = vadd.f32 0.0, %v3037
    %3039 = vmatmul.bf16.gmra.mxu0 %v1692
    %v3040 = vpop.f32.mrf.mxu0
    %v3041 = vadd.f32 0.0, %v3040
    %v3042 = vpop.f32.mrf.mxu0
    %v3043 = vadd.f32 0.0, %v3042
    %3044 = vmatmul.bf16.gmra.mxu0 %v1695
    %v3045 = vpop.f32.mrf.mxu0
    %v3046 = vadd.f32 0.0, %v3045
    %v3047 = vpop.f32.mrf.mxu0
    %3048 = vmatmul.bf16.gmra.mxu0 %v1698
    %v3049 = vpop.f32.mrf.mxu0
    %v3050 = vadd.f32 0.0, %v3049
    %v3051 = vpop.f32.mrf.mxu0
    %v3052 = vadd.f32 0.0, %v3051
    %3053 = vmatmul.bf16.gmra.mxu0 %v1701
    %v3054 = vpop.f32.mrf.mxu0
    %v3055 = vadd.f32 0.0, %v3054
    %v3056 = vpop.f32.mrf.mxu0
    %v3057 = vadd.f32 0.0, %v3056
    %3058 = vmatmul.bf16.gmra.mxu0 %v1704
    %v3059 = vpop.f32.mrf.mxu0
    %v3060 = vadd.f32 0.0, %v3059
    %v3061 = vpop.f32.mrf.mxu0
    %3062 = vdwg.mxu0
    %3063 = vmatpush.bf16.msra.mxu0 %v2768
    %3064 = vmatpush.bf16.msra.mxu0 %v2766
    %3065 = vmatpush.bf16.msra.mxu0 %v2764
    %3066 = vmatpush.bf16.msra.mxu0 %v2762
    %3067 = vmatpush.bf16.msra.mxu0 %v2760
    %3068 = vmatpush.bf16.msra.mxu0 %v2758
    %3069 = vmatpush.bf16.msra.mxu0 %v2756
    %3070 = vmatpush.bf16.msra.mxu0 %v2754
    %3071 = vmatmul.bf16.gmra.mxu0 %v1737
    %v3072 = vpop.f32.mrf.mxu0
    %v3073 = vadd.f32 %v3036, %v3072
    %v3074 = vpop.f32.mrf.mxu0
    %v3075 = vadd.f32 %v3038, %v3074
    %3076 = vmatmul.bf16.gmra.mxu0 %v1740
    %v3077 = vpop.f32.mrf.mxu0
    %v3078 = vadd.f32 %v3041, %v3077
    %v3079 = vpop.f32.mrf.mxu0
    %v3080 = vadd.f32 %v3043, %v3079
    %3081 = vmatmul.bf16.gmra.mxu0 %v1743
    %v3082 = vpop.f32.mrf.mxu0
    %v3083 = vadd.f32 %v3046, %v3082
    %v3084 = vpop.f32.mrf.mxu0
    %3085 = vmatmul.bf16.gmra.mxu0 %v1746
    %v3086 = vpop.f32.mrf.mxu0
    %v3087 = vadd.f32 %v3050, %v3086
    %v3088 = vpop.f32.mrf.mxu0
    %v3089 = vadd.f32 %v3052, %v3088
    %3090 = vmatmul.bf16.gmra.mxu0 %v1749
    %v3091 = vpop.f32.mrf.mxu0
    %v3092 = vadd.f32 %v3055, %v3091
    %v3093 = vpop.f32.mrf.mxu0
    %v3094 = vadd.f32 %v3057, %v3093
    %3095 = vmatmul.bf16.gmra.mxu0 %v1752
    %v3096 = vpop.f32.mrf.mxu0
    %v3097 = vadd.f32 %v3060, %v3096
    %v3098 = vpop.f32.mrf.mxu0
    %3099 = vdwg.mxu0
    %3100 = vmatpush.bf16.msra.mxu0 %v2784
    %3101 = vmatpush.bf16.msra.mxu0 %v2782
    %3102 = vmatpush.bf16.msra.mxu0 %v2780
    %3103 = vmatpush.bf16.msra.mxu0 %v2778
    %3104 = vmatpush.bf16.msra.mxu0 %v2776
    %3105 = vmatpush.bf16.msra.mxu0 %v2774
    %3106 = vmatpush.bf16.msra.mxu0 %v2772
    %3107 = vmatpush.bf16.msra.mxu0 %v2770
    %3108 = vmatmul.bf16.gmra.mxu0 %v1773
    %v3109 = vpop.f32.mrf.mxu0
    %v3110 = vadd.f32 %v3073, %v3109
    %v3111 = vpop.f32.mrf.mxu0
    %v3112 = vadd.f32 %v3075, %v3111
    %3113 = vmatmul.bf16.gmra.mxu0 %v1776
    %v3114 = vpop.f32.mrf.mxu0
    %v3115 = vadd.f32 %v3078, %v3114
    %v3116 = vpop.f32.mrf.mxu0
    %v3117 = vadd.f32 %v3080, %v3116
    %3118 = vmatmul.bf16.gmra.mxu0 %v1779
    %v3119 = vpop.f32.mrf.mxu0
    %v3120 = vadd.f32 %v3083, %v3119
    %v3121 = vpop.f32.mrf.mxu0
    %3122 = vmatmul.bf16.gmra.mxu0 %v1782
    %v3123 = vpop.f32.mrf.mxu0
    %v3124 = vadd.f32 %v3087, %v3123
    %v3125 = vpop.f32.mrf.mxu0
    %v3126 = vadd.f32 %v3089, %v3125
    %3127 = vmatmul.bf16.gmra.mxu0 %v1785
    %v3128 = vpop.f32.mrf.mxu0
    %v3129 = vadd.f32 %v3092, %v3128
    %v3130 = vpop.f32.mrf.mxu0
    %v3131 = vadd.f32 %v3094, %v3130
    %3132 = vmatmul.bf16.gmra.mxu0 %v1788
    %v3133 = vpop.f32.mrf.mxu0
    %v3134 = vadd.f32 %v3097, %v3133
    %v3135 = vpop.f32.mrf.mxu0
    %3136 = vdwg.mxu0
    %3137 = vmatpush.bf16.msra.mxu0 %v2800
    %3138 = vmatpush.bf16.msra.mxu0 %v2798
    %3139 = vmatpush.bf16.msra.mxu0 %v2796
    %3140 = vmatpush.bf16.msra.mxu0 %v2794
    %3141 = vmatpush.bf16.msra.mxu0 %v2792
    %3142 = vmatpush.bf16.msra.mxu0 %v2790
    %3143 = vmatpush.bf16.msra.mxu0 %v2788
    %3144 = vmatpush.bf16.msra.mxu0 %v2786
    %3145 = vmatmul.bf16.gmra.mxu0 %v1802
    %v3146 = vpop.f32.mrf.mxu0
    %v3147 = vadd.f32 %v3110, %v3146
    %v3148 = vpop.f32.mrf.mxu0
    %v3149 = vadd.f32 %v3112, %v3148
    %3150 = vmatmul.bf16.gmra.mxu0 %v1804
    %v3151 = vpop.f32.mrf.mxu0
    %v3152 = vadd.f32 %v3115, %v3151
    %v3153 = vpop.f32.mrf.mxu0
    %v3154 = vadd.f32 %v3117, %v3153
    %3155 = vmatmul.bf16.gmra.mxu0 %v1806
    %v3156 = vpop.f32.mrf.mxu0
    %v3157 = vadd.f32 %v3120, %v3156
    %v3158 = vpop.f32.mrf.mxu0
    %3159 = vmatmul.bf16.gmra.mxu0 %v1808
    %v3160 = vpop.f32.mrf.mxu0
    %v3161 = vadd.f32 %v3124, %v3160
    %v3162 = vpop.f32.mrf.mxu0
    %v3163 = vadd.f32 %v3126, %v3162
    %3164 = vmatmul.bf16.gmra.mxu0 %v1810
    %v3165 = vpop.f32.mrf.mxu0
    %v3166 = vadd.f32 %v3129, %v3165
    %v3167 = vpop.f32.mrf.mxu0
    %v3168 = vadd.f32 %v3131, %v3167
    %3169 = vmatmul.bf16.gmra.mxu0 %v1812
    %v3170 = vpop.f32.mrf.mxu0
    %v3171 = vadd.f32 %v3134, %v3170
    %v3172 = vpop.f32.mrf.mxu0
    %3173 = vdwg.mxu0
    %3174 = vmatpush.bf16.msra.mxu0 %v2816
    %3175 = vmatpush.bf16.msra.mxu0 %v2814
    %3176 = vmatpush.bf16.msra.mxu0 %v2812
    %3177 = vmatpush.bf16.msra.mxu0 %v2810
    %3178 = vmatpush.bf16.msra.mxu0 %v2808
    %3179 = vmatpush.bf16.msra.mxu0 %v2806
    %3180 = vmatpush.bf16.msra.mxu0 %v2804
    %3181 = vmatpush.bf16.msra.mxu0 %v2802
    %3182 = vmatmul.bf16.gmra.mxu0 %v1971
    %v3183 = vpop.f32.mrf.mxu0
    %v3184 = vadd.f32 %v3147, %v3183
    %v3185 = vpop.f32.mrf.mxu0
    %v3186 = vadd.f32 %v3149, %v3185
    %3187 = vmatmul.bf16.gmra.mxu0 %v1974
    %v3188 = vpop.f32.mrf.mxu0
    %v3189 = vadd.f32 %v3152, %v3188
    %v3190 = vpop.f32.mrf.mxu0
    %v3191 = vadd.f32 %v3154, %v3190
    %3192 = vmatmul.bf16.gmra.mxu0 %v1977
    %v3193 = vpop.f32.mrf.mxu0
    %v3194 = vadd.f32 %v3157, %v3193
    %v3195 = vpop.f32.mrf.mxu0
    %3196 = vmatmul.bf16.gmra.mxu0 %v1980
    %v3197 = vpop.f32.mrf.mxu0
    %v3198 = vadd.f32 %v3161, %v3197
    %v3199 = vpop.f32.mrf.mxu0
    %v3200 = vadd.f32 %v3163, %v3199
    %3201 = vmatmul.bf16.gmra.mxu0 %v1983
    %v3202 = vpop.f32.mrf.mxu0
    %v3203 = vadd.f32 %v3166, %v3202
    %v3204 = vpop.f32.mrf.mxu0
    %v3205 = vadd.f32 %v3168, %v3204
    %3206 = vmatmul.bf16.gmra.mxu0 %v1986
    %v3207 = vpop.f32.mrf.mxu0
    %v3208 = vadd.f32 %v3171, %v3207
    %v3209 = vpop.f32.mrf.mxu0
    %3210 = vdwg.mxu0
    %3211 = vmatpush.bf16.msra.mxu0 %v2832
    %3212 = vmatpush.bf16.msra.mxu0 %v2830
    %3213 = vmatpush.bf16.msra.mxu0 %v2828
    %3214 = vmatpush.bf16.msra.mxu0 %v2826
    %3215 = vmatpush.bf16.msra.mxu0 %v2824
    %3216 = vmatpush.bf16.msra.mxu0 %v2822
    %3217 = vmatpush.bf16.msra.mxu0 %v2820
    %3218 = vmatpush.bf16.msra.mxu0 %v2818
    %3219 = vmatmul.bf16.gmra.mxu0 %v2019
    %v3220 = vpop.f32.mrf.mxu0
    %v3221 = vadd.f32 %v3184, %v3220
    %v3222 = vpop.f32.mrf.mxu0
    %v3223 = vadd.f32 %v3186, %v3222
    %3224 = vmatmul.bf16.gmra.mxu0 %v2022
    %v3225 = vpop.f32.mrf.mxu0
    %v3226 = vadd.f32 %v3189, %v3225
    %v3227 = vpop.f32.mrf.mxu0
    %v3228 = vadd.f32 %v3191, %v3227
    %3229 = vmatmul.bf16.gmra.mxu0 %v2025
    %v3230 = vpop.f32.mrf.mxu0
    %v3231 = vadd.f32 %v3194, %v3230
    %v3232 = vpop.f32.mrf.mxu0
    %3233 = vmatmul.bf16.gmra.mxu0 %v2028
    %v3234 = vpop.f32.mrf.mxu0
    %v3235 = vadd.f32 %v3198, %v3234
    %v3236 = vpop.f32.mrf.mxu0
    %v3237 = vadd.f32 %v3200, %v3236
    %3238 = vmatmul.bf16.gmra.mxu0 %v2031
    %v3239 = vpop.f32.mrf.mxu0
    %v3240 = vadd.f32 %v3203, %v3239
    %v3241 = vpop.f32.mrf.mxu0
    %v3242 = vadd.f32 %v3205, %v3241
    %3243 = vmatmul.bf16.gmra.mxu0 %v2034
    %v3244 = vpop.f32.mrf.mxu0
    %v3245 = vadd.f32 %v3208, %v3244
    %v3246 = vpop.f32.mrf.mxu0
    %3247 = vdwg.mxu0
    %3248 = vmatpush.bf16.msra.mxu0 %v2848
    %3249 = vmatpush.bf16.msra.mxu0 %v2846
    %3250 = vmatpush.bf16.msra.mxu0 %v2844
    %3251 = vmatpush.bf16.msra.mxu0 %v2842
    %3252 = vmatpush.bf16.msra.mxu0 %v2840
    %3253 = vmatpush.bf16.msra.mxu0 %v2838
    %3254 = vmatpush.bf16.msra.mxu0 %v2836
    %3255 = vmatpush.bf16.msra.mxu0 %v2834
    %3256 = vmatmul.bf16.gmra.mxu0 %v2066
    %v3257 = vpop.f32.mrf.mxu0
    %v3258 = vadd.f32 %v3221, %v3257
    %v3259 = vpop.f32.mrf.mxu0
    %v3260 = vadd.f32 %v3223, %v3259
    %3261 = vmatmul.bf16.gmra.mxu0 %v2068
    %v3262 = vpop.f32.mrf.mxu0
    %v3263 = vadd.f32 %v3226, %v3262
    %v3264 = vpop.f32.mrf.mxu0
    %v3265 = vadd.f32 %v3228, %v3264
    %3266 = vmatmul.bf16.gmra.mxu0 %v2070
    %v3267 = vpop.f32.mrf.mxu0
    %v3268 = vadd.f32 %v3231, %v3267
    %v3269 = vpop.f32.mrf.mxu0
    %3270 = vmatmul.bf16.gmra.mxu0 %v2072
    %v3271 = vpop.f32.mrf.mxu0
    %v3272 = vadd.f32 %v3235, %v3271
    %v3273 = vpop.f32.mrf.mxu0
    %v3274 = vadd.f32 %v3237, %v3273
    %3275 = vmatmul.bf16.gmra.mxu0 %v2074
    %v3276 = vpop.f32.mrf.mxu0
    %v3277 = vadd.f32 %v3240, %v3276
    %v3278 = vpop.f32.mrf.mxu0
    %v3279 = vadd.f32 %v3242, %v3278
    %3280 = vmatmul.bf16.gmra.mxu0 %v2076
    %v3281 = vpop.f32.mrf.mxu0
    %v3282 = vadd.f32 %v3245, %v3281
    %v3283 = vpop.f32.mrf.mxu0
    %3284 = vdwg.mxu0
    %3285 = vmatpush.bf16.msra.mxu0 %v2864
    %3286 = vmatpush.bf16.msra.mxu0 %v2862
    %3287 = vmatpush.bf16.msra.mxu0 %v2860
    %3288 = vmatpush.bf16.msra.mxu0 %v2858
    %3289 = vmatpush.bf16.msra.mxu0 %v2856
    %3290 = vmatpush.bf16.msra.mxu0 %v2854
    %3291 = vmatpush.bf16.msra.mxu0 %v2852
    %3292 = vmatpush.bf16.msra.mxu0 %v2850
    %3293 = vmatmul.bf16.gmra.mxu0 %v2096
    %v3294 = vpop.f32.mrf.mxu0
    %v3295 = vadd.f32 %v3258, %v3294
    %v3296 = vpop.f32.mrf.mxu0
    %v3297 = vadd.f32 %v3260, %v3296
    %3298 = vmatmul.bf16.gmra.mxu0 %v2098
    %v3299 = vpop.f32.mrf.mxu0
    %v3300 = vadd.f32 %v3263, %v3299
    %v3301 = vpop.f32.mrf.mxu0
    %v3302 = vadd.f32 %v3265, %v3301
    %3303 = vmatmul.bf16.gmra.mxu0 %v2100
    %v3304 = vpop.f32.mrf.mxu0
    %v3305 = vadd.f32 %v3268, %v3304
    %v3306 = vpop.f32.mrf.mxu0
    %3307 = vmatmul.bf16.gmra.mxu0 %v2102
    %v3308 = vpop.f32.mrf.mxu0
    %v3309 = vadd.f32 %v3272, %v3308
    %v3310 = vpop.f32.mrf.mxu0
    %v3311 = vadd.f32 %v3274, %v3310
    %3312 = vmatmul.bf16.gmra.mxu0 %v2104
    %v3313 = vpop.f32.mrf.mxu0
    %v3314 = vadd.f32 %v3277, %v3313
    %v3315 = vpop.f32.mrf.mxu0
    %v3316 = vadd.f32 %v3279, %v3315
    %3317 = vmatmul.bf16.gmra.mxu0 %v2106
    %v3318 = vpop.f32.mrf.mxu0
    %v3319 = vadd.f32 %v3282, %v3318
    %v3320 = vpop.f32.mrf.mxu0
    %3321 = vdwg.mxu0
    %3322 = vmatpush.bf16.msra.mxu0 %v2880
    %3323 = vmatpush.bf16.msra.mxu0 %v2878
    %3324 = vmatpush.bf16.msra.mxu0 %v2876
    %3325 = vmatpush.bf16.msra.mxu0 %v2874
    %3326 = vmatpush.bf16.msra.mxu0 %v2872
    %3327 = vmatpush.bf16.msra.mxu0 %v2870
    %3328 = vmatpush.bf16.msra.mxu0 %v2868
    %3329 = vmatpush.bf16.msra.mxu0 %v2866
    %3330 = vmatmul.bf16.gmra.mxu0 %v2145
    %v3331 = vpop.f32.mrf.mxu0
    %v3332 = vadd.f32 %v3295, %v3331
    %v3333 = vpop.f32.mrf.mxu0
    %v3334 = vadd.f32 %v3297, %v3333
    %3335 = vmatmul.bf16.gmra.mxu0 %v2148
    %v3336 = vpop.f32.mrf.mxu0
    %v3337 = vadd.f32 %v3300, %v3336
    %v3338 = vpop.f32.mrf.mxu0
    %v3339 = vadd.f32 %v3302, %v3338
    %3340 = vmatmul.bf16.gmra.mxu0 %v2151
    %v3341 = vpop.f32.mrf.mxu0
    %v3342 = vadd.f32 %v3305, %v3341
    %v3343 = vpop.f32.mrf.mxu0
    %3344 = vmatmul.bf16.gmra.mxu0 %v2154
    %v3345 = vpop.f32.mrf.mxu0
    %v3346 = vadd.f32 %v3309, %v3345
    %v3347 = vpop.f32.mrf.mxu0
    %v3348 = vadd.f32 %v3311, %v3347
    %3349 = vmatmul.bf16.gmra.mxu0 %v2157
    %v3350 = vpop.f32.mrf.mxu0
    %v3351 = vadd.f32 %v3314, %v3350
    %v3352 = vpop.f32.mrf.mxu0
    %v3353 = vadd.f32 %v3316, %v3352
    %3354 = vmatmul.bf16.gmra.mxu0 %v2160
    %v3355 = vpop.f32.mrf.mxu0
    %v3356 = vadd.f32 %v3319, %v3355
    %v3357 = vpop.f32.mrf.mxu0
    %3358 = vdwg.mxu0
    %3359 = vmatpush.bf16.msra.mxu0 %v2753
    %3360 = vmatpush.bf16.msra.mxu0 %v2751
    %3361 = vmatpush.bf16.msra.mxu0 %v2749
    %3362 = vmatpush.bf16.msra.mxu0 %v2747
    %3363 = vmatpush.bf16.msra.mxu0 %v2745
    %3364 = vmatpush.bf16.msra.mxu0 %v2743
    %3365 = vmatpush.bf16.msra.mxu0 %v2741
    %3366 = vmatpush.bf16.msra.mxu0 %v2739
    %3367 = vmatmul.bf16.gmra.mxu0 %v1689
    %v3368 = vpop.f32.mrf.mxu0
    %v3369 = vadd.f32 0.0, %v3368
    %v3370 = vpop.f32.mrf.mxu0
    %v3371 = vadd.f32 0.0, %v3370
    %3372 = vmatmul.bf16.gmra.mxu0 %v1692
    %v3373 = vpop.f32.mrf.mxu0
    %v3374 = vadd.f32 0.0, %v3373
    %v3375 = vpop.f32.mrf.mxu0
    %v3376 = vadd.f32 0.0, %v3375
    %3377 = vmatmul.bf16.gmra.mxu0 %v1695
    %v3378 = vpop.f32.mrf.mxu0
    %v3379 = vadd.f32 0.0, %v3378
    %v3380 = vpop.f32.mrf.mxu0
    %3381 = vmatmul.bf16.gmra.mxu0 %v1698
    %v3382 = vpop.f32.mrf.mxu0
    %v3383 = vadd.f32 0.0, %v3382
    %v3384 = vpop.f32.mrf.mxu0
    %v3385 = vadd.f32 0.0, %v3384
    %3386 = vmatmul.bf16.gmra.mxu0 %v1701
    %v3387 = vpop.f32.mrf.mxu0
    %v3388 = vadd.f32 0.0, %v3387
    %v3389 = vpop.f32.mrf.mxu0
    %v3390 = vadd.f32 0.0, %v3389
    %3391 = vmatmul.bf16.gmra.mxu0 %v1704
    %v3392 = vpop.f32.mrf.mxu0
    %v3393 = vadd.f32 0.0, %v3392
    %v3394 = vpop.f32.mrf.mxu0
    %3395 = vdwg.mxu0
    %3396 = vmatpush.bf16.msra.mxu0 %v2769
    %3397 = vmatpush.bf16.msra.mxu0 %v2767
    %3398 = vmatpush.bf16.msra.mxu0 %v2765
    %3399 = vmatpush.bf16.msra.mxu0 %v2763
    %3400 = vmatpush.bf16.msra.mxu0 %v2761
    %3401 = vmatpush.bf16.msra.mxu0 %v2759
    %3402 = vmatpush.bf16.msra.mxu0 %v2757
    %3403 = vmatpush.bf16.msra.mxu0 %v2755
    %3404 = vmatmul.bf16.gmra.mxu0 %v1737
    %v3405 = vpop.f32.mrf.mxu0
    %v3406 = vadd.f32 %v3369, %v3405
    %v3407 = vpop.f32.mrf.mxu0
    %v3408 = vadd.f32 %v3371, %v3407
    %3409 = vmatmul.bf16.gmra.mxu0 %v1740
    %v3410 = vpop.f32.mrf.mxu0
    %v3411 = vadd.f32 %v3374, %v3410
    %v3412 = vpop.f32.mrf.mxu0
    %v3413 = vadd.f32 %v3376, %v3412
    %3414 = vmatmul.bf16.gmra.mxu0 %v1743
    %v3415 = vpop.f32.mrf.mxu0
    %v3416 = vadd.f32 %v3379, %v3415
    %v3417 = vpop.f32.mrf.mxu0
    %3418 = vmatmul.bf16.gmra.mxu0 %v1746
    %v3419 = vpop.f32.mrf.mxu0
    %v3420 = vadd.f32 %v3383, %v3419
    %v3421 = vpop.f32.mrf.mxu0
    %v3422 = vadd.f32 %v3385, %v3421
    %3423 = vmatmul.bf16.gmra.mxu0 %v1749
    %v3424 = vpop.f32.mrf.mxu0
    %v3425 = vadd.f32 %v3388, %v3424
    %v3426 = vpop.f32.mrf.mxu0
    %v3427 = vadd.f32 %v3390, %v3426
    %3428 = vmatmul.bf16.gmra.mxu0 %v1752
    %v3429 = vpop.f32.mrf.mxu0
    %v3430 = vadd.f32 %v3393, %v3429
    %v3431 = vpop.f32.mrf.mxu0
    %3432 = vdwg.mxu0
    %3433 = vmatpush.bf16.msra.mxu0 %v2785
    %3434 = vmatpush.bf16.msra.mxu0 %v2783
    %3435 = vmatpush.bf16.msra.mxu0 %v2781
    %3436 = vmatpush.bf16.msra.mxu0 %v2779
    %3437 = vmatpush.bf16.msra.mxu0 %v2777
    %3438 = vmatpush.bf16.msra.mxu0 %v2775
    %3439 = vmatpush.bf16.msra.mxu0 %v2773
    %3440 = vmatpush.bf16.msra.mxu0 %v2771
    %3441 = vmatmul.bf16.gmra.mxu0 %v1773
    %v3442 = vpop.f32.mrf.mxu0
    %v3443 = vadd.f32 %v3406, %v3442
    %v3444 = vpop.f32.mrf.mxu0
    %v3445 = vadd.f32 %v3408, %v3444
    %3446 = vmatmul.bf16.gmra.mxu0 %v1776
    %v3447 = vpop.f32.mrf.mxu0
    %v3448 = vadd.f32 %v3411, %v3447
    %v3449 = vpop.f32.mrf.mxu0
    %v3450 = vadd.f32 %v3413, %v3449
    %3451 = vmatmul.bf16.gmra.mxu0 %v1779
    %v3452 = vpop.f32.mrf.mxu0
    %v3453 = vadd.f32 %v3416, %v3452
    %v3454 = vpop.f32.mrf.mxu0
    %3455 = vmatmul.bf16.gmra.mxu0 %v1782
    %v3456 = vpop.f32.mrf.mxu0
    %v3457 = vadd.f32 %v3420, %v3456
    %v3458 = vpop.f32.mrf.mxu0
    %v3459 = vadd.f32 %v3422, %v3458
    %3460 = vmatmul.bf16.gmra.mxu0 %v1785
    %v3461 = vpop.f32.mrf.mxu0
    %v3462 = vadd.f32 %v3425, %v3461
    %v3463 = vpop.f32.mrf.mxu0
    %v3464 = vadd.f32 %v3427, %v3463
    %3465 = vmatmul.bf16.gmra.mxu0 %v1788
    %v3466 = vpop.f32.mrf.mxu0
    %v3467 = vadd.f32 %v3430, %v3466
    %v3468 = vpop.f32.mrf.mxu0
    %3469 = vdwg.mxu0
    %3470 = vmatpush.bf16.msra.mxu0 %v2801
    %3471 = vmatpush.bf16.msra.mxu0 %v2799
    %3472 = vmatpush.bf16.msra.mxu0 %v2797
    %3473 = vmatpush.bf16.msra.mxu0 %v2795
    %3474 = vmatpush.bf16.msra.mxu0 %v2793
    %3475 = vmatpush.bf16.msra.mxu0 %v2791
    %3476 = vmatpush.bf16.msra.mxu0 %v2789
    %3477 = vmatpush.bf16.msra.mxu0 %v2787
    %3478 = vmatmul.bf16.gmra.mxu0 %v1802
    %v3479 = vpop.f32.mrf.mxu0
    %v3480 = vadd.f32 %v3443, %v3479
    %v3481 = vpop.f32.mrf.mxu0
    %v3482 = vadd.f32 %v3445, %v3481
    %3483 = vmatmul.bf16.gmra.mxu0 %v1804
    %v3484 = vpop.f32.mrf.mxu0
    %v3485 = vadd.f32 %v3448, %v3484
    %v3486 = vpop.f32.mrf.mxu0
    %v3487 = vadd.f32 %v3450, %v3486
    %3488 = vmatmul.bf16.gmra.mxu0 %v1806
    %v3489 = vpop.f32.mrf.mxu0
    %v3490 = vadd.f32 %v3453, %v3489
    %v3491 = vpop.f32.mrf.mxu0
    %3492 = vmatmul.bf16.gmra.mxu0 %v1808
    %v3493 = vpop.f32.mrf.mxu0
    %v3494 = vadd.f32 %v3457, %v3493
    %v3495 = vpop.f32.mrf.mxu0
    %v3496 = vadd.f32 %v3459, %v3495
    %3497 = vmatmul.bf16.gmra.mxu0 %v1810
    %v3498 = vpop.f32.mrf.mxu0
    %v3499 = vadd.f32 %v3462, %v3498
    %v3500 = vpop.f32.mrf.mxu0
    %v3501 = vadd.f32 %v3464, %v3500
    %3502 = vmatmul.bf16.gmra.mxu0 %v1812
    %v3503 = vpop.f32.mrf.mxu0
    %v3504 = vadd.f32 %v3467, %v3503
    %v3505 = vpop.f32.mrf.mxu0
    %3506 = vdwg.mxu0
    %3507 = vmatpush.bf16.msra.mxu0 %v2817
    %3508 = vmatpush.bf16.msra.mxu0 %v2815
    %3509 = vmatpush.bf16.msra.mxu0 %v2813
    %3510 = vmatpush.bf16.msra.mxu0 %v2811
    %3511 = vmatpush.bf16.msra.mxu0 %v2809
    %3512 = vmatpush.bf16.msra.mxu0 %v2807
    %3513 = vmatpush.bf16.msra.mxu0 %v2805
    %3514 = vmatpush.bf16.msra.mxu0 %v2803
    %3515 = vmatmul.bf16.gmra.mxu0 %v1971
    %v3516 = vpop.f32.mrf.mxu0
    %v3517 = vadd.f32 %v3480, %v3516
    %v3518 = vpop.f32.mrf.mxu0
    %v3519 = vadd.f32 %v3482, %v3518
    %3520 = vmatmul.bf16.gmra.mxu0 %v1974
    %v3521 = vpop.f32.mrf.mxu0
    %v3522 = vadd.f32 %v3485, %v3521
    %v3523 = vpop.f32.mrf.mxu0
    %v3524 = vadd.f32 %v3487, %v3523
    %3525 = vmatmul.bf16.gmra.mxu0 %v1977
    %v3526 = vpop.f32.mrf.mxu0
    %v3527 = vadd.f32 %v3490, %v3526
    %v3528 = vpop.f32.mrf.mxu0
    %3529 = vmatmul.bf16.gmra.mxu0 %v1980
    %v3530 = vpop.f32.mrf.mxu0
    %v3531 = vadd.f32 %v3494, %v3530
    %v3532 = vpop.f32.mrf.mxu0
    %v3533 = vadd.f32 %v3496, %v3532
    %3534 = vmatmul.bf16.gmra.mxu0 %v1983
    %v3535 = vpop.f32.mrf.mxu0
    %v3536 = vadd.f32 %v3499, %v3535
    %v3537 = vpop.f32.mrf.mxu0
    %v3538 = vadd.f32 %v3501, %v3537
    %3539 = vmatmul.bf16.gmra.mxu0 %v1986
    %v3540 = vpop.f32.mrf.mxu0
    %v3541 = vadd.f32 %v3504, %v3540
    %v3542 = vpop.f32.mrf.mxu0
    %3543 = vdwg.mxu0
    %3544 = vmatpush.bf16.msra.mxu0 %v2833
    %3545 = vmatpush.bf16.msra.mxu0 %v2831
    %3546 = vmatpush.bf16.msra.mxu0 %v2829
    %3547 = vmatpush.bf16.msra.mxu0 %v2827
    %3548 = vmatpush.bf16.msra.mxu0 %v2825
    %3549 = vmatpush.bf16.msra.mxu0 %v2823
    %3550 = vmatpush.bf16.msra.mxu0 %v2821
    %3551 = vmatpush.bf16.msra.mxu0 %v2819
    %3552 = vmatmul.bf16.gmra.mxu0 %v2019
    %v3553 = vpop.f32.mrf.mxu0
    %v3554 = vadd.f32 %v3517, %v3553
    %v3555 = vpop.f32.mrf.mxu0
    %v3556 = vadd.f32 %v3519, %v3555
    %3557 = vmatmul.bf16.gmra.mxu0 %v2022
    %v3558 = vpop.f32.mrf.mxu0
    %v3559 = vadd.f32 %v3522, %v3558
    %v3560 = vpop.f32.mrf.mxu0
    %v3561 = vadd.f32 %v3524, %v3560
    %3562 = vmatmul.bf16.gmra.mxu0 %v2025
    %v3563 = vpop.f32.mrf.mxu0
    %v3564 = vadd.f32 %v3527, %v3563
    %v3565 = vpop.f32.mrf.mxu0
    %3566 = vmatmul.bf16.gmra.mxu0 %v2028
    %v3567 = vpop.f32.mrf.mxu0
    %v3568 = vadd.f32 %v3531, %v3567
    %v3569 = vpop.f32.mrf.mxu0
    %v3570 = vadd.f32 %v3533, %v3569
    %3571 = vmatmul.bf16.gmra.mxu0 %v2031
    %v3572 = vpop.f32.mrf.mxu0
    %v3573 = vadd.f32 %v3536, %v3572
    %v3574 = vpop.f32.mrf.mxu0
    %v3575 = vadd.f32 %v3538, %v3574
    %3576 = vmatmul.bf16.gmra.mxu0 %v2034
    %v3577 = vpop.f32.mrf.mxu0
    %v3578 = vadd.f32 %v3541, %v3577
    %v3579 = vpop.f32.mrf.mxu0
    %3580 = vdwg.mxu0
    %3581 = vmatpush.bf16.msra.mxu0 %v2849
    %3582 = vmatpush.bf16.msra.mxu0 %v2847
    %3583 = vmatpush.bf16.msra.mxu0 %v2845
    %3584 = vmatpush.bf16.msra.mxu0 %v2843
    %3585 = vmatpush.bf16.msra.mxu0 %v2841
    %3586 = vmatpush.bf16.msra.mxu0 %v2839
    %3587 = vmatpush.bf16.msra.mxu0 %v2837
    %3588 = vmatpush.bf16.msra.mxu0 %v2835
    %3589 = vmatmul.bf16.gmra.mxu0 %v2066
    %v3590 = vpop.f32.mrf.mxu0
    %v3591 = vadd.f32 %v3554, %v3590
    %v3592 = vpop.f32.mrf.mxu0
    %v3593 = vadd.f32 %v3556, %v3592
    %3594 = vmatmul.bf16.gmra.mxu0 %v2068
    %v3595 = vpop.f32.mrf.mxu0
    %v3596 = vadd.f32 %v3559, %v3595
    %v3597 = vpop.f32.mrf.mxu0
    %v3598 = vadd.f32 %v3561, %v3597
    %3599 = vmatmul.bf16.gmra.mxu0 %v2070
    %v3600 = vpop.f32.mrf.mxu0
    %v3601 = vadd.f32 %v3564, %v3600
    %v3602 = vpop.f32.mrf.mxu0
    %3603 = vmatmul.bf16.gmra.mxu0 %v2072
    %v3604 = vpop.f32.mrf.mxu0
    %v3605 = vadd.f32 %v3568, %v3604
    %v3606 = vpop.f32.mrf.mxu0
    %v3607 = vadd.f32 %v3570, %v3606
    %3608 = vmatmul.bf16.gmra.mxu0 %v2074
    %v3609 = vpop.f32.mrf.mxu0
    %v3610 = vadd.f32 %v3573, %v3609
    %v3611 = vpop.f32.mrf.mxu0
    %v3612 = vadd.f32 %v3575, %v3611
    %3613 = vmatmul.bf16.gmra.mxu0 %v2076
    %v3614 = vpop.f32.mrf.mxu0
    %v3615 = vadd.f32 %v3578, %v3614
    %v3616 = vpop.f32.mrf.mxu0
    %3617 = vdwg.mxu0
    %3618 = vmatpush.bf16.msra.mxu0 %v2865
    %3619 = vmatpush.bf16.msra.mxu0 %v2863
    %3620 = vmatpush.bf16.msra.mxu0 %v2861
    %3621 = vmatpush.bf16.msra.mxu0 %v2859
    %3622 = vmatpush.bf16.msra.mxu0 %v2857
    %3623 = vmatpush.bf16.msra.mxu0 %v2855
    %3624 = vmatpush.bf16.msra.mxu0 %v2853
    %3625 = vmatpush.bf16.msra.mxu0 %v2851
    %3626 = vmatmul.bf16.gmra.mxu0 %v2096
    %v3627 = vpop.f32.mrf.mxu0
    %v3628 = vadd.f32 %v3591, %v3627
    %v3629 = vpop.f32.mrf.mxu0
    %v3630 = vadd.f32 %v3593, %v3629
    %3631 = vmatmul.bf16.gmra.mxu0 %v2098
    %v3632 = vpop.f32.mrf.mxu0
    %v3633 = vadd.f32 %v3596, %v3632
    %v3634 = vpop.f32.mrf.mxu0
    %v3635 = vadd.f32 %v3598, %v3634
    %3636 = vmatmul.bf16.gmra.mxu0 %v2100
    %v3637 = vpop.f32.mrf.mxu0
    %v3638 = vadd.f32 %v3601, %v3637
    %v3639 = vpop.f32.mrf.mxu0
    %3640 = vmatmul.bf16.gmra.mxu0 %v2102
    %v3641 = vpop.f32.mrf.mxu0
    %v3642 = vadd.f32 %v3605, %v3641
    %v3643 = vpop.f32.mrf.mxu0
    %v3644 = vadd.f32 %v3607, %v3643
    %3645 = vmatmul.bf16.gmra.mxu0 %v2104
    %v3646 = vpop.f32.mrf.mxu0
    %v3647 = vadd.f32 %v3610, %v3646
    %v3648 = vpop.f32.mrf.mxu0
    %v3649 = vadd.f32 %v3612, %v3648
    %3650 = vmatmul.bf16.gmra.mxu0 %v2106
    %v3651 = vpop.f32.mrf.mxu0
    %v3652 = vadd.f32 %v3615, %v3651
    %v3653 = vpop.f32.mrf.mxu0
    %3654 = vdwg.mxu0
    %3655 = vmatpush.bf16.msra.mxu0 %v2881
    %3656 = vmatpush.bf16.msra.mxu0 %v2879
    %3657 = vmatpush.bf16.msra.mxu0 %v2877
    %3658 = vmatpush.bf16.msra.mxu0 %v2875
    %3659 = vmatpush.bf16.msra.mxu0 %v2873
    %3660 = vmatpush.bf16.msra.mxu0 %v2871
    %3661 = vmatpush.bf16.msra.mxu0 %v2869
    %3662 = vmatpush.bf16.msra.mxu0 %v2867
    %3663 = vmatmul.bf16.gmra.mxu0 %v2145
    %v3664 = vpop.f32.mrf.mxu0
    %v3665 = vadd.f32 %v3628, %v3664
    %v3666 = vpop.f32.mrf.mxu0
    %v3667 = vadd.f32 %v3630, %v3666
    %3668 = vmatmul.bf16.gmra.mxu0 %v2148
    %v3669 = vpop.f32.mrf.mxu0
    %v3670 = vadd.f32 %v3633, %v3669
    %v3671 = vpop.f32.mrf.mxu0
    %v3672 = vadd.f32 %v3635, %v3671
    %3673 = vmatmul.bf16.gmra.mxu0 %v2151
    %v3674 = vpop.f32.mrf.mxu0
    %v3675 = vadd.f32 %v3638, %v3674
    %v3676 = vpop.f32.mrf.mxu0
    %3677 = vmatmul.bf16.gmra.mxu0 %v2154
    %v3678 = vpop.f32.mrf.mxu0
    %v3679 = vadd.f32 %v3642, %v3678
    %v3680 = vpop.f32.mrf.mxu0
    %v3681 = vadd.f32 %v3644, %v3680
    %3682 = vmatmul.bf16.gmra.mxu0 %v2157
    %v3683 = vpop.f32.mrf.mxu0
    %v3684 = vadd.f32 %v3647, %v3683
    %v3685 = vpop.f32.mrf.mxu0
    %v3686 = vadd.f32 %v3649, %v3685
    %3687 = vmatmul.bf16.gmra.mxu0 %v2160
    %v3688 = vpop.f32.mrf.mxu0
    %v3689 = vadd.f32 %v3652, %v3688
    %v3690 = vpop.f32.mrf.mxu0
    %3691 = vdwg.mxu0
    %3702 = vrot.lane.b32.xlu0 %v3332, 64
    %v3703 = vpop.permute.xlu0 %3702
    %3704 = vrot.lane.b32.xlu0 %v3334, 64
    %v3705 = vpop.permute.xlu0 %3704
    %3706 = vrot.lane.b32.xlu0 %v3337, 64
    %v3707 = vpop.permute.xlu0 %3706
    %3708 = vrot.lane.b32.xlu0 %v3339, 64
    %v3709 = vpop.permute.xlu0 %3708
    %3710 = vrot.lane.b32.xlu0 %v3342, 64
    %v3711 = vpop.permute.xlu0 %3710
    %3712 = vrot.lane.b32.xlu0 %v3346, 64
    %v3713 = vpop.permute.xlu0 %3712
    %3714 = vrot.lane.b32.xlu0 %v3348, 64
    %v3715 = vpop.permute.xlu0 %3714
    %3716 = vrot.lane.b32.xlu0 %v3351, 64
    %v3717 = vpop.permute.xlu0 %3716
    %3718 = vrot.lane.b32.xlu0 %v3353, 64
    %v3719 = vpop.permute.xlu0 %3718
    %3720 = vrot.lane.b32.xlu0 %v3356, 64
    %v3721 = vpop.permute.xlu0 %3720
    %v3732 = vmax.f32 %v3332, %v3703
    %v3733 = vmax.f32 %v3334, %v3705
    %v3734 = vmax.f32 %v3337, %v3707
    %v3735 = vmax.f32 %v3339, %v3709
    %v3736 = vmax.f32 %v3342, %v3711
    %v3737 = vmax.f32 %v3346, %v3713
    %v3738 = vmax.f32 %v3348, %v3715
    %v3739 = vmax.f32 %v3351, %v3717
    %v3740 = vmax.f32 %v3353, %v3719
    %v3741 = vmax.f32 %v3356, %v3721
    %3752 = vrot.lane.b32.xlu0 %v3665, 64
    %v3753 = vpop.permute.xlu0 %3752
    %3754 = vrot.lane.b32.xlu0 %v3667, 64
    %v3755 = vpop.permute.xlu0 %3754
    %3756 = vrot.lane.b32.xlu0 %v3670, 64
    %v3757 = vpop.permute.xlu0 %3756
    %3758 = vrot.lane.b32.xlu0 %v3672, 64
    %v3759 = vpop.permute.xlu0 %3758
    %3760 = vrot.lane.b32.xlu0 %v3675, 64
    %v3761 = vpop.permute.xlu0 %3760
    %3762 = vrot.lane.b32.xlu0 %v3679, 64
    %v3763 = vpop.permute.xlu0 %3762
    %3764 = vrot.lane.b32.xlu0 %v3681, 64
    %v3765 = vpop.permute.xlu0 %3764
    %3766 = vrot.lane.b32.xlu0 %v3684, 64
    %v3767 = vpop.permute.xlu0 %3766
    %3768 = vrot.lane.b32.xlu0 %v3686, 64
    %v3769 = vpop.permute.xlu0 %3768
    %3770 = vrot.lane.b32.xlu0 %v3689, 64
    %v3771 = vpop.permute.xlu0 %3770
    %v3782 = vmax.f32 %v3665, %v3753
    %v3783 = vmax.f32 %v3667, %v3755
    %v3784 = vmax.f32 %v3670, %v3757
    %v3785 = vmax.f32 %v3672, %v3759
    %v3786 = vmax.f32 %v3675, %v3761
    %v3787 = vmax.f32 %v3679, %v3763
    %v3788 = vmax.f32 %v3681, %v3765
    %v3789 = vmax.f32 %v3684, %v3767
    %v3790 = vmax.f32 %v3686, %v3769
    %v3791 = vmax.f32 %v3689, %v3771
    %v3792 = vmax.f32 %v3732, %v3782
    %v3793 = vmax.f32 %v3733, %v3783
    %v3794 = vmax.f32 %v3734, %v3784
    %v3795 = vmax.f32 %v3735, %v3785
    %v3796 = vmax.f32 %v3736, %v3786
    %v3797 = vmax.f32 %v3737, %v3787
    %v3798 = vmax.f32 %v3738, %v3788
    %v3799 = vmax.f32 %v3739, %v3789
    %v3800 = vmax.f32 %v3740, %v3790
    %v3801 = vmax.f32 %v3741, %v3791
    %v3802 = vld [vmem:[%s4] sm:$0x1]
    %v3804 = vperm.slane %v3802, 0
    %v3806 = vadd.f32 %v3792, %v3804
    %v3807 = vadd.f32 %v3793, %v3804
    %v3808 = vadd.f32 %v3794, %v3804
    %v3809 = vadd.f32 %v3795, %v3804
    %v3810 = vadd.f32 %v3796, %v3804
    %v3811 = vadd.f32 %v3797, %v3804
    %v3812 = vadd.f32 %v3798, %v3804
    %v3813 = vadd.f32 %v3799, %v3804
    %v3814 = vadd.f32 %v3800, %v3804
    %v3815 = vadd.f32 %v3801, %v3804
    %v3816 = vmax.f32 %v3806, 0.0
    %v3817 = vmax.f32 %v3807, 0.0
    %v3818 = vmax.f32 %v3808, 0.0
    %v3819 = vmax.f32 %v3809, 0.0
    %v3820 = vmax.f32 %v3810, 0.0
    %v3821 = vmax.f32 %v3811, 0.0
    %v3822 = vmax.f32 %v3812, 0.0
    %v3823 = vmax.f32 %v3813, 0.0
    %v3824 = vmax.f32 %v3814, 0.0
    %v3825 = vmax.f32 %v3815, 0.0
    %v3828 = vrot.slane %v3821, 7
    %vm3829 = vcmask 1041409
    %v3830 = vsel %vm3829, %v3828, %v3816
    %v3832 = vrot.slane %v3816, 1
    %v3833 = vsel %vm3829, %v3821, %v3832
    %3834 = vrot.lane.b32.xlu0 %v3833, 64
    %v3835 = vpop.permute.xlu0 %3834
    %v3837 = vrot.slane %v3816, 2
    %v3838 = vrot.slane %v3821, 1
    %v3839 = vsel %vm3829, %v3838, %v3837
    %v3841 = vrot.slane %v3816, 3
    %v3842 = vrot.slane %v3821, 2
    %v3843 = vsel %vm3829, %v3842, %v3841
    %3844 = vrot.lane.b32.xlu0 %v3843, 64
    %v3845 = vpop.permute.xlu0 %3844
    %v3847 = vrot.slane %v3816, 4
    %v3848 = vrot.slane %v3821, 3
    %v3849 = vsel %vm3829, %v3848, %v3847
    %v3853 = vrot.slane %v3822, 7
    %v3854 = vsel %vm3829, %v3853, %v3817
    %3855 = vrot.lane.b32.xlu0 %v3854, 64
    %v3856 = vpop.permute.xlu0 %3855
    %v3858 = vrot.slane %v3817, 1
    %v3859 = vsel %vm3829, %v3822, %v3858
    %v3861 = vrot.slane %v3817, 2
    %v3862 = vrot.slane %v3822, 1
    %v3863 = vsel %vm3829, %v3862, %v3861
    %3864 = vrot.lane.b32.xlu0 %v3863, 64
    %v3865 = vpop.permute.xlu0 %3864
    %v3867 = vrot.slane %v3817, 3
    %v3868 = vrot.slane %v3822, 2
    %v3869 = vsel %vm3829, %v3868, %v3867
    %v3871 = vrot.slane %v3817, 4
    %v3872 = vrot.slane %v3822, 3
    %v3873 = vsel %vm3829, %v3872, %v3871
    %3874 = vrot.lane.b32.xlu0 %v3873, 64
    %v3875 = vpop.permute.xlu0 %3874
    %v3879 = vrot.slane %v3823, 7
    %v3880 = vsel %vm3829, %v3879, %v3818
    %v3882 = vrot.slane %v3818, 1
    %v3883 = vsel %vm3829, %v3823, %v3882
    %3884 = vrot.lane.b32.xlu0 %v3883, 64
    %v3885 = vpop.permute.xlu0 %3884
    %v3887 = vrot.slane %v3818, 2
    %v3888 = vrot.slane %v3823, 1
    %v3889 = vsel %vm3829, %v3888, %v3887
    %v3891 = vrot.slane %v3818, 3
    %v3892 = vrot.slane %v3823, 2
    %v3893 = vsel %vm3829, %v3892, %v3891
    %3894 = vrot.lane.b32.xlu0 %v3893, 64
    %v3895 = vpop.permute.xlu0 %3894
    %v3897 = vrot.slane %v3818, 4
    %v3898 = vrot.slane %v3823, 3
    %v3899 = vsel %vm3829, %v3898, %v3897
    %v3903 = vrot.slane %v3824, 7
    %v3904 = vsel %vm3829, %v3903, %v3819
    %3905 = vrot.lane.b32.xlu0 %v3904, 64
    %v3906 = vpop.permute.xlu0 %3905
    %v3908 = vsel %vm1674, %v3830, %v3835
    %v3909 = vsel %vm1674, %v3839, %v3845
    %v3910 = vsel %vm1674, %v3849, %v3856
    %v3911 = vsel %vm1674, %v3859, %v3865
    %v3912 = vsel %vm1674, %v3869, %v3875
    %v3913 = vsel %vm1674, %v3880, %v3885
    %v3914 = vsel %vm1674, %v3889, %v3895
    %v3915 = vsel %vm1674, %v3899, %v3906
    %vm3916 = vcmask 1042434
    %v3917 = vsel %vm3916, %v3903, %v3819
    %v3919 = vrot.slane %v3819, 1
    %v3920 = vsel %vm3916, %v3824, %v3919
    %3921 = vrot.lane.b32.xlu0 %v3920, 64
    %v3922 = vpop.permute.xlu0 %3921
    %v3924 = vrot.slane %v3819, 2
    %v3925 = vrot.slane %v3824, 1
    %v3926 = vsel %vm3916, %v3925, %v3924
    %v3928 = vrot.slane %v3819, 3
    %v3929 = vrot.slane %v3824, 2
    %v3930 = vsel %vm3916, %v3929, %v3928
    %3931 = vrot.lane.b32.xlu0 %v3930, 64
    %v3932 = vpop.permute.xlu0 %3931
    %v3936 = vrot.slane %v3820, 7
    %v3937 = vrot.slane %v3825, 6
    %v3938 = vsel %vm3916, %v3937, %v3936
    %v3940 = vrot.slane %v3825, 7
    %v3941 = vsel %vm3916, %v3940, %v3820
    %3942 = vrot.lane.b32.xlu0 %v3941, 64
    %v3943 = vpop.permute.xlu0 %3942
    %v3945 = vrot.slane %v3820, 1
    %v3946 = vsel %vm3916, %v3825, %v3945
    %v3948 = vrot.slane %v3820, 2
    %v3949 = vrot.slane %v3825, 1
    %v3950 = vsel %vm3916, %v3949, %v3948
    %3951 = vrot.lane.b32.xlu0 %v3950, 64
    %v3952 = vpop.permute.xlu0 %3951
    %v3954 = vrot.slane %v3820, 3
    %v3955 = vrot.slane %v3825, 2
    %v3956 = vsel %vm3916, %v3955, %v3954
    %v3957 = vsel %vm1674, %v3917, %v3922
    %v3958 = vsel %vm1674, %v3926, %v3932
    %v3959 = vsel %vm1674, %v3938, %v3943
    %v3960 = vsel %vm1674, %v3946, %v3952
    %v3965 = vrot.slane %v3957, 1
    %v3966 = vrot.slane %v3958, 1
    %v3967 = vrot.slane %v3959, 1
    %v3968 = vrot.slane %v3960, 1
    %v3969 = vrot.slane %v3956, 1
    %v3975 = vpack.c.bf16 %v3908, %v3908
    %v3976 = vpack.c.bf16 %v3909, %v3909
    %v3977 = vpack.c.bf16 %v3910, %v3910
    %v3978 = vpack.c.bf16 %v3911, %v3911
    %v3979 = vpack.c.bf16 %v3912, %v3912
    %v3980 = vpack.c.bf16 %v3913, %v3913
    %v3981 = vpack.c.bf16 %v3914, %v3914
    %v3982 = vpack.c.bf16 %v3915, %v3915
    %v3983 = vpack.c.bf16 %v3965, %v3965
    %v3984 = vpack.c.bf16 %v3966, %v3966
    %v3985 = vpack.c.bf16 %v3967, %v3967
    %v3986 = vpack.c.bf16 %v3968, %v3968
    %v3987 = vpack.c.bf16 %v3969, %v3969
    %v3988 = vld [vmem:[%s5] sm:$0xf]
    %v3989 = vld [vmem:[%s5 + $0x4] sm:$0xf]
    %v3990 = vld [vmem:[%s5 + $0x8] sm:$0xf]
    %v3991 = vld [vmem:[%s5 + $0xc] sm:$0xf]
    %v3992 = vld [vmem:[%s5 + $0x10] sm:$0xf]
    %v3993 = vld [vmem:[%s5 + $0x14] sm:$0xf]
    %v3994 = vld [vmem:[%s5 + $0x18] sm:$0xf]
    %v3995 = vld [vmem:[%s5 + $0x1c] sm:$0xf]
    %v3996 = vld [vmem:[%s5 + $0x20] sm:$0xf]
    %v3997 = vld [vmem:[%s5 + $0x24] sm:$0xf]
    %v3998 = vld [vmem:[%s5 + $0x28] sm:$0xf]
    %v3999 = vld [vmem:[%s5 + $0x2c] sm:$0xf]
    %v4000 = vld [vmem:[%s5 + $0x30] sm:$0xf]
    %v4001 = vld [vmem:[%s5 + $0x34] sm:$0xf]
    %v4002 = vld [vmem:[%s5 + $0x38] sm:$0xf]
    %v4003 = vld [vmem:[%s5 + $0x3c] sm:$0xf]
    %v4004 = vld [vmem:[%s5 + $0x40] sm:$0xf]
    %v4005 = vld [vmem:[%s5 + $0x44] sm:$0xf]
    %v4006 = vld [vmem:[%s5 + $0x48] sm:$0xf]
    %v4007 = vld [vmem:[%s5 + $0x4c] sm:$0xf]
    %v4008 = vld [vmem:[%s5 + $0x50] sm:$0xf]
    %v4009 = vld [vmem:[%s5 + $0x54] sm:$0xf]
    %v4010 = vld [vmem:[%s5 + $0x58] sm:$0xf]
    %v4011 = vld [vmem:[%s5 + $0x5c] sm:$0xf]
    %v4012 = vld [vmem:[%s5 + $0x60] sm:$0xf]
    %v4013 = vld [vmem:[%s5 + $0x64] sm:$0xf]
    %v4014 = vld [vmem:[%s5 + $0x68] sm:$0xf]
    %v4015 = vld [vmem:[%s5 + $0x6c] sm:$0xf]
    %v4016 = vld [vmem:[%s5 + $0x70] sm:$0xf]
    %v4017 = vld [vmem:[%s5 + $0x74] sm:$0xf]
    %v4018 = vld [vmem:[%s5 + $0x78] sm:$0xf]
    %v4019 = vld [vmem:[%s5 + $0x7c] sm:$0xf]
    %v4020 = vld [vmem:[%s5 + $0x80] sm:$0xf]
    %v4021 = vld [vmem:[%s5 + $0x84] sm:$0xf]
    %v4022 = vld [vmem:[%s5 + $0x88] sm:$0xf]
    %v4023 = vld [vmem:[%s5 + $0x8c] sm:$0xf]
    %v4024 = vld [vmem:[%s5 + $0x90] sm:$0xf]
    %v4025 = vld [vmem:[%s5 + $0x94] sm:$0xf]
    %v4026 = vld [vmem:[%s5 + $0x98] sm:$0xf]
    %v4027 = vld [vmem:[%s5 + $0x9c] sm:$0xf]
    %v4028 = vld [vmem:[%s5 + $0xa0] sm:$0xf]
    %v4029 = vld [vmem:[%s5 + $0xa4] sm:$0xf]
    %v4030 = vld [vmem:[%s5 + $0xa8] sm:$0xf]
    %v4031 = vld [vmem:[%s5 + $0xac] sm:$0xf]
    %v4032 = vld [vmem:[%s5 + $0xb0] sm:$0xf]
    %v4033 = vld [vmem:[%s5 + $0xb4] sm:$0xf]
    %v4034 = vld [vmem:[%s5 + $0xb8] sm:$0xf]
    %v4035 = vld [vmem:[%s5 + $0xbc] sm:$0xf]
    %v4036 = vld [vmem:[%s5 + $0xc0] sm:$0xf]
    %v4037 = vld [vmem:[%s5 + $0xc4] sm:$0xf]
    %v4038 = vld [vmem:[%s5 + $0xc8] sm:$0xf]
    %v4039 = vld [vmem:[%s5 + $0xcc] sm:$0xf]
    %v4040 = vld [vmem:[%s5 + $0xd0] sm:$0xf]
    %v4041 = vld [vmem:[%s5 + $0xd4] sm:$0xf]
    %v4042 = vld [vmem:[%s5 + $0xd8] sm:$0xf]
    %v4043 = vld [vmem:[%s5 + $0xdc] sm:$0xf]
    %v4044 = vld [vmem:[%s5 + $0xe0] sm:$0xf]
    %v4045 = vld [vmem:[%s5 + $0xe4] sm:$0xf]
    %v4046 = vld [vmem:[%s5 + $0xe8] sm:$0xf]
    %v4047 = vld [vmem:[%s5 + $0xec] sm:$0xf]
    %v4048 = vld [vmem:[%s5 + $0xf0] sm:$0xf]
    %v4049 = vld [vmem:[%s5 + $0xf4] sm:$0xf]
    %v4050 = vld [vmem:[%s5 + $0xf8] sm:$0xf]
    %v4051 = vld [vmem:[%s5 + $0xfc] sm:$0xf]
    %v4052 = vld [vmem:[%s5 + $0x100] sm:$0xf]
    %v4053 = vld [vmem:[%s5 + $0x104] sm:$0xf]
    %v4054 = vld [vmem:[%s5 + $0x108] sm:$0xf]
    %v4055 = vld [vmem:[%s5 + $0x10c] sm:$0xf]
    %v4056 = vld [vmem:[%s5 + $0x110] sm:$0xf]
    %v4057 = vld [vmem:[%s5 + $0x114] sm:$0xf]
    %v4058 = vld [vmem:[%s5 + $0x118] sm:$0xf]
    %v4059 = vld [vmem:[%s5 + $0x11c] sm:$0xf]
    %v4060 = vld [vmem:[%s5 + $0x120] sm:$0xf]
    %v4061 = vld [vmem:[%s5 + $0x124] sm:$0xf]
    %v4062 = vld [vmem:[%s5 + $0x128] sm:$0xf]
    %v4063 = vld [vmem:[%s5 + $0x12c] sm:$0xf]
    %v4064 = vld [vmem:[%s5 + $0x130] sm:$0xf]
    %v4065 = vld [vmem:[%s5 + $0x134] sm:$0xf]
    %v4066 = vld [vmem:[%s5 + $0x138] sm:$0xf]
    %v4067 = vld [vmem:[%s5 + $0x13c] sm:$0xf]
    %v4068 = vld [vmem:[%s5 + $0x140] sm:$0xf]
    %v4069 = vld [vmem:[%s5 + $0x144] sm:$0xf]
    %v4070 = vld [vmem:[%s5 + $0x148] sm:$0xf]
    %v4071 = vld [vmem:[%s5 + $0x14c] sm:$0xf]
    %v4072 = vld [vmem:[%s5 + $0x150] sm:$0xf]
    %v4073 = vld [vmem:[%s5 + $0x154] sm:$0xf]
    %v4074 = vld [vmem:[%s5 + $0x158] sm:$0xf]
    %v4075 = vld [vmem:[%s5 + $0x15c] sm:$0xf]
    %v4076 = vld [vmem:[%s5 + $0x160] sm:$0xf]
    %v4077 = vld [vmem:[%s5 + $0x164] sm:$0xf]
    %v4078 = vld [vmem:[%s5 + $0x168] sm:$0xf]
    %v4079 = vld [vmem:[%s5 + $0x16c] sm:$0xf]
    %v4080 = vld [vmem:[%s5 + $0x170] sm:$0xf]
    %v4081 = vld [vmem:[%s5 + $0x174] sm:$0xf]
    %v4082 = vld [vmem:[%s5 + $0x178] sm:$0xf]
    %v4083 = vld [vmem:[%s5 + $0x17c] sm:$0xf]
    %v4084 = vld [vmem:[%s5 + $0x180] sm:$0xf]
    %v4085 = vld [vmem:[%s5 + $0x184] sm:$0xf]
    %v4086 = vld [vmem:[%s5 + $0x188] sm:$0xf]
    %v4087 = vld [vmem:[%s5 + $0x18c] sm:$0xf]
    %v4088 = vld [vmem:[%s5 + $0x190] sm:$0xf]
    %v4089 = vld [vmem:[%s5 + $0x194] sm:$0xf]
    %v4090 = vld [vmem:[%s5 + $0x198] sm:$0xf]
    %v4091 = vld [vmem:[%s5 + $0x19c] sm:$0xf]
    %v4092 = vld [vmem:[%s5 + $0x1a0] sm:$0xf]
    %v4093 = vld [vmem:[%s5 + $0x1a4] sm:$0xf]
    %v4094 = vld [vmem:[%s5 + $0x1a8] sm:$0xf]
    %v4095 = vld [vmem:[%s5 + $0x1ac] sm:$0xf]
    %v4096 = vld [vmem:[%s5 + $0x1b0] sm:$0xf]
    %v4097 = vld [vmem:[%s5 + $0x1b4] sm:$0xf]
    %v4098 = vld [vmem:[%s5 + $0x1b8] sm:$0xf]
    %v4099 = vld [vmem:[%s5 + $0x1bc] sm:$0xf]
    %v4100 = vld [vmem:[%s5 + $0x1c0] sm:$0xf]
    %v4101 = vld [vmem:[%s5 + $0x1c4] sm:$0xf]
    %v4102 = vld [vmem:[%s5 + $0x1c8] sm:$0xf]
    %v4103 = vld [vmem:[%s5 + $0x1cc] sm:$0xf]
    %v4104 = vld [vmem:[%s5 + $0x1d0] sm:$0xf]
    %v4105 = vld [vmem:[%s5 + $0x1d4] sm:$0xf]
    %v4106 = vld [vmem:[%s5 + $0x1d8] sm:$0xf]
    %v4107 = vld [vmem:[%s5 + $0x1dc] sm:$0xf]
    %v4108 = vld [vmem:[%s5 + $0x1e0] sm:$0xf]
    %v4109 = vld [vmem:[%s5 + $0x1e4] sm:$0xf]
    %v4110 = vld [vmem:[%s5 + $0x1e8] sm:$0xf]
    %v4111 = vld [vmem:[%s5 + $0x1ec] sm:$0xf]
    %v4112 = vld [vmem:[%s5 + $0x1f0] sm:$0xf]
    %v4113 = vld [vmem:[%s5 + $0x1f4] sm:$0xf]
    %v4114 = vld [vmem:[%s5 + $0x1f8] sm:$0xf]
    %v4115 = vld [vmem:[%s5 + $0x1fc] sm:$0xf]
    %v4116 = vld [vmem:[%s5 + $0x200] sm:$0xf]
    %v4117 = vld [vmem:[%s5 + $0x204] sm:$0xf]
    %v4118 = vld [vmem:[%s5 + $0x208] sm:$0xf]
    %v4119 = vld [vmem:[%s5 + $0x20c] sm:$0xf]
    %v4120 = vld [vmem:[%s5 + $0x210] sm:$0xf]
    %v4121 = vld [vmem:[%s5 + $0x214] sm:$0xf]
    %v4122 = vld [vmem:[%s5 + $0x218] sm:$0xf]
    %v4123 = vld [vmem:[%s5 + $0x21c] sm:$0xf]
    %v4124 = vld [vmem:[%s5 + $0x220] sm:$0xf]
    %v4125 = vld [vmem:[%s5 + $0x224] sm:$0xf]
    %v4126 = vld [vmem:[%s5 + $0x228] sm:$0xf]
    %v4127 = vld [vmem:[%s5 + $0x22c] sm:$0xf]
    %v4128 = vld [vmem:[%s5 + $0x230] sm:$0xf]
    %v4129 = vld [vmem:[%s5 + $0x234] sm:$0xf]
    %v4130 = vld [vmem:[%s5 + $0x238] sm:$0xf]
    %v4131 = vld [vmem:[%s5 + $0x23c] sm:$0xf]
    %v4132 = vld [vmem:[%s5 + $0x240] sm:$0xf]
    %v4133 = vld [vmem:[%s5 + $0x244] sm:$0xf]
    %v4134 = vld [vmem:[%s5 + $0x248] sm:$0xf]
    %v4135 = vld [vmem:[%s5 + $0x24c] sm:$0xf]
    %v4136 = vld [vmem:[%s5 + $0x250] sm:$0xf]
    %v4137 = vld [vmem:[%s5 + $0x254] sm:$0xf]
    %v4138 = vld [vmem:[%s5 + $0x258] sm:$0xf]
    %v4139 = vld [vmem:[%s5 + $0x25c] sm:$0xf]
    %v4140 = vld [vmem:[%s5 + $0x260] sm:$0xf]
    %v4141 = vld [vmem:[%s5 + $0x264] sm:$0xf]
    %v4142 = vld [vmem:[%s5 + $0x268] sm:$0xf]
    %v4143 = vld [vmem:[%s5 + $0x26c] sm:$0xf]
    %v4144 = vld [vmem:[%s5 + $0x270] sm:$0xf]
    %v4145 = vld [vmem:[%s5 + $0x274] sm:$0xf]
    %v4146 = vld [vmem:[%s5 + $0x278] sm:$0xf]
    %v4147 = vld [vmem:[%s5 + $0x27c] sm:$0xf]
    %v4148 = vld [vmem:[%s5 + $0x280] sm:$0xf]
    %v4149 = vld [vmem:[%s5 + $0x284] sm:$0xf]
    %v4150 = vld [vmem:[%s5 + $0x288] sm:$0xf]
    %v4151 = vld [vmem:[%s5 + $0x28c] sm:$0xf]
    %v4152 = vld [vmem:[%s5 + $0x290] sm:$0xf]
    %v4153 = vld [vmem:[%s5 + $0x294] sm:$0xf]
    %v4154 = vld [vmem:[%s5 + $0x298] sm:$0xf]
    %v4155 = vld [vmem:[%s5 + $0x29c] sm:$0xf]
    %v4156 = vld [vmem:[%s5 + $0x2a0] sm:$0xf]
    %v4157 = vld [vmem:[%s5 + $0x2a4] sm:$0xf]
    %v4158 = vld [vmem:[%s5 + $0x2a8] sm:$0xf]
    %v4159 = vld [vmem:[%s5 + $0x2ac] sm:$0xf]
    %v4160 = vld [vmem:[%s5 + $0x2b0] sm:$0xf]
    %v4161 = vld [vmem:[%s5 + $0x2b4] sm:$0xf]
    %v4162 = vld [vmem:[%s5 + $0x2b8] sm:$0xf]
    %v4163 = vld [vmem:[%s5 + $0x2bc] sm:$0xf]
    %v4164 = vld [vmem:[%s5 + $0x2c0] sm:$0xf]
    %v4165 = vld [vmem:[%s5 + $0x2c4] sm:$0xf]
    %v4166 = vld [vmem:[%s5 + $0x2c8] sm:$0xf]
    %v4167 = vld [vmem:[%s5 + $0x2cc] sm:$0xf]
    %v4168 = vld [vmem:[%s5 + $0x2d0] sm:$0xf]
    %v4169 = vld [vmem:[%s5 + $0x2d4] sm:$0xf]
    %v4170 = vld [vmem:[%s5 + $0x2d8] sm:$0xf]
    %v4171 = vld [vmem:[%s5 + $0x2dc] sm:$0xf]
    %v4172 = vld [vmem:[%s5 + $0x2e0] sm:$0xf]
    %v4173 = vld [vmem:[%s5 + $0x2e4] sm:$0xf]
    %v4174 = vld [vmem:[%s5 + $0x2e8] sm:$0xf]
    %v4175 = vld [vmem:[%s5 + $0x2ec] sm:$0xf]
    %v4176 = vld [vmem:[%s5 + $0x2f0] sm:$0xf]
    %v4177 = vld [vmem:[%s5 + $0x2f4] sm:$0xf]
    %v4178 = vld [vmem:[%s5 + $0x2f8] sm:$0xf]
    %v4179 = vld [vmem:[%s5 + $0x2fc] sm:$0xf]
    %v4180 = vld [vmem:[%s5 + $0x300] sm:$0xf]
    %v4181 = vld [vmem:[%s5 + $0x304] sm:$0xf]
    %v4182 = vld [vmem:[%s5 + $0x308] sm:$0xf]
    %v4183 = vld [vmem:[%s5 + $0x30c] sm:$0xf]
    %v4184 = vld [vmem:[%s5 + $0x310] sm:$0xf]
    %v4185 = vld [vmem:[%s5 + $0x314] sm:$0xf]
    %v4186 = vld [vmem:[%s5 + $0x318] sm:$0xf]
    %v4187 = vld [vmem:[%s5 + $0x31c] sm:$0xf]
    %v4188 = vld [vmem:[%s6] sm:$0x1]
    %v4190 = vperm.slane %v4188, 0
    %v4392 = vunpack.c.l.b16 %v3988
    %v4393 = vunpack.c.l.b16 %v3989
    %v4394 = vunpack.c.l.b16 %v3990
    %v4395 = vunpack.c.l.b16 %v3991
    %v4396 = vunpack.c.l.b16 %v3992
    %v4397 = vunpack.c.l.b16 %v3993
    %v4398 = vunpack.c.l.b16 %v3994
    %v4399 = vunpack.c.l.b16 %v3995
    %v4400 = vunpack.c.l.b16 %v3996
    %v4401 = vunpack.c.l.b16 %v3997
    %v4402 = vunpack.c.l.b16 %v3998
    %v4403 = vunpack.c.l.b16 %v3999
    %v4404 = vunpack.c.l.b16 %v4000
    %v4405 = vunpack.c.l.b16 %v4001
    %v4406 = vunpack.c.l.b16 %v4002
    %v4407 = vunpack.c.l.b16 %v4003
    %v4408 = vunpack.c.l.b16 %v4004
    %v4409 = vunpack.c.l.b16 %v4005
    %v4410 = vunpack.c.l.b16 %v4006
    %v4411 = vunpack.c.l.b16 %v4007
    %v4412 = vunpack.c.l.b16 %v4008
    %v4413 = vunpack.c.l.b16 %v4009
    %v4414 = vunpack.c.l.b16 %v4010
    %v4415 = vunpack.c.l.b16 %v4011
    %v4416 = vunpack.c.l.b16 %v4012
    %v4417 = vunpack.c.l.b16 %v4013
    %v4418 = vunpack.c.l.b16 %v4014
    %v4419 = vunpack.c.l.b16 %v4015
    %v4420 = vunpack.c.l.b16 %v4016
    %v4421 = vunpack.c.l.b16 %v4017
    %v4422 = vunpack.c.l.b16 %v4018
    %v4423 = vunpack.c.l.b16 %v4019
    %v4424 = vunpack.c.l.b16 %v4020
    %v4425 = vunpack.c.l.b16 %v4021
    %v4426 = vunpack.c.l.b16 %v4022
    %v4427 = vunpack.c.l.b16 %v4023
    %v4428 = vunpack.c.l.b16 %v4024
    %v4429 = vunpack.c.l.b16 %v4025
    %v4430 = vunpack.c.l.b16 %v4026
    %v4431 = vunpack.c.l.b16 %v4027
    %v4432 = vunpack.c.l.b16 %v4028
    %v4433 = vunpack.c.l.b16 %v4029
    %v4434 = vunpack.c.l.b16 %v4030
    %v4435 = vunpack.c.l.b16 %v4031
    %v4436 = vunpack.c.l.b16 %v4032
    %v4437 = vunpack.c.l.b16 %v4033
    %v4438 = vunpack.c.l.b16 %v4034
    %v4439 = vunpack.c.l.b16 %v4035
    %v4440 = vunpack.c.l.b16 %v4036
    %v4441 = vunpack.c.l.b16 %v4037
    %v4442 = vunpack.c.l.b16 %v4038
    %v4443 = vunpack.c.l.b16 %v4039
    %v4444 = vunpack.c.l.b16 %v4040
    %v4445 = vunpack.c.l.b16 %v4041
    %v4446 = vunpack.c.l.b16 %v4042
    %v4447 = vunpack.c.l.b16 %v4043
    %v4448 = vunpack.c.l.b16 %v4044
    %v4449 = vunpack.c.l.b16 %v4045
    %v4450 = vunpack.c.l.b16 %v4046
    %v4451 = vunpack.c.l.b16 %v4047
    %v4452 = vunpack.c.l.b16 %v4048
    %v4453 = vunpack.c.l.b16 %v4049
    %v4454 = vunpack.c.l.b16 %v4050
    %v4455 = vunpack.c.l.b16 %v4051
    %v4456 = vunpack.c.l.b16 %v4052
    %v4457 = vunpack.c.l.b16 %v4053
    %v4458 = vunpack.c.l.b16 %v4054
    %v4459 = vunpack.c.l.b16 %v4055
    %v4460 = vunpack.c.l.b16 %v4056
    %v4461 = vunpack.c.l.b16 %v4057
    %v4462 = vunpack.c.l.b16 %v4058
    %v4463 = vunpack.c.l.b16 %v4059
    %v4464 = vunpack.c.l.b16 %v4060
    %v4465 = vunpack.c.l.b16 %v4061
    %v4466 = vunpack.c.l.b16 %v4062
    %v4467 = vunpack.c.l.b16 %v4063
    %v4468 = vunpack.c.l.b16 %v4064
    %v4469 = vunpack.c.l.b16 %v4065
    %v4470 = vunpack.c.l.b16 %v4066
    %v4471 = vunpack.c.l.b16 %v4067
    %v4472 = vunpack.c.l.b16 %v4068
    %v4473 = vunpack.c.l.b16 %v4069
    %v4474 = vunpack.c.l.b16 %v4070
    %v4475 = vunpack.c.l.b16 %v4071
    %v4476 = vunpack.c.l.b16 %v4072
    %v4477 = vunpack.c.l.b16 %v4073
    %v4478 = vunpack.c.l.b16 %v4074
    %v4479 = vunpack.c.l.b16 %v4075
    %v4480 = vunpack.c.l.b16 %v4076
    %v4481 = vunpack.c.l.b16 %v4077
    %v4482 = vunpack.c.l.b16 %v4078
    %v4483 = vunpack.c.l.b16 %v4079
    %v4484 = vunpack.c.l.b16 %v4080
    %v4485 = vunpack.c.l.b16 %v4081
    %v4486 = vunpack.c.l.b16 %v4082
    %v4487 = vunpack.c.l.b16 %v4083
    %v4488 = vunpack.c.l.b16 %v4084
    %v4489 = vunpack.c.l.b16 %v4085
    %v4490 = vunpack.c.l.b16 %v4086
    %v4491 = vunpack.c.l.b16 %v4087
    %v4492 = vunpack.c.l.b16 %v4088
    %v4493 = vunpack.c.l.b16 %v4089
    %v4494 = vunpack.c.l.b16 %v4090
    %v4495 = vunpack.c.l.b16 %v4091
    %v4496 = vunpack.c.l.b16 %v4092
    %v4497 = vunpack.c.l.b16 %v4093
    %v4498 = vunpack.c.l.b16 %v4094
    %v4499 = vunpack.c.l.b16 %v4095
    %v4500 = vunpack.c.l.b16 %v4096
    %v4501 = vunpack.c.l.b16 %v4097
    %v4502 = vunpack.c.l.b16 %v4098
    %v4503 = vunpack.c.l.b16 %v4099
    %v4504 = vunpack.c.l.b16 %v4100
    %v4505 = vunpack.c.l.b16 %v4101
    %v4506 = vunpack.c.l.b16 %v4102
    %v4507 = vunpack.c.l.b16 %v4103
    %v4508 = vunpack.c.l.b16 %v4104
    %v4509 = vunpack.c.l.b16 %v4105
    %v4510 = vunpack.c.l.b16 %v4106
    %v4511 = vunpack.c.l.b16 %v4107
    %v4512 = vunpack.c.l.b16 %v4108
    %v4513 = vunpack.c.l.b16 %v4109
    %v4514 = vunpack.c.l.b16 %v4110
    %v4515 = vunpack.c.l.b16 %v4111
    %v4516 = vunpack.c.l.b16 %v4112
    %v4517 = vunpack.c.l.b16 %v4113
    %v4518 = vunpack.c.l.b16 %v4114
    %v4519 = vunpack.c.l.b16 %v4115
    %v4520 = vunpack.c.l.b16 %v4116
    %v4521 = vunpack.c.l.b16 %v4117
    %v4522 = vunpack.c.l.b16 %v4118
    %v4523 = vunpack.c.l.b16 %v4119
    %v4524 = vunpack.c.l.b16 %v4120
    %v4525 = vunpack.c.l.b16 %v4121
    %v4526 = vunpack.c.l.b16 %v4122
    %v4527 = vunpack.c.l.b16 %v4123
    %v4528 = vunpack.c.l.b16 %v4124
    %v4529 = vunpack.c.l.b16 %v4125
    %v4530 = vunpack.c.l.b16 %v4126
    %v4531 = vunpack.c.l.b16 %v4127
    %v4532 = vunpack.c.l.b16 %v4128
    %v4533 = vunpack.c.l.b16 %v4129
    %v4534 = vunpack.c.l.b16 %v4130
    %v4535 = vunpack.c.l.b16 %v4131
    %v4536 = vunpack.c.l.b16 %v4132
    %v4537 = vunpack.c.l.b16 %v4133
    %v4538 = vunpack.c.l.b16 %v4134
    %v4539 = vunpack.c.l.b16 %v4135
    %v4540 = vunpack.c.l.b16 %v4136
    %v4541 = vunpack.c.l.b16 %v4137
    %v4542 = vunpack.c.l.b16 %v4138
    %v4543 = vunpack.c.l.b16 %v4139
    %v4544 = vunpack.c.l.b16 %v4140
    %v4545 = vunpack.c.l.b16 %v4141
    %v4546 = vunpack.c.l.b16 %v4142
    %v4547 = vunpack.c.l.b16 %v4143
    %v4548 = vunpack.c.l.b16 %v4144
    %v4549 = vunpack.c.l.b16 %v4145
    %v4550 = vunpack.c.l.b16 %v4146
    %v4551 = vunpack.c.l.b16 %v4147
    %v4552 = vunpack.c.l.b16 %v4148
    %v4553 = vunpack.c.l.b16 %v4149
    %v4554 = vunpack.c.l.b16 %v4150
    %v4555 = vunpack.c.l.b16 %v4151
    %v4556 = vunpack.c.l.b16 %v4152
    %v4557 = vunpack.c.l.b16 %v4153
    %v4558 = vunpack.c.l.b16 %v4154
    %v4559 = vunpack.c.l.b16 %v4155
    %v4560 = vunpack.c.l.b16 %v4156
    %v4561 = vunpack.c.l.b16 %v4157
    %v4562 = vunpack.c.l.b16 %v4158
    %v4563 = vunpack.c.l.b16 %v4159
    %v4564 = vunpack.c.l.b16 %v4160
    %v4565 = vunpack.c.l.b16 %v4161
    %v4566 = vunpack.c.l.b16 %v4162
    %v4567 = vunpack.c.l.b16 %v4163
    %v4568 = vunpack.c.l.b16 %v4164
    %v4569 = vunpack.c.l.b16 %v4165
    %v4570 = vunpack.c.l.b16 %v4166
    %v4571 = vunpack.c.l.b16 %v4167
    %v4572 = vunpack.c.l.b16 %v4168
    %v4573 = vunpack.c.l.b16 %v4169
    %v4574 = vunpack.c.l.b16 %v4170
    %v4575 = vunpack.c.l.b16 %v4171
    %v4576 = vunpack.c.l.b16 %v4172
    %v4577 = vunpack.c.l.b16 %v4173
    %v4578 = vunpack.c.l.b16 %v4174
    %v4579 = vunpack.c.l.b16 %v4175
    %v4580 = vunpack.c.l.b16 %v4176
    %v4581 = vunpack.c.l.b16 %v4177
    %v4582 = vunpack.c.l.b16 %v4178
    %v4583 = vunpack.c.l.b16 %v4179
    %v4584 = vunpack.c.l.b16 %v4180
    %v4585 = vunpack.c.l.b16 %v4181
    %v4586 = vunpack.c.l.b16 %v4182
    %v4587 = vunpack.c.l.b16 %v4183
    %v4588 = vunpack.c.l.b16 %v4184
    %v4589 = vunpack.c.l.b16 %v4185
    %v4590 = vunpack.c.l.b16 %v4186
    %v4591 = vunpack.c.l.b16 %v4187
    %v4592 = vpack.c.b16 %v4393, %v4392
    %v4593 = vpack.c.b16 %v4395, %v4394
    %v4594 = vpack.c.b16 %v4397, %v4396
    %v4595 = vpack.c.b16 %v4399, %v4398
    %v4596 = vpack.c.b16 %v4401, %v4400
    %v4597 = vpack.c.b16 %v4403, %v4402
    %v4598 = vpack.c.b16 %v4405, %v4404
    %v4599 = vpack.c.b16 %v4407, %v4406
    %v4600 = vpack.c.b16 %v4409, %v4408
    %v4601 = vpack.c.b16 %v4411, %v4410
    %v4602 = vpack.c.b16 %v4413, %v4412
    %v4603 = vpack.c.b16 %v4415, %v4414
    %v4604 = vpack.c.b16 %v4417, %v4416
    %v4605 = vpack.c.b16 %v4419, %v4418
    %v4606 = vpack.c.b16 %v4421, %v4420
    %v4607 = vpack.c.b16 %v4423, %v4422
    %v4608 = vpack.c.b16 %v4425, %v4424
    %v4609 = vpack.c.b16 %v4427, %v4426
    %v4610 = vpack.c.b16 %v4429, %v4428
    %v4611 = vpack.c.b16 %v4431, %v4430
    %v4612 = vpack.c.b16 %v4433, %v4432
    %v4613 = vpack.c.b16 %v4435, %v4434
    %v4614 = vpack.c.b16 %v4437, %v4436
    %v4615 = vpack.c.b16 %v4439, %v4438
    %v4616 = vpack.c.b16 %v4441, %v4440
    %v4617 = vpack.c.b16 %v4443, %v4442
    %v4618 = vpack.c.b16 %v4445, %v4444
    %v4619 = vpack.c.b16 %v4447, %v4446
    %v4620 = vpack.c.b16 %v4449, %v4448
    %v4621 = vpack.c.b16 %v4451, %v4450
    %v4622 = vpack.c.b16 %v4453, %v4452
    %v4623 = vpack.c.b16 %v4455, %v4454
    %v4624 = vpack.c.b16 %v4457, %v4456
    %v4625 = vpack.c.b16 %v4459, %v4458
    %v4626 = vpack.c.b16 %v4461, %v4460
    %v4627 = vpack.c.b16 %v4463, %v4462
    %v4628 = vpack.c.b16 %v4465, %v4464
    %v4629 = vpack.c.b16 %v4467, %v4466
    %v4630 = vpack.c.b16 %v4469, %v4468
    %v4631 = vpack.c.b16 %v4471, %v4470
    %v4632 = vpack.c.b16 %v4473, %v4472
    %v4633 = vpack.c.b16 %v4475, %v4474
    %v4634 = vpack.c.b16 %v4477, %v4476
    %v4635 = vpack.c.b16 %v4479, %v4478
    %v4636 = vpack.c.b16 %v4481, %v4480
    %v4637 = vpack.c.b16 %v4483, %v4482
    %v4638 = vpack.c.b16 %v4485, %v4484
    %v4639 = vpack.c.b16 %v4487, %v4486
    %v4640 = vpack.c.b16 %v4489, %v4488
    %v4641 = vpack.c.b16 %v4491, %v4490
    %v4642 = vpack.c.b16 %v4493, %v4492
    %v4643 = vpack.c.b16 %v4495, %v4494
    %v4644 = vpack.c.b16 %v4497, %v4496
    %v4645 = vpack.c.b16 %v4499, %v4498
    %v4646 = vpack.c.b16 %v4501, %v4500
    %v4647 = vpack.c.b16 %v4503, %v4502
    %v4648 = vpack.c.b16 %v4505, %v4504
    %v4649 = vpack.c.b16 %v4507, %v4506
    %v4650 = vpack.c.b16 %v4509, %v4508
    %v4651 = vpack.c.b16 %v4511, %v4510
    %v4652 = vpack.c.b16 %v4513, %v4512
    %v4653 = vpack.c.b16 %v4515, %v4514
    %v4654 = vpack.c.b16 %v4517, %v4516
    %v4655 = vpack.c.b16 %v4519, %v4518
    %v4656 = vpack.c.b16 %v4521, %v4520
    %v4657 = vpack.c.b16 %v4523, %v4522
    %v4658 = vpack.c.b16 %v4525, %v4524
    %v4659 = vpack.c.b16 %v4527, %v4526
    %v4660 = vpack.c.b16 %v4529, %v4528
    %v4661 = vpack.c.b16 %v4531, %v4530
    %v4662 = vpack.c.b16 %v4533, %v4532
    %v4663 = vpack.c.b16 %v4535, %v4534
    %v4664 = vpack.c.b16 %v4537, %v4536
    %v4665 = vpack.c.b16 %v4539, %v4538
    %v4666 = vpack.c.b16 %v4541, %v4540
    %v4667 = vpack.c.b16 %v4543, %v4542
    %v4668 = vpack.c.b16 %v4545, %v4544
    %v4669 = vpack.c.b16 %v4547, %v4546
    %v4670 = vpack.c.b16 %v4549, %v4548
    %v4671 = vpack.c.b16 %v4551, %v4550
    %v4672 = vpack.c.b16 %v4553, %v4552
    %v4673 = vpack.c.b16 %v4555, %v4554
    %v4674 = vpack.c.b16 %v4557, %v4556
    %v4675 = vpack.c.b16 %v4559, %v4558
    %v4676 = vpack.c.b16 %v4561, %v4560
    %v4677 = vpack.c.b16 %v4563, %v4562
    %v4678 = vpack.c.b16 %v4565, %v4564
    %v4679 = vpack.c.b16 %v4567, %v4566
    %v4680 = vpack.c.b16 %v4569, %v4568
    %v4681 = vpack.c.b16 %v4571, %v4570
    %v4682 = vpack.c.b16 %v4573, %v4572
    %v4683 = vpack.c.b16 %v4575, %v4574
    %v4684 = vpack.c.b16 %v4577, %v4576
    %v4685 = vpack.c.b16 %v4579, %v4578
    %v4686 = vpack.c.b16 %v4581, %v4580
    %v4687 = vpack.c.b16 %v4583, %v4582
    %v4688 = vpack.c.b16 %v4585, %v4584
    %v4689 = vpack.c.b16 %v4587, %v4586
    %v4690 = vpack.c.b16 %v4589, %v4588
    %v4691 = vpack.c.b16 %v4591, %v4590
    %v4793 = vsel %vm1674, %v3987, 0
    %4795 = vmatpush.bf16.msra.mxu0 %v4599
    %4796 = vmatpush.bf16.msra.mxu0 %v4598
    %4797 = vmatpush.bf16.msra.mxu0 %v4597
    %4798 = vmatpush.bf16.msra.mxu0 %v4596
    %4799 = vmatpush.bf16.msra.mxu0 %v4595
    %4800 = vmatpush.bf16.msra.mxu0 %v4594
    %4801 = vmatpush.bf16.msra.mxu0 %v4593
    %4802 = vmatpush.bf16.msra.mxu0 %v4592
    %4803 = vmatmul.bf16.gmra.mxu0 %v3975
    %v4804 = vpop.f32.mrf.mxu0
    %v4805 = vadd.f32 %v4190, %v4804
    %v4806 = vpop.f32.mrf.mxu0
    %4807 = vdwg.mxu0
    %4808 = vmatpush.bf16.msra.mxu0 %v4607
    %4809 = vmatpush.bf16.msra.mxu0 %v4606
    %4810 = vmatpush.bf16.msra.mxu0 %v4605
    %4811 = vmatpush.bf16.msra.mxu0 %v4604
    %4812 = vmatpush.bf16.msra.mxu0 %v4603
    %4813 = vmatpush.bf16.msra.mxu0 %v4602
    %4814 = vmatpush.bf16.msra.mxu0 %v4601
    %4815 = vmatpush.bf16.msra.mxu0 %v4600
    %4816 = vmatmul.bf16.gmra.mxu0 %v3976
    %v4817 = vpop.f32.mrf.mxu0
    %v4818 = vadd.f32 %v4805, %v4817
    %v4819 = vpop.f32.mrf.mxu0
    %4820 = vdwg.mxu0
    %4821 = vmatpush.bf16.msra.mxu0 %v4615
    %4822 = vmatpush.bf16.msra.mxu0 %v4614
    %4823 = vmatpush.bf16.msra.mxu0 %v4613
    %4824 = vmatpush.bf16.msra.mxu0 %v4612
    %4825 = vmatpush.bf16.msra.mxu0 %v4611
    %4826 = vmatpush.bf16.msra.mxu0 %v4610
    %4827 = vmatpush.bf16.msra.mxu0 %v4609
    %4828 = vmatpush.bf16.msra.mxu0 %v4608
    %4829 = vmatmul.bf16.gmra.mxu0 %v3977
    %v4830 = vpop.f32.mrf.mxu0
    %v4831 = vadd.f32 %v4818, %v4830
    %v4832 = vpop.f32.mrf.mxu0
    %4833 = vdwg.mxu0
    %4834 = vmatpush.bf16.msra.mxu0 %v4623
    %4835 = vmatpush.bf16.msra.mxu0 %v4622
    %4836 = vmatpush.bf16.msra.mxu0 %v4621
    %4837 = vmatpush.bf16.msra.mxu0 %v4620
    %4838 = vmatpush.bf16.msra.mxu0 %v4619
    %4839 = vmatpush.bf16.msra.mxu0 %v4618
    %4840 = vmatpush.bf16.msra.mxu0 %v4617
    %4841 = vmatpush.bf16.msra.mxu0 %v4616
    %4842 = vmatmul.bf16.gmra.mxu0 %v3978
    %v4843 = vpop.f32.mrf.mxu0
    %v4844 = vadd.f32 %v4831, %v4843
    %v4845 = vpop.f32.mrf.mxu0
    %4846 = vdwg.mxu0
    %4847 = vmatpush.bf16.msra.mxu0 %v4631
    %4848 = vmatpush.bf16.msra.mxu0 %v4630
    %4849 = vmatpush.bf16.msra.mxu0 %v4629
    %4850 = vmatpush.bf16.msra.mxu0 %v4628
    %4851 = vmatpush.bf16.msra.mxu0 %v4627
    %4852 = vmatpush.bf16.msra.mxu0 %v4626
    %4853 = vmatpush.bf16.msra.mxu0 %v4625
    %4854 = vmatpush.bf16.msra.mxu0 %v4624
    %4855 = vmatmul.bf16.gmra.mxu0 %v3979
    %v4856 = vpop.f32.mrf.mxu0
    %v4857 = vadd.f32 %v4844, %v4856
    %v4858 = vpop.f32.mrf.mxu0
    %4859 = vdwg.mxu0
    %4860 = vmatpush.bf16.msra.mxu0 %v4639
    %4861 = vmatpush.bf16.msra.mxu0 %v4638
    %4862 = vmatpush.bf16.msra.mxu0 %v4637
    %4863 = vmatpush.bf16.msra.mxu0 %v4636
    %4864 = vmatpush.bf16.msra.mxu0 %v4635
    %4865 = vmatpush.bf16.msra.mxu0 %v4634
    %4866 = vmatpush.bf16.msra.mxu0 %v4633
    %4867 = vmatpush.bf16.msra.mxu0 %v4632
    %4868 = vmatmul.bf16.gmra.mxu0 %v3980
    %v4869 = vpop.f32.mrf.mxu0
    %v4870 = vadd.f32 %v4857, %v4869
    %v4871 = vpop.f32.mrf.mxu0
    %4872 = vdwg.mxu0
    %4873 = vmatpush.bf16.msra.mxu0 %v4647
    %4874 = vmatpush.bf16.msra.mxu0 %v4646
    %4875 = vmatpush.bf16.msra.mxu0 %v4645
    %4876 = vmatpush.bf16.msra.mxu0 %v4644
    %4877 = vmatpush.bf16.msra.mxu0 %v4643
    %4878 = vmatpush.bf16.msra.mxu0 %v4642
    %4879 = vmatpush.bf16.msra.mxu0 %v4641
    %4880 = vmatpush.bf16.msra.mxu0 %v4640
    %4881 = vmatmul.bf16.gmra.mxu0 %v3981
    %v4882 = vpop.f32.mrf.mxu0
    %v4883 = vadd.f32 %v4870, %v4882
    %v4884 = vpop.f32.mrf.mxu0
    %4885 = vdwg.mxu0
    %4886 = vmatpush.bf16.msra.mxu0 %v4655
    %4887 = vmatpush.bf16.msra.mxu0 %v4654
    %4888 = vmatpush.bf16.msra.mxu0 %v4653
    %4889 = vmatpush.bf16.msra.mxu0 %v4652
    %4890 = vmatpush.bf16.msra.mxu0 %v4651
    %4891 = vmatpush.bf16.msra.mxu0 %v4650
    %4892 = vmatpush.bf16.msra.mxu0 %v4649
    %4893 = vmatpush.bf16.msra.mxu0 %v4648
    %4894 = vmatmul.bf16.gmra.mxu0 %v3982
    %v4895 = vpop.f32.mrf.mxu0
    %v4896 = vadd.f32 %v4883, %v4895
    %v4897 = vpop.f32.mrf.mxu0
    %4898 = vdwg.mxu0
    %4899 = vmatpush.bf16.msra.mxu0 %v4663
    %4900 = vmatpush.bf16.msra.mxu0 %v4662
    %4901 = vmatpush.bf16.msra.mxu0 %v4661
    %4902 = vmatpush.bf16.msra.mxu0 %v4660
    %4903 = vmatpush.bf16.msra.mxu0 %v4659
    %4904 = vmatpush.bf16.msra.mxu0 %v4658
    %4905 = vmatpush.bf16.msra.mxu0 %v4657
    %4906 = vmatpush.bf16.msra.mxu0 %v4656
    %4907 = vmatmul.bf16.gmra.mxu0 %v3983
    %v4908 = vpop.f32.mrf.mxu0
    %v4909 = vadd.f32 %v4896, %v4908
    %v4910 = vpop.f32.mrf.mxu0
    %4911 = vdwg.mxu0
    %4912 = vmatpush.bf16.msra.mxu0 %v4671
    %4913 = vmatpush.bf16.msra.mxu0 %v4670
    %4914 = vmatpush.bf16.msra.mxu0 %v4669
    %4915 = vmatpush.bf16.msra.mxu0 %v4668
    %4916 = vmatpush.bf16.msra.mxu0 %v4667
    %4917 = vmatpush.bf16.msra.mxu0 %v4666
    %4918 = vmatpush.bf16.msra.mxu0 %v4665
    %4919 = vmatpush.bf16.msra.mxu0 %v4664
    %4920 = vmatmul.bf16.gmra.mxu0 %v3984
    %v4921 = vpop.f32.mrf.mxu0
    %v4922 = vadd.f32 %v4909, %v4921
    %v4923 = vpop.f32.mrf.mxu0
    %4924 = vdwg.mxu0
    %4925 = vmatpush.bf16.msra.mxu0 %v4679
    %4926 = vmatpush.bf16.msra.mxu0 %v4678
    %4927 = vmatpush.bf16.msra.mxu0 %v4677
    %4928 = vmatpush.bf16.msra.mxu0 %v4676
    %4929 = vmatpush.bf16.msra.mxu0 %v4675
    %4930 = vmatpush.bf16.msra.mxu0 %v4674
    %4931 = vmatpush.bf16.msra.mxu0 %v4673
    %4932 = vmatpush.bf16.msra.mxu0 %v4672
    %4933 = vmatmul.bf16.gmra.mxu0 %v3985
    %v4934 = vpop.f32.mrf.mxu0
    %v4935 = vadd.f32 %v4922, %v4934
    %v4936 = vpop.f32.mrf.mxu0
    %4937 = vdwg.mxu0
    %4938 = vmatpush.bf16.msra.mxu0 %v4687
    %4939 = vmatpush.bf16.msra.mxu0 %v4686
    %4940 = vmatpush.bf16.msra.mxu0 %v4685
    %4941 = vmatpush.bf16.msra.mxu0 %v4684
    %4942 = vmatpush.bf16.msra.mxu0 %v4683
    %4943 = vmatpush.bf16.msra.mxu0 %v4682
    %4944 = vmatpush.bf16.msra.mxu0 %v4681
    %4945 = vmatpush.bf16.msra.mxu0 %v4680
    %4946 = vmatmul.bf16.gmra.mxu0 %v3986
    %v4947 = vpop.f32.mrf.mxu0
    %v4948 = vadd.f32 %v4935, %v4947
    %v4949 = vpop.f32.mrf.mxu0
    %4950 = vdwg.mxu0
    %4951 = vmatpush.bf16.msra.mxu0 0
    %4952 = vmatpush.bf16.msra.mxu0 0
    %4953 = vmatpush.bf16.msra.mxu0 0
    %4954 = vmatpush.bf16.msra.mxu0 0
    %4955 = vmatpush.bf16.msra.mxu0 %v4691
    %4956 = vmatpush.bf16.msra.mxu0 %v4690
    %4957 = vmatpush.bf16.msra.mxu0 %v4689
    %4958 = vmatpush.bf16.msra.mxu0 %v4688
    %4959 = vmatmul.bf16.gmra.mxu0 %v4793
    %v4960 = vpop.f32.mrf.mxu0
    %v4961 = vadd.f32 %v4948, %v4960
    %v4962 = vpop.f32.mrf.mxu0
    %4963 = vdwg.mxu0
    %v4964 = vmax.f32 %v4961, 0.0
    %v4965 = vpack.c.bf16 %v4964, %v4964
    %v4966 = vld [vmem:[%s7] sm:$0xf]
    %v4967 = vld [vmem:[%s7 + $0x4] sm:$0xf]
    %v4968 = vld [vmem:[%s7 + $0x8] sm:$0xf]
    %v4969 = vld [vmem:[%s7 + $0xc] sm:$0xf]
    %v4970 = vld [vmem:[%s7 + $0x10] sm:$0xf]
    %v4971 = vld [vmem:[%s7 + $0x14] sm:$0xf]
    %v4972 = vld [vmem:[%s7 + $0x18] sm:$0xf]
    %v4973 = vld [vmem:[%s7 + $0x1c] sm:$0xf]
    %v4974 = vld [vmem:[%s7 + $0x20] sm:$0xf]
    %v4975 = vld [vmem:[%s7 + $0x24] sm:$0xf]
    %v4976 = vld [vmem:[%s7 + $0x28] sm:$0xf]
    %v4977 = vld [vmem:[%s7 + $0x2c] sm:$0xf]
    %v4978 = vld [vmem:[%s7 + $0x30] sm:$0xf]
    %v4979 = vld [vmem:[%s7 + $0x34] sm:$0xf]
    %v4980 = vld [vmem:[%s7 + $0x38] sm:$0xf]
    %v4981 = vld [vmem:[%s7 + $0x3c] sm:$0xf]
    %v4982 = vld [vmem:[%s8] sm:$0x1]
    %v4984 = vperm.slane %v4982, 0
    %v5002 = vunpack.c.l.b16 %v4966
    %v5003 = vunpack.c.l.b16 %v4967
    %v5004 = vunpack.c.l.b16 %v4968
    %v5005 = vunpack.c.l.b16 %v4969
    %v5006 = vunpack.c.l.b16 %v4970
    %v5007 = vunpack.c.l.b16 %v4971
    %v5008 = vunpack.c.l.b16 %v4972
    %v5009 = vunpack.c.l.b16 %v4973
    %v5010 = vunpack.c.l.b16 %v4974
    %v5011 = vunpack.c.l.b16 %v4975
    %v5012 = vunpack.c.l.b16 %v4976
    %v5013 = vunpack.c.l.b16 %v4977
    %v5014 = vunpack.c.l.b16 %v4978
    %v5015 = vunpack.c.l.b16 %v4979
    %v5016 = vunpack.c.l.b16 %v4980
    %v5017 = vunpack.c.l.b16 %v4981
    %v5018 = vpack.c.b16 %v5003, %v5002
    %v5019 = vpack.c.b16 %v5005, %v5004
    %v5020 = vpack.c.b16 %v5007, %v5006
    %v5021 = vpack.c.b16 %v5009, %v5008
    %v5022 = vpack.c.b16 %v5011, %v5010
    %v5023 = vpack.c.b16 %v5013, %v5012
    %v5024 = vpack.c.b16 %v5015, %v5014
    %v5025 = vpack.c.b16 %v5017, %v5016
    %5034 = vmatpush.bf16.msra.mxu0 %v5025
    %5035 = vmatpush.bf16.msra.mxu0 %v5024
    %5036 = vmatpush.bf16.msra.mxu0 %v5023
    %5037 = vmatpush.bf16.msra.mxu0 %v5022
    %5038 = vmatpush.bf16.msra.mxu0 %v5021
    %5039 = vmatpush.bf16.msra.mxu0 %v5020
    %5040 = vmatpush.bf16.msra.mxu0 %v5019
    %5041 = vmatpush.bf16.msra.mxu0 %v5018
    %5042 = vmatmul.bf16.gmra.mxu0 %v4965
    %v5043 = vpop.f32.mrf.mxu0
    %v5044 = vadd.f32 %v4984, %v5043
    %v5045 = vpop.f32.mrf.mxu0
    %5046 = vdwg.mxu0
    %v5047 = vsel %vm295, %v5044, -inf
    %5048 = vmax.xlane.f32.xlu0 %v5047
    %v5049 = vpop.xlane.xlu0 %5048
    %v5050 = vsub.f32 %v5044, %v5049
    %v5051 = vmul.f32 %v5050, 1.442695
    %v5052 = vpow.pop %v5051
    %v5053 = vsel %vm295, %v5052, 0.0
    %5054 = vadd.xlane.f32.xlu0 %v5053
    %v5055 = vpop.xlane.xlu0 %5054
    %v5056 = vlog2.pop %v5055
    %v5057 = vmul.f32 %v5056, 0.6931472
    %v5058 = vadd.f32 %v5057, %v5049
    %v5059 = vsub.f32 %v5044, %v5058
    %5060 = vst [vmem:[#allocation2] sm:$0x3] %v5059
    // Predicated region
    $region38: #{_forward_jit.1} parent=1 // pred_check
      _
    $region39: #{_forward_jit.1} parent=1 // pred_check_branch
      %5062 = sbr.rel (0) target = $region41
    $region40: #{_forward_jit.1} parent=1 // pred_region
      %5064 = vsyncadd [#allocation3], 0
      %s5066 = sshll.u32 [#allocation2], 4
      %s5067 = int_to_ptr.vmem [resolvable:$true] %s5066
      %s5068 = sshll.u32 %s9, 4
      %s5069 = int_to_ptr.hbm [resolvable:$true] %s5068
      %5071 = dma.vmem_to_hbm [thread:$0]  %s5067, 32, %s5069, [#allocation3]
    $region41: #{_forward_jit.1} parent=1 // pred_fallthru
      _
    // Predicated region
    $region42: #{_forward_jit.1} parent=1 // pred_check
      _
    $region43: #{_forward_jit.1} parent=1 // pred_check_branch
      %5073 = sbr.rel (0) target = $region45
    $region44: #{_forward_jit.1} parent=1 // pred_region
      %5075 = dma.done [#allocation3], 32
    $region45: #{_forward_jit.1} parent=1 // pred_fallthru
      _
    %5076 = vsyncpa [#allocation3], 1

</llo_original>
